<compile_context>
chip_gen: v7x
topology: tpu7x:2x2x1
jax: 0.10.0
libtpu: 0.0.40
codegen_flags: <defaults>
</compile_context>

<pallas_src>
import numpy as np
import jax
import jax.numpy as jnp
from jax import lax
from jax.experimental import pallas as pl
from jax.experimental.pallas import tpu as pltpu

HIDDEN = 64
OUTPUT = 10
OUT_PAD = 128          # lane-dense padded output width
KH = KW = 7
STRIDE = 3
OH = OW = 8            # (28 - 7) / 3 + 1
NPOS = OH * OW         # 64 output positions
CIN, COUT = 1, 4
IMG = 28               # 4 * 8 * 8 = 256 => input spatial must be 28x28
KPAD = 64              # im2col K padded 49 -> 64 (flattened row = 64*64 = 4096)
FLAT = NPOS * KPAD     # 4096
FEAT = NPOS * COUT     # 256


# ----------------------------- Pallas kernel ------------------------------

def fused_kernel(x_ref, wc_ref, bc_ref, w1_ref, b1_ref, w2_ref, b2_ref, o_ref):
    # x_ref : (TB, 4096)   padded im2col patches, one row per image
    # wc_ref: (4096, 256)  block-diagonal conv weight (output cols in c*64+p
    #                      == PyTorch view(-1,256) order)
    # bc_ref: (1, 256)     conv bias repeated per channel
    # w1_ref: (256, 64)    fc1 weight (transposed), b1_ref: (1, 64)
    # w2_ref: (64, 128)    fc2 weight (transposed, zero-padded 10 -> 128)
    # b2_ref: (1, 128)
    # o_ref : (TB, 128)
    a = jnp.dot(x_ref[...], wc_ref[...], preferred_element_type=jnp.float32)
    a = a + bc_ref[...]
    a = a * a                                   # act = conv1 * conv1
    h = jnp.dot(a, w1_ref[...], preferred_element_type=jnp.float32)
    h = h + b1_ref[...]
    h = h * h                                   # fc1 = fc1 * fc1
    o_ref[...] = jnp.dot(h, w2_ref[...], preferred_element_type=jnp.float32) \
        + b2_ref[...]


def convnet_fused_call(patches, wc, bc, w1, b1, w2, b2, *, tb):
    bp = patches.shape[0]
    grid = (bp // tb,)
    const = lambda i: (0, 0)
    return pl.pallas_call(
        fused_kernel,
        out_shape=jax.ShapeDtypeStruct((bp, OUT_PAD), jnp.float32),
        grid=grid,
        in_specs=[
            pl.BlockSpec((tb, FLAT), lambda i: (i, 0)),      # patches, tiled
            pl.BlockSpec((FLAT, FEAT), const),               # conv weight
            pl.BlockSpec((1, FEAT), const),                  # conv bias
            pl.BlockSpec((FEAT, HIDDEN), const),             # fc1 weight
            pl.BlockSpec((1, HIDDEN), const),                # fc1 bias
            pl.BlockSpec((HIDDEN, OUT_PAD), const),          # fc2 weight (padded)
            pl.BlockSpec((1, OUT_PAD), const),               # fc2 bias (padded)
        ],
        out_specs=pl.BlockSpec((tb, OUT_PAD), lambda i: (i, 0)),
        compiler_params=pltpu.CompilerParams(
            dimension_semantics=("parallel",),
            vmem_limit_bytes=32 * 1024 * 1024),
    )(patches, wc, bc, w1, b1, w2, b2)


# ------------------------------- JAX glue ---------------------------------

def prepare_params(params):
    """One-time weight preprocessing (hoisted out of the forward pass)."""
    conv_w, conv_b, fc1_w, fc1_b, fc2_w, fc2_b = params

    # conv weight as (49, 4): row kh*7+kw, col c
    w_mat = conv_w.reshape(COUT, KH * KW).T
    w_pad = jnp.pad(w_mat, ((0, KPAD - KH * KW), (0, 0)))          # (64, 4)

    # Block-diagonal conv weight wc[(p*KPAD + k), (c*64 + p')] = w[k, c] if p==p'
    # Output column order c*64+p == PyTorch's channel-major view(-1, 256).
    eye = jnp.eye(NPOS, dtype=jnp.float32)                         # (64, 64)
    wc = eye[:, None, None, :] * w_pad[None, :, :, None]           # (p, k, c, p')
    wc = wc.reshape(FLAT, FEAT)                                    # (4096, 256)

    bc = jnp.repeat(conv_b, NPOS)[None, :]                         # (1, 256)

    w1 = fc1_w.T                                                   # (256, 64)
    b1 = fc1_b[None, :]                                            # (1, 64)

    w2 = jnp.zeros((HIDDEN, OUT_PAD), jnp.float32).at[:, :OUTPUT].set(fc2_w.T)
    b2 = jnp.zeros((1, OUT_PAD), jnp.float32).at[:, :OUTPUT].set(fc2_b[None, :])

    return wc, bc, w1, b1, w2, b2


def make_patches(x):
    """x: (B, 1, 28, 28) NCHW -> padded im2col patches (B, 4096);
    per image row layout: [p = oh*8+ow major] x [k = kh*7+kw, padded to 64]."""
    B = x.shape[0]
    x2 = x[:, 0]                                                   # (B, 28, 28)
    rows = jnp.arange(OH)[:, None] * STRIDE + jnp.arange(KH)[None, :]   # (8, 7)
    p = x2[:, rows, :]                                             # (B, oh, kh, 28)
    p = p[:, :, :, rows]                                           # (B, oh, kh, ow, kw)
    p = p.transpose(0, 1, 3, 2, 4)                                 # (B, oh, ow, kh, kw)
    p = p.reshape(B, NPOS, KH * KW)                                # (B, 64, 49)
    p = jnp.pad(p, ((0, 0), (0, 0), (0, KPAD - KH * KW)))          # (B, 64, 64)
    return p.reshape(B, FLAT)                                      # (B, 4096)


def _batch_tiling(B):
    """Pick (tile, padded batch). tile <= 128 keeps per-step VMEM footprint
    (~12 MiB with double-buffering) comfortably inside v7x's 64 MiB VMEM."""
    if B <= 128:
        return B, B
    tb = 128
    return tb, pl.cdiv(B, tb) * tb


def convnet_forward(x, prepped):
    """Fused Pallas forward pass, identical semantics to the PyTorch ConvNet."""
    wc, bc, w1, b1, w2, b2 = prepped
    B = x.shape[0]

    patches = make_patches(x)                                      # (B, 4096)
    tb, bp = _batch_tiling(B)
    if bp != B:
        patches = jnp.pad(patches, ((0, bp - B), (0, 0)))

    out_pad = convnet_fused_call(patches, wc, bc, w1, b1, w2, b2, tb=tb)
    return out_pad[:B, :OUTPUT]                                    # (B, 10)


def reference_forward(x, params):
    """Plain-JAX reference (mirrors the PyTorch module) for correctness check."""
    conv_w, conv_b, fc1_w, fc1_b, fc2_w, fc2_b = params
    B = x.shape[0]
    conv = lax.conv_general_dilated(
        x, conv_w, window_strides=(STRIDE, STRIDE), padding="VALID",
        dimension_numbers=("NCHW", "OIHW", "NCHW")) + conv_b.reshape(1, COUT, 1, 1)
    act = (conv * conv).reshape(B, FEAT)
    fc1 = act @ fc1_w.T + fc1_b
    fc1 = fc1 * fc1
    return fc1 @ fc2_w.T + fc2_b


def init_params(key):
    ks = jax.random.split(key, 6)
    conv_w = jax.random.normal(ks[0], (COUT, CIN, KH, KW), jnp.float32) * (1.0 / np.sqrt(KH * KW))
    conv_b = jax.random.normal(ks[1], (COUT,), jnp.float32) * 0.1
    fc1_w = jax.random.normal(ks[2], (HIDDEN, FEAT), jnp.float32) * (1.0 / np.sqrt(256.0))
    fc1_b = jax.random.normal(ks[3], (HIDDEN,), jnp.float32) * 0.1
    fc2_w = jax.random.normal(ks[4], (OUTPUT, HIDDEN), jnp.float32) * (1.0 / np.sqrt(HIDDEN))
    fc2_b = jax.random.normal(ks[5], (OUTPUT,), jnp.float32) * 0.1
    return conv_w, conv_b, fc1_w, fc1_b, fc2_w, fc2_b


if __name__ == "__main__":
    key = jax.random.PRNGKey(0)
    pkey, xkey = jax.random.split(key)
    params = init_params(pkey)
    prepped = prepare_params(params)         # one-time weight prep (not per call)

    B = 2
    x = jax.random.normal(xkey, (B, CIN, IMG, IMG), jnp.float32)   # NCHW, 28x28

    out = jax.jit(convnet_forward)(x, prepped)
    out = jax.block_until_ready(out)

    ref = reference_forward(x, params)
    assert out.shape == (B, OUTPUT)
    np.testing.assert_allclose(np.asarray(out), np.asarray(ref), rtol=1e-4, atol=1e-4)

    print("KERNEL_OK")
</pallas_src>

<mosaic_0001>
module attributes {stable_mosaic.version = 11 : i64} {
  func.func @fused_kernel(%arg0: i32, %arg1: memref<2x4096xf32, #tpu.memory_space<vmem>>, %arg2: memref<4096x256xf32, #tpu.memory_space<vmem>>, %arg3: memref<1x256xf32, #tpu.memory_space<vmem>>, %arg4: memref<256x64xf32, #tpu.memory_space<vmem>>, %arg5: memref<1x64xf32, #tpu.memory_space<vmem>>, %arg6: memref<64x128xf32, #tpu.memory_space<vmem>>, %arg7: memref<1x128xf32, #tpu.memory_space<vmem>>, %arg8: memref<2x128xf32, #tpu.memory_space<vmem>>) attributes {dimension_semantics = [#tpu.dimension_semantics<parallel>], iteration_bounds = array<i64: 1>, scalar_prefetch = 0 : i64, scratch_operands = 0 : i64, tpu.core_type = #tpu.core_type<tc>, window_params = [{transform_indices = @transform_0, window_bounds = array<i64: 2, 4096>}, {pipeline_mode = #tpu.pipeline_mode<synchronous>, transform_indices = @transform_1, window_bounds = array<i64: 4096, 256>}, {pipeline_mode = #tpu.pipeline_mode<synchronous>, transform_indices = @transform_2, window_bounds = array<i64: 1, 256>}, {pipeline_mode = #tpu.pipeline_mode<synchronous>, transform_indices = @transform_3, window_bounds = array<i64: 256, 64>}, {pipeline_mode = #tpu.pipeline_mode<synchronous>, transform_indices = @transform_4, window_bounds = array<i64: 1, 64>}, {pipeline_mode = #tpu.pipeline_mode<synchronous>, transform_indices = @transform_5, window_bounds = array<i64: 64, 128>}, {pipeline_mode = #tpu.pipeline_mode<synchronous>, transform_indices = @transform_6, window_bounds = array<i64: 1, 128>}, {transform_indices = @transform_7, window_bounds = array<i64: 2, 128>}]} {
    %c0 = arith.constant 0 : index
    %c0_0 = arith.constant 0 : index
    %0 = vector.load %arg1[%c0, %c0_0] : memref<2x4096xf32, #tpu.memory_space<vmem>>, vector<2x4096xf32>
    %c0_1 = arith.constant 0 : index
    %c0_2 = arith.constant 0 : index
    %1 = vector.load %arg2[%c0_1, %c0_2] : memref<4096x256xf32, #tpu.memory_space<vmem>>, vector<4096x256xf32>
    %cst = arith.constant dense<0.000000e+00> : vector<2x256xf32>
    %2 = tpu.matmul %0, %1, %cst {dimension_numbers = #tpu.dot_dimension_numbers<[1], [0], [0], [1], [0, 0, 1, 1], [], []>} : vector<2x4096xf32>, vector<4096x256xf32>, vector<2x256xf32> -> vector<2x256xf32>
    %c0_3 = arith.constant 0 : index
    %c0_4 = arith.constant 0 : index
    %3 = vector.load %arg3[%c0_3, %c0_4] : memref<1x256xf32, #tpu.memory_space<vmem>>, vector<1x256xf32>
    %4 = vector.broadcast %3 : vector<1x256xf32> to vector<2x256xf32>
    %5 = arith.addf %2, %4 : vector<2x256xf32>
    %6 = arith.mulf %5, %5 : vector<2x256xf32>
    %c0_5 = arith.constant 0 : index
    %c0_6 = arith.constant 0 : index
    %7 = vector.load %arg4[%c0_5, %c0_6] : memref<256x64xf32, #tpu.memory_space<vmem>>, vector<256x64xf32>
    %cst_7 = arith.constant dense<0.000000e+00> : vector<2x64xf32>
    %8 = tpu.matmul %6, %7, %cst_7 {dimension_numbers = #tpu.dot_dimension_numbers<[1], [0], [0], [1], [0, 0, 1, 1], [], []>} : vector<2x256xf32>, vector<256x64xf32>, vector<2x64xf32> -> vector<2x64xf32>
    %c0_8 = arith.constant 0 : index
    %c0_9 = arith.constant 0 : index
    %9 = vector.load %arg5[%c0_8, %c0_9] : memref<1x64xf32, #tpu.memory_space<vmem>>, vector<1x64xf32>
    %10 = vector.broadcast %9 : vector<1x64xf32> to vector<2x64xf32>
    %11 = arith.addf %8, %10 : vector<2x64xf32>
    %12 = arith.mulf %11, %11 : vector<2x64xf32>
    %c0_10 = arith.constant 0 : index
    %c0_11 = arith.constant 0 : index
    %13 = vector.load %arg6[%c0_10, %c0_11] : memref<64x128xf32, #tpu.memory_space<vmem>>, vector<64x128xf32>
    %cst_12 = arith.constant dense<0.000000e+00> : vector<2x128xf32>
    %14 = tpu.matmul %12, %13, %cst_12 {dimension_numbers = #tpu.dot_dimension_numbers<[1], [0], [0], [1], [0, 0, 1, 1], [], []>} : vector<2x64xf32>, vector<64x128xf32>, vector<2x128xf32> -> vector<2x128xf32>
    %c0_13 = arith.constant 0 : index
    %c0_14 = arith.constant 0 : index
    %15 = vector.load %arg7[%c0_13, %c0_14] : memref<1x128xf32, #tpu.memory_space<vmem>>, vector<1x128xf32>
    %16 = vector.broadcast %15 : vector<1x128xf32> to vector<2x128xf32>
    %17 = arith.addf %14, %16 : vector<2x128xf32>
    %c0_15 = arith.constant 0 : index
    %c0_16 = arith.constant 0 : index
    %18 = vector.load %arg8[%c0_15, %c0_16] : memref<2x128xf32, #tpu.memory_space<vmem>>, vector<2x128xf32>
    tpu.vector_store %arg8[%c0_15, %c0_16], %17 {strides = array<i32>} : memref<2x128xf32, #tpu.memory_space<vmem>>, vector<2x128xf32>,
    return
  }
  func.func @transform_0(%arg0: i32) -> (i32, i32) {
    %c0_i32 = arith.constant 0 : i32
    %c0_i32_0 = arith.constant 0 : i32
    return %arg0, %c0_i32 : i32, i32
  }
  func.func @transform_1(%arg0: i32) -> (i32, i32) {
    %c0_i32 = arith.constant 0 : i32
    %c0_i32_0 = arith.constant 0 : i32
    %c0_i32_1 = arith.constant 0 : i32
    return %c0_i32, %c0_i32_0 : i32, i32
  }
  func.func @transform_2(%arg0: i32) -> (i32, i32) {
    %c0_i32 = arith.constant 0 : i32
    %c0_i32_0 = arith.constant 0 : i32
    %c0_i32_1 = arith.constant 0 : i32
    return %c0_i32, %c0_i32_0 : i32, i32
  }
  func.func @transform_3(%arg0: i32) -> (i32, i32) {
    %c0_i32 = arith.constant 0 : i32
    %c0_i32_0 = arith.constant 0 : i32
    %c0_i32_1 = arith.constant 0 : i32
    return %c0_i32, %c0_i32_0 : i32, i32
  }
  func.func @transform_4(%arg0: i32) -> (i32, i32) {
    %c0_i32 = arith.constant 0 : i32
    %c0_i32_0 = arith.constant 0 : i32
    %c0_i32_1 = arith.constant 0 : i32
    return %c0_i32, %c0_i32_0 : i32, i32
  }
  func.func @transform_5(%arg0: i32) -> (i32, i32) {
    %c0_i32 = arith.constant 0 : i32
    %c0_i32_0 = arith.constant 0 : i32
    %c0_i32_1 = arith.constant 0 : i32
    return %c0_i32, %c0_i32_0 : i32, i32
  }
  func.func @transform_6(%arg0: i32) -> (i32, i32) {
    %c0_i32 = arith.constant 0 : i32
    %c0_i32_0 = arith.constant 0 : i32
    %c0_i32_1 = arith.constant 0 : i32
    return %c0_i32, %c0_i32_0 : i32, i32
  }
  func.func @transform_7(%arg0: i32) -> (i32, i32) {
    %c0_i32 = arith.constant 0 : i32
    %c0_i32_0 = arith.constant 0 : i32
    return %arg0, %c0_i32 : i32, i32
  }
}

</mosaic_0001>

<llo_original>
// kernel: convnet_forward.1
$region0: #{convnet_forward.1}
  #allocation0 [shape = 'u32[]', space=smem, size = 0x4, offset = 0x4, fixed_abs, tag = 'smem constant byte address 0x4 - core index']
  #allocation1 [shape = 'u32[144,128]{1,0:T(1,128)}', space=vmem, size = 0x12000, scoped, tag = 'internal scratch']
  %s0 = inlined_call_operand.vmem [shape: f32[2,4096], index: 0, kind: input, shape index: {}]
  %s1 = inlined_call_operand.hbm [shape: f32[4096,256], index: 1, kind: input, shape index: {}]
  %s2 = inlined_call_operand.hbm [shape: f32[1,256], index: 2, kind: input, shape index: {}]
  %s3 = inlined_call_operand.vmem [shape: f32[256,64], index: 3, kind: input, shape index: {}]
  %s4 = inlined_call_operand.hbm [shape: f32[1,64], index: 4, kind: input, shape index: {}]
  %s5 = inlined_call_operand.hbm [shape: f32[64,128], index: 5, kind: input, shape index: {}]
  %s6 = inlined_call_operand.hbm [shape: f32[1,128], index: 6, kind: input, shape index: {}]
  %s7 = inlined_call_operand.hbm [shape: f32[2,128], index: 7, kind: output, shape index: {}]
  %s8 = sld [smem:[#allocation0]]
  $region58: #{convnet_forward.1} parent=0
    _
  %s10 = ssub.s32 1, %s8
  %s11 = scalar_select 0, %s10, %s8
  $region1: #{convnet_forward.1} parent=0
    #allocation2 [shape = 'u8[4194304]{0}', space=vmem, size = 0x400000, scoped, tag = 'input window, operand 1, single buffered']
    #allocation3 [shape = 's32[1]{0}', space=sflag, size = 0x4, scoped, tag = 'scoped memory for convnet_forward.1']
    #allocation4 [shape = 's32[1]{0}', space=sflag, size = 0x4, scoped, tag = 'scoped memory for convnet_forward.1']
    #allocation5 [shape = 'u8[1024]{0}', space=vmem, size = 0x400, scoped, tag = 'input window, operand 2, single buffered']
    #allocation6 [shape = 's32[1]{0}', space=sflag, size = 0x4, scoped, tag = 'scoped memory for convnet_forward.1']
    #allocation7 [shape = 'u8[512]{0}', space=vmem, size = 0x400, scoped, tag = 'input window, operand 4, single buffered']
    #allocation8 [shape = 'u8[32768]{0}', space=vmem, size = 0x8000, scoped, tag = 'input window, operand 5, single buffered']
    #allocation9 [shape = 's32[1]{0}', space=sflag, size = 0x4, scoped, tag = 'scoped memory for convnet_forward.1']
    #allocation10 [shape = 'u8[512]{0}', space=vmem, size = 0x400, scoped, tag = 'input window, operand 6, single buffered']
    #allocation11 [shape = 'u8[1024]{0}', space=vmem, size = 0x400, scoped, tag = 'output window, operand 0, single buffered']
    %12 = vsyncpa [#allocation3], 0
    %13 = vsyncpa [#allocation6], 0
    %14 = vsyncpa [#allocation9], 0
    %15 = vsyncpa [#allocation4], 0
    // Predicated region
    $region2: #{convnet_forward.1} parent=1 // pred_check
      _
    $region3: #{convnet_forward.1} parent=1 // pred_check_branch
      %17 = sbr.rel (0) target = $region5
    $region4: #{convnet_forward.1} parent=1 // pred_region
      _
    $region5: #{convnet_forward.1} parent=1 // pred_fallthru
      _
    // Predicated region
    $region6: #{convnet_forward.1} parent=1 // pred_check
      _
    $region7: #{convnet_forward.1} parent=1 // pred_check_branch
      %19 = sbr.rel (0) target = $region9
    $region8: #{convnet_forward.1} parent=1 // pred_region
      %s21 = ssub.s32 131072, 131072
      %22 = vsyncadd [#allocation3], %s21
      %s23 = sshll.u32 [#allocation2], 4
      %s24 = int_to_ptr.vmem [resolvable:$true] %s23
      %29 = dma.hbm_to_vmem [thread:$0]  %s1, 131072, %s24, [#allocation3], 256, 256, 16
    $region9: #{convnet_forward.1} parent=1 // pred_fallthru
      _
    // Predicated region
    $region10: #{convnet_forward.1} parent=1 // pred_check
      _
    $region11: #{convnet_forward.1} parent=1 // pred_check_branch
      %31 = sbr.rel (0) target = $region13
    $region12: #{convnet_forward.1} parent=1 // pred_region
      %s33 = ssub.s32 32, 32
      %34 = vsyncadd [#allocation6], %s33
      %s36 = sshll.u32 [#allocation5], 4
      %s37 = int_to_ptr.vmem [resolvable:$true] %s36
      %39 = dma.hbm_to_vmem [thread:$0]  %s2, 32, %s37, [#allocation6]
    $region13: #{convnet_forward.1} parent=1 // pred_fallthru
      _
    // Predicated region
    $region14: #{convnet_forward.1} parent=1 // pred_check
      _
    $region15: #{convnet_forward.1} parent=1 // pred_check_branch
      %41 = sbr.rel (0) target = $region17
    $region16: #{convnet_forward.1} parent=1 // pred_region
      _
    $region17: #{convnet_forward.1} parent=1 // pred_fallthru
      _
    // Predicated region
    $region18: #{convnet_forward.1} parent=1 // pred_check
      _
    $region19: #{convnet_forward.1} parent=1 // pred_check_branch
      %43 = sbr.rel (0) target = $region21
    $region20: #{convnet_forward.1} parent=1 // pred_region
      %s45 = ssub.s32 16, 16
      %46 = vsyncadd [#allocation6], %s45
      %s48 = sshll.u32 [#allocation7], 4
      %s49 = int_to_ptr.vmem [resolvable:$true] %s48
      %51 = dma.hbm_to_vmem [thread:$0]  %s4, 16, %s49, [#allocation6]
    $region21: #{convnet_forward.1} parent=1 // pred_fallthru
      _
    // Predicated region
    $region22: #{convnet_forward.1} parent=1 // pred_check
      _
    $region23: #{convnet_forward.1} parent=1 // pred_check_branch
      %53 = sbr.rel (0) target = $region25
    $region24: #{convnet_forward.1} parent=1 // pred_region
      %s55 = ssub.s32 1024, 1024
      %56 = vsyncadd [#allocation9], %s55
      %s57 = sshll.u32 [#allocation8], 4
      %s58 = int_to_ptr.vmem [resolvable:$true] %s57
      %63 = dma.hbm_to_vmem [thread:$0]  %s5, 1024, %s58, [#allocation9], 128, 128, 8
    $region25: #{convnet_forward.1} parent=1 // pred_fallthru
      _
    // Predicated region
    $region26: #{convnet_forward.1} parent=1 // pred_check
      _
    $region27: #{convnet_forward.1} parent=1 // pred_check_branch
      %65 = sbr.rel (0) target = $region29
    $region28: #{convnet_forward.1} parent=1 // pred_region
      %s67 = ssub.s32 16, 16
      %68 = vsyncadd [#allocation9], %s67
      %s70 = sshll.u32 [#allocation10], 4
      %s71 = int_to_ptr.vmem [resolvable:$true] %s70
      %73 = dma.hbm_to_vmem [thread:$0]  %s6, 16, %s71, [#allocation9]
    $region29: #{convnet_forward.1} parent=1 // pred_fallthru
      _
    // Predicated region
    $region30: #{convnet_forward.1} parent=1 // pred_check
      _
    $region31: #{convnet_forward.1} parent=1 // pred_check_branch
      %75 = sbr.rel (0) target = $region33
    $region32: #{convnet_forward.1} parent=1 // pred_region
      %76 = dma.done [#allocation3], 131072
    $region33: #{convnet_forward.1} parent=1 // pred_fallthru
      _
    // Predicated region
    $region34: #{convnet_forward.1} parent=1 // pred_check
      _
    $region35: #{convnet_forward.1} parent=1 // pred_check_branch
      %78 = sbr.rel (0) target = $region37
    $region36: #{convnet_forward.1} parent=1 // pred_region
      %79 = dma.done [#allocation6], 32
    $region37: #{convnet_forward.1} parent=1 // pred_fallthru
      _
    // Predicated region
    $region38: #{convnet_forward.1} parent=1 // pred_check
      _
    $region39: #{convnet_forward.1} parent=1 // pred_check_branch
      %81 = sbr.rel (0) target = $region41
    $region40: #{convnet_forward.1} parent=1 // pred_region
      %82 = dma.done [#allocation6], 16
    $region41: #{convnet_forward.1} parent=1 // pred_fallthru
      _
    // Predicated region
    $region42: #{convnet_forward.1} parent=1 // pred_check
      _
    $region43: #{convnet_forward.1} parent=1 // pred_check_branch
      %84 = sbr.rel (0) target = $region45
    $region44: #{convnet_forward.1} parent=1 // pred_region
      %85 = dma.done [#allocation9], 1024
    $region45: #{convnet_forward.1} parent=1 // pred_fallthru
      _
    // Predicated region
    $region46: #{convnet_forward.1} parent=1 // pred_check
      _
    $region47: #{convnet_forward.1} parent=1 // pred_check_branch
      %87 = sbr.rel (0) target = $region49
    $region48: #{convnet_forward.1} parent=1 // pred_region
      %88 = dma.done [#allocation9], 16
    $region49: #{convnet_forward.1} parent=1 // pred_fallthru
      _
    %v89 = vld [vmem:[%s0] sm:$0xff]
    %v90 = vld [vmem:[%s0 + $0x8] sm:$0xff]
    %v91 = vld [vmem:[%s0 + $0x10] sm:$0xff]
    %v92 = vld [vmem:[%s0 + $0x18] sm:$0xff]
    %v93 = vld [vmem:[%s0 + $0x20] sm:$0xff]
    %v94 = vld [vmem:[%s0 + $0x28] sm:$0xff]
    %v95 = vld [vmem:[%s0 + $0x30] sm:$0xff]
    %v96 = vld [vmem:[%s0 + $0x38] sm:$0xff]
    %v97 = vld [vmem:[#allocation2] sm:$0xff]
    %v98 = vld [vmem:[#allocation2 + $0x8] sm:$0xff]
    %v99 = vld [vmem:[#allocation2 + $0x10] sm:$0xff]
    %v100 = vld [vmem:[#allocation2 + $0x18] sm:$0xff]
    %v101 = vld [vmem:[#allocation2 + $0x20] sm:$0xff]
    %v102 = vld [vmem:[#allocation2 + $0x28] sm:$0xff]
    %v103 = vld [vmem:[#allocation2 + $0x30] sm:$0xff]
    %v104 = vld [vmem:[#allocation2 + $0x38] sm:$0xff]
    %v105 = vld [vmem:[#allocation2 + $0x40] sm:$0xff]
    %v106 = vld [vmem:[#allocation2 + $0x48] sm:$0xff]
    %v107 = vld [vmem:[#allocation2 + $0x50] sm:$0xff]
    %v108 = vld [vmem:[#allocation2 + $0x58] sm:$0xff]
    %v109 = vld [vmem:[#allocation2 + $0x60] sm:$0xff]
    %v110 = vld [vmem:[#allocation2 + $0x68] sm:$0xff]
    %v111 = vld [vmem:[#allocation2 + $0x70] sm:$0xff]
    %v112 = vld [vmem:[#allocation2 + $0x78] sm:$0xff]
    %v113 = vld [vmem:[#allocation2 + $0x80] sm:$0xff]
    %v114 = vld [vmem:[#allocation2 + $0x88] sm:$0xff]
    %v115 = vld [vmem:[#allocation2 + $0x90] sm:$0xff]
    %v116 = vld [vmem:[#allocation2 + $0x98] sm:$0xff]
    %v117 = vld [vmem:[#allocation2 + $0xa0] sm:$0xff]
    %v118 = vld [vmem:[#allocation2 + $0xa8] sm:$0xff]
    %v119 = vld [vmem:[#allocation2 + $0xb0] sm:$0xff]
    %v120 = vld [vmem:[#allocation2 + $0xb8] sm:$0xff]
    %v121 = vld [vmem:[#allocation2 + $0xc0] sm:$0xff]
    %v122 = vld [vmem:[#allocation2 + $0xc8] sm:$0xff]
    %v123 = vld [vmem:[#allocation2 + $0xd0] sm:$0xff]
    %v124 = vld [vmem:[#allocation2 + $0xd8] sm:$0xff]
    %v125 = vld [vmem:[#allocation2 + $0xe0] sm:$0xff]
    %v126 = vld [vmem:[#allocation2 + $0xe8] sm:$0xff]
    %v127 = vld [vmem:[#allocation2 + $0xf0] sm:$0xff]
    %v128 = vld [vmem:[#allocation2 + $0xf8] sm:$0xff]
    %v129 = vld [vmem:[#allocation2 + $0x100] sm:$0xff]
    %v130 = vld [vmem:[#allocation2 + $0x108] sm:$0xff]
    %v131 = vld [vmem:[#allocation2 + $0x110] sm:$0xff]
    %v132 = vld [vmem:[#allocation2 + $0x118] sm:$0xff]
    %v133 = vld [vmem:[#allocation2 + $0x120] sm:$0xff]
    %v134 = vld [vmem:[#allocation2 + $0x128] sm:$0xff]
    %v135 = vld [vmem:[#allocation2 + $0x130] sm:$0xff]
    %v136 = vld [vmem:[#allocation2 + $0x138] sm:$0xff]
    %v137 = vld [vmem:[#allocation2 + $0x140] sm:$0xff]
    %v138 = vld [vmem:[#allocation2 + $0x148] sm:$0xff]
    %v139 = vld [vmem:[#allocation2 + $0x150] sm:$0xff]
    %v140 = vld [vmem:[#allocation2 + $0x158] sm:$0xff]
    %v141 = vld [vmem:[#allocation2 + $0x160] sm:$0xff]
    %v142 = vld [vmem:[#allocation2 + $0x168] sm:$0xff]
    %v143 = vld [vmem:[#allocation2 + $0x170] sm:$0xff]
    %v144 = vld [vmem:[#allocation2 + $0x178] sm:$0xff]
    %v145 = vld [vmem:[#allocation2 + $0x180] sm:$0xff]
    %v146 = vld [vmem:[#allocation2 + $0x188] sm:$0xff]
    %v147 = vld [vmem:[#allocation2 + $0x190] sm:$0xff]
    %v148 = vld [vmem:[#allocation2 + $0x198] sm:$0xff]
    %v149 = vld [vmem:[#allocation2 + $0x1a0] sm:$0xff]
    %v150 = vld [vmem:[#allocation2 + $0x1a8] sm:$0xff]
    %v151 = vld [vmem:[#allocation2 + $0x1b0] sm:$0xff]
    %v152 = vld [vmem:[#allocation2 + $0x1b8] sm:$0xff]
    %v153 = vld [vmem:[#allocation2 + $0x1c0] sm:$0xff]
    %v154 = vld [vmem:[#allocation2 + $0x1c8] sm:$0xff]
    %v155 = vld [vmem:[#allocation2 + $0x1d0] sm:$0xff]
    %v156 = vld [vmem:[#allocation2 + $0x1d8] sm:$0xff]
    %v157 = vld [vmem:[#allocation2 + $0x1e0] sm:$0xff]
    %v158 = vld [vmem:[#allocation2 + $0x1e8] sm:$0xff]
    %v159 = vld [vmem:[#allocation2 + $0x1f0] sm:$0xff]
    %v160 = vld [vmem:[#allocation2 + $0x1f8] sm:$0xff]
    %v161 = vld [vmem:[#allocation2 + $0x200] sm:$0xff]
    %v162 = vld [vmem:[#allocation2 + $0x208] sm:$0xff]
    %v163 = vld [vmem:[#allocation2 + $0x210] sm:$0xff]
    %v164 = vld [vmem:[#allocation2 + $0x218] sm:$0xff]
    %v165 = vld [vmem:[#allocation2 + $0x220] sm:$0xff]
    %v166 = vld [vmem:[#allocation2 + $0x228] sm:$0xff]
    %v167 = vld [vmem:[#allocation2 + $0x230] sm:$0xff]
    %v168 = vld [vmem:[#allocation2 + $0x238] sm:$0xff]
    %v169 = vld [vmem:[#allocation2 + $0x240] sm:$0xff]
    %v170 = vld [vmem:[#allocation2 + $0x248] sm:$0xff]
    %v171 = vld [vmem:[#allocation2 + $0x250] sm:$0xff]
    %v172 = vld [vmem:[#allocation2 + $0x258] sm:$0xff]
    %v173 = vld [vmem:[#allocation2 + $0x260] sm:$0xff]
    %v174 = vld [vmem:[#allocation2 + $0x268] sm:$0xff]
    %v175 = vld [vmem:[#allocation2 + $0x270] sm:$0xff]
    %v176 = vld [vmem:[#allocation2 + $0x278] sm:$0xff]
    %v177 = vld [vmem:[#allocation2 + $0x280] sm:$0xff]
    %v178 = vld [vmem:[#allocation2 + $0x288] sm:$0xff]
    %v179 = vld [vmem:[#allocation2 + $0x290] sm:$0xff]
    %v180 = vld [vmem:[#allocation2 + $0x298] sm:$0xff]
    %v181 = vld [vmem:[#allocation2 + $0x2a0] sm:$0xff]
    %v182 = vld [vmem:[#allocation2 + $0x2a8] sm:$0xff]
    %v183 = vld [vmem:[#allocation2 + $0x2b0] sm:$0xff]
    %v184 = vld [vmem:[#allocation2 + $0x2b8] sm:$0xff]
    %v185 = vld [vmem:[#allocation2 + $0x2c0] sm:$0xff]
    %v186 = vld [vmem:[#allocation2 + $0x2c8] sm:$0xff]
    %v187 = vld [vmem:[#allocation2 + $0x2d0] sm:$0xff]
    %v188 = vld [vmem:[#allocation2 + $0x2d8] sm:$0xff]
    %v189 = vld [vmem:[#allocation2 + $0x2e0] sm:$0xff]
    %v190 = vld [vmem:[#allocation2 + $0x2e8] sm:$0xff]
    %v191 = vld [vmem:[#allocation2 + $0x2f0] sm:$0xff]
    %v192 = vld [vmem:[#allocation2 + $0x2f8] sm:$0xff]
    %v193 = vld [vmem:[#allocation2 + $0x300] sm:$0xff]
    %v194 = vld [vmem:[#allocation2 + $0x308] sm:$0xff]
    %v195 = vld [vmem:[#allocation2 + $0x310] sm:$0xff]
    %v196 = vld [vmem:[#allocation2 + $0x318] sm:$0xff]
    %v197 = vld [vmem:[#allocation2 + $0x320] sm:$0xff]
    %v198 = vld [vmem:[#allocation2 + $0x328] sm:$0xff]
    %v199 = vld [vmem:[#allocation2 + $0x330] sm:$0xff]
    %v200 = vld [vmem:[#allocation2 + $0x338] sm:$0xff]
    %v201 = vld [vmem:[#allocation2 + $0x340] sm:$0xff]
    %v202 = vld [vmem:[#allocation2 + $0x348] sm:$0xff]
    %v203 = vld [vmem:[#allocation2 + $0x350] sm:$0xff]
    %v204 = vld [vmem:[#allocation2 + $0x358] sm:$0xff]
    %v205 = vld [vmem:[#allocation2 + $0x360] sm:$0xff]
    %v206 = vld [vmem:[#allocation2 + $0x368] sm:$0xff]
    %v207 = vld [vmem:[#allocation2 + $0x370] sm:$0xff]
    %v208 = vld [vmem:[#allocation2 + $0x378] sm:$0xff]
    %v209 = vld [vmem:[#allocation2 + $0x380] sm:$0xff]
    %v210 = vld [vmem:[#allocation2 + $0x388] sm:$0xff]
    %v211 = vld [vmem:[#allocation2 + $0x390] sm:$0xff]
    %v212 = vld [vmem:[#allocation2 + $0x398] sm:$0xff]
    %v213 = vld [vmem:[#allocation2 + $0x3a0] sm:$0xff]
    %v214 = vld [vmem:[#allocation2 + $0x3a8] sm:$0xff]
    %v215 = vld [vmem:[#allocation2 + $0x3b0] sm:$0xff]
    %v216 = vld [vmem:[#allocation2 + $0x3b8] sm:$0xff]
    %v217 = vld [vmem:[#allocation2 + $0x3c0] sm:$0xff]
    %v218 = vld [vmem:[#allocation2 + $0x3c8] sm:$0xff]
    %v219 = vld [vmem:[#allocation2 + $0x3d0] sm:$0xff]
    %v220 = vld [vmem:[#allocation2 + $0x3d8] sm:$0xff]
    %v221 = vld [vmem:[#allocation2 + $0x3e0] sm:$0xff]
    %v222 = vld [vmem:[#allocation2 + $0x3e8] sm:$0xff]
    %v223 = vld [vmem:[#allocation2 + $0x3f0] sm:$0xff]
    %v224 = vld [vmem:[#allocation2 + $0x3f8] sm:$0xff]
    %v225 = vld [vmem:[#allocation2 + $0x400] sm:$0xff]
    %v226 = vld [vmem:[#allocation2 + $0x408] sm:$0xff]
    %v227 = vld [vmem:[#allocation2 + $0x410] sm:$0xff]
    %v228 = vld [vmem:[#allocation2 + $0x418] sm:$0xff]
    %v229 = vld [vmem:[#allocation2 + $0x420] sm:$0xff]
    %v230 = vld [vmem:[#allocation2 + $0x428] sm:$0xff]
    %v231 = vld [vmem:[#allocation2 + $0x430] sm:$0xff]
    %v232 = vld [vmem:[#allocation2 + $0x438] sm:$0xff]
    %v233 = vld [vmem:[#allocation2 + $0x440] sm:$0xff]
    %v234 = vld [vmem:[#allocation2 + $0x448] sm:$0xff]
    %v235 = vld [vmem:[#allocation2 + $0x450] sm:$0xff]
    %v236 = vld [vmem:[#allocation2 + $0x458] sm:$0xff]
    %v237 = vld [vmem:[#allocation2 + $0x460] sm:$0xff]
    %v238 = vld [vmem:[#allocation2 + $0x468] sm:$0xff]
    %v239 = vld [vmem:[#allocation2 + $0x470] sm:$0xff]
    %v240 = vld [vmem:[#allocation2 + $0x478] sm:$0xff]
    %v241 = vld [vmem:[#allocation2 + $0x480] sm:$0xff]
    %v242 = vld [vmem:[#allocation2 + $0x488] sm:$0xff]
    %v243 = vld [vmem:[#allocation2 + $0x490] sm:$0xff]
    %v244 = vld [vmem:[#allocation2 + $0x498] sm:$0xff]
    %v245 = vld [vmem:[#allocation2 + $0x4a0] sm:$0xff]
    %v246 = vld [vmem:[#allocation2 + $0x4a8] sm:$0xff]
    %v247 = vld [vmem:[#allocation2 + $0x4b0] sm:$0xff]
    %v248 = vld [vmem:[#allocation2 + $0x4b8] sm:$0xff]
    %v249 = vld [vmem:[#allocation2 + $0x4c0] sm:$0xff]
    %v250 = vld [vmem:[#allocation2 + $0x4c8] sm:$0xff]
    %v251 = vld [vmem:[#allocation2 + $0x4d0] sm:$0xff]
    %v252 = vld [vmem:[#allocation2 + $0x4d8] sm:$0xff]
    %v253 = vld [vmem:[#allocation2 + $0x4e0] sm:$0xff]
    %v254 = vld [vmem:[#allocation2 + $0x4e8] sm:$0xff]
    %v255 = vld [vmem:[#allocation2 + $0x4f0] sm:$0xff]
    %v256 = vld [vmem:[#allocation2 + $0x4f8] sm:$0xff]
    %v257 = vld [vmem:[#allocation2 + $0x500] sm:$0xff]
    %v258 = vld [vmem:[#allocation2 + $0x508] sm:$0xff]
    %v259 = vld [vmem:[#allocation2 + $0x510] sm:$0xff]
    %v260 = vld [vmem:[#allocation2 + $0x518] sm:$0xff]
    %v261 = vld [vmem:[#allocation2 + $0x520] sm:$0xff]
    %v262 = vld [vmem:[#allocation2 + $0x528] sm:$0xff]
    %v263 = vld [vmem:[#allocation2 + $0x530] sm:$0xff]
    %v264 = vld [vmem:[#allocation2 + $0x538] sm:$0xff]
    %v265 = vld [vmem:[#allocation2 + $0x540] sm:$0xff]
    %v266 = vld [vmem:[#allocation2 + $0x548] sm:$0xff]
    %v267 = vld [vmem:[#allocation2 + $0x550] sm:$0xff]
    %v268 = vld [vmem:[#allocation2 + $0x558] sm:$0xff]
    %v269 = vld [vmem:[#allocation2 + $0x560] sm:$0xff]
    %v270 = vld [vmem:[#allocation2 + $0x568] sm:$0xff]
    %v271 = vld [vmem:[#allocation2 + $0x570] sm:$0xff]
    %v272 = vld [vmem:[#allocation2 + $0x578] sm:$0xff]
    %v273 = vld [vmem:[#allocation2 + $0x580] sm:$0xff]
    %v274 = vld [vmem:[#allocation2 + $0x588] sm:$0xff]
    %v275 = vld [vmem:[#allocation2 + $0x590] sm:$0xff]
    %v276 = vld [vmem:[#allocation2 + $0x598] sm:$0xff]
    %v277 = vld [vmem:[#allocation2 + $0x5a0] sm:$0xff]
    %v278 = vld [vmem:[#allocation2 + $0x5a8] sm:$0xff]
    %v279 = vld [vmem:[#allocation2 + $0x5b0] sm:$0xff]
    %v280 = vld [vmem:[#allocation2 + $0x5b8] sm:$0xff]
    %v281 = vld [vmem:[#allocation2 + $0x5c0] sm:$0xff]
    %v282 = vld [vmem:[#allocation2 + $0x5c8] sm:$0xff]
    %v283 = vld [vmem:[#allocation2 + $0x5d0] sm:$0xff]
    %v284 = vld [vmem:[#allocation2 + $0x5d8] sm:$0xff]
    %v285 = vld [vmem:[#allocation2 + $0x5e0] sm:$0xff]
    %v286 = vld [vmem:[#allocation2 + $0x5e8] sm:$0xff]
    %v287 = vld [vmem:[#allocation2 + $0x5f0] sm:$0xff]
    %v288 = vld [vmem:[#allocation2 + $0x5f8] sm:$0xff]
    %v289 = vld [vmem:[#allocation2 + $0x600] sm:$0xff]
    %v290 = vld [vmem:[#allocation2 + $0x608] sm:$0xff]
    %v291 = vld [vmem:[#allocation2 + $0x610] sm:$0xff]
    %v292 = vld [vmem:[#allocation2 + $0x618] sm:$0xff]
    %v293 = vld [vmem:[#allocation2 + $0x620] sm:$0xff]
    %v294 = vld [vmem:[#allocation2 + $0x628] sm:$0xff]
    %v295 = vld [vmem:[#allocation2 + $0x630] sm:$0xff]
    %v296 = vld [vmem:[#allocation2 + $0x638] sm:$0xff]
    %v297 = vld [vmem:[#allocation2 + $0x640] sm:$0xff]
    %v298 = vld [vmem:[#allocation2 + $0x648] sm:$0xff]
    %v299 = vld [vmem:[#allocation2 + $0x650] sm:$0xff]
    %v300 = vld [vmem:[#allocation2 + $0x658] sm:$0xff]
    %v301 = vld [vmem:[#allocation2 + $0x660] sm:$0xff]
    %v302 = vld [vmem:[#allocation2 + $0x668] sm:$0xff]
    %v303 = vld [vmem:[#allocation2 + $0x670] sm:$0xff]
    %v304 = vld [vmem:[#allocation2 + $0x678] sm:$0xff]
    %v305 = vld [vmem:[#allocation2 + $0x680] sm:$0xff]
    %v306 = vld [vmem:[#allocation2 + $0x688] sm:$0xff]
    %v307 = vld [vmem:[#allocation2 + $0x690] sm:$0xff]
    %v308 = vld [vmem:[#allocation2 + $0x698] sm:$0xff]
    %v309 = vld [vmem:[#allocation2 + $0x6a0] sm:$0xff]
    %v310 = vld [vmem:[#allocation2 + $0x6a8] sm:$0xff]
    %v311 = vld [vmem:[#allocation2 + $0x6b0] sm:$0xff]
    %v312 = vld [vmem:[#allocation2 + $0x6b8] sm:$0xff]
    %v313 = vld [vmem:[#allocation2 + $0x6c0] sm:$0xff]
    %v314 = vld [vmem:[#allocation2 + $0x6c8] sm:$0xff]
    %v315 = vld [vmem:[#allocation2 + $0x6d0] sm:$0xff]
    %v316 = vld [vmem:[#allocation2 + $0x6d8] sm:$0xff]
    %v317 = vld [vmem:[#allocation2 + $0x6e0] sm:$0xff]
    %v318 = vld [vmem:[#allocation2 + $0x6e8] sm:$0xff]
    %v319 = vld [vmem:[#allocation2 + $0x6f0] sm:$0xff]
    %v320 = vld [vmem:[#allocation2 + $0x6f8] sm:$0xff]
    %v321 = vld [vmem:[#allocation2 + $0x700] sm:$0xff]
    %v322 = vld [vmem:[#allocation2 + $0x708] sm:$0xff]
    %v323 = vld [vmem:[#allocation2 + $0x710] sm:$0xff]
    %v324 = vld [vmem:[#allocation2 + $0x718] sm:$0xff]
    %v325 = vld [vmem:[#allocation2 + $0x720] sm:$0xff]
    %v326 = vld [vmem:[#allocation2 + $0x728] sm:$0xff]
    %v327 = vld [vmem:[#allocation2 + $0x730] sm:$0xff]
    %v328 = vld [vmem:[#allocation2 + $0x738] sm:$0xff]
    %v329 = vld [vmem:[#allocation2 + $0x740] sm:$0xff]
    %v330 = vld [vmem:[#allocation2 + $0x748] sm:$0xff]
    %v331 = vld [vmem:[#allocation2 + $0x750] sm:$0xff]
    %v332 = vld [vmem:[#allocation2 + $0x758] sm:$0xff]
    %v333 = vld [vmem:[#allocation2 + $0x760] sm:$0xff]
    %v334 = vld [vmem:[#allocation2 + $0x768] sm:$0xff]
    %v335 = vld [vmem:[#allocation2 + $0x770] sm:$0xff]
    %v336 = vld [vmem:[#allocation2 + $0x778] sm:$0xff]
    %v337 = vld [vmem:[#allocation2 + $0x780] sm:$0xff]
    %v338 = vld [vmem:[#allocation2 + $0x788] sm:$0xff]
    %v339 = vld [vmem:[#allocation2 + $0x790] sm:$0xff]
    %v340 = vld [vmem:[#allocation2 + $0x798] sm:$0xff]
    %v341 = vld [vmem:[#allocation2 + $0x7a0] sm:$0xff]
    %v342 = vld [vmem:[#allocation2 + $0x7a8] sm:$0xff]
    %v343 = vld [vmem:[#allocation2 + $0x7b0] sm:$0xff]
    %v344 = vld [vmem:[#allocation2 + $0x7b8] sm:$0xff]
    %v345 = vld [vmem:[#allocation2 + $0x7c0] sm:$0xff]
    %v346 = vld [vmem:[#allocation2 + $0x7c8] sm:$0xff]
    %v347 = vld [vmem:[#allocation2 + $0x7d0] sm:$0xff]
    %v348 = vld [vmem:[#allocation2 + $0x7d8] sm:$0xff]
    %v349 = vld [vmem:[#allocation2 + $0x7e0] sm:$0xff]
    %v350 = vld [vmem:[#allocation2 + $0x7e8] sm:$0xff]
    %v351 = vld [vmem:[#allocation2 + $0x7f0] sm:$0xff]
    %v352 = vld [vmem:[#allocation2 + $0x7f8] sm:$0xff]
    %v353 = vld [vmem:[#allocation2 + $0x800] sm:$0xff]
    %v354 = vld [vmem:[#allocation2 + $0x808] sm:$0xff]
    %v355 = vld [vmem:[#allocation2 + $0x810] sm:$0xff]
    %v356 = vld [vmem:[#allocation2 + $0x818] sm:$0xff]
    %v357 = vld [vmem:[#allocation2 + $0x820] sm:$0xff]
    %v358 = vld [vmem:[#allocation2 + $0x828] sm:$0xff]
    %v359 = vld [vmem:[#allocation2 + $0x830] sm:$0xff]
    %v360 = vld [vmem:[#allocation2 + $0x838] sm:$0xff]
    %v361 = vld [vmem:[#allocation2 + $0x840] sm:$0xff]
    %v362 = vld [vmem:[#allocation2 + $0x848] sm:$0xff]
    %v363 = vld [vmem:[#allocation2 + $0x850] sm:$0xff]
    %v364 = vld [vmem:[#allocation2 + $0x858] sm:$0xff]
    %v365 = vld [vmem:[#allocation2 + $0x860] sm:$0xff]
    %v366 = vld [vmem:[#allocation2 + $0x868] sm:$0xff]
    %v367 = vld [vmem:[#allocation2 + $0x870] sm:$0xff]
    %v368 = vld [vmem:[#allocation2 + $0x878] sm:$0xff]
    %v369 = vld [vmem:[#allocation2 + $0x880] sm:$0xff]
    %v370 = vld [vmem:[#allocation2 + $0x888] sm:$0xff]
    %v371 = vld [vmem:[#allocation2 + $0x890] sm:$0xff]
    %v372 = vld [vmem:[#allocation2 + $0x898] sm:$0xff]
    %v373 = vld [vmem:[#allocation2 + $0x8a0] sm:$0xff]
    %v374 = vld [vmem:[#allocation2 + $0x8a8] sm:$0xff]
    %v375 = vld [vmem:[#allocation2 + $0x8b0] sm:$0xff]
    %v376 = vld [vmem:[#allocation2 + $0x8b8] sm:$0xff]
    %v377 = vld [vmem:[#allocation2 + $0x8c0] sm:$0xff]
    %v378 = vld [vmem:[#allocation2 + $0x8c8] sm:$0xff]
    %v379 = vld [vmem:[#allocation2 + $0x8d0] sm:$0xff]
    %v380 = vld [vmem:[#allocation2 + $0x8d8] sm:$0xff]
    %v381 = vld [vmem:[#allocation2 + $0x8e0] sm:$0xff]
    %v382 = vld [vmem:[#allocation2 + $0x8e8] sm:$0xff]
    %v383 = vld [vmem:[#allocation2 + $0x8f0] sm:$0xff]
    %v384 = vld [vmem:[#allocation2 + $0x8f8] sm:$0xff]
    %v385 = vld [vmem:[#allocation2 + $0x900] sm:$0xff]
    %v386 = vld [vmem:[#allocation2 + $0x908] sm:$0xff]
    %v387 = vld [vmem:[#allocation2 + $0x910] sm:$0xff]
    %v388 = vld [vmem:[#allocation2 + $0x918] sm:$0xff]
    %v389 = vld [vmem:[#allocation2 + $0x920] sm:$0xff]
    %v390 = vld [vmem:[#allocation2 + $0x928] sm:$0xff]
    %v391 = vld [vmem:[#allocation2 + $0x930] sm:$0xff]
    %v392 = vld [vmem:[#allocation2 + $0x938] sm:$0xff]
    %v393 = vld [vmem:[#allocation2 + $0x940] sm:$0xff]
    %v394 = vld [vmem:[#allocation2 + $0x948] sm:$0xff]
    %v395 = vld [vmem:[#allocation2 + $0x950] sm:$0xff]
    %v396 = vld [vmem:[#allocation2 + $0x958] sm:$0xff]
    %v397 = vld [vmem:[#allocation2 + $0x960] sm:$0xff]
    %v398 = vld [vmem:[#allocation2 + $0x968] sm:$0xff]
    %v399 = vld [vmem:[#allocation2 + $0x970] sm:$0xff]
    %v400 = vld [vmem:[#allocation2 + $0x978] sm:$0xff]
    %v401 = vld [vmem:[#allocation2 + $0x980] sm:$0xff]
    %v402 = vld [vmem:[#allocation2 + $0x988] sm:$0xff]
    %v403 = vld [vmem:[#allocation2 + $0x990] sm:$0xff]
    %v404 = vld [vmem:[#allocation2 + $0x998] sm:$0xff]
    %v405 = vld [vmem:[#allocation2 + $0x9a0] sm:$0xff]
    %v406 = vld [vmem:[#allocation2 + $0x9a8] sm:$0xff]
    %v407 = vld [vmem:[#allocation2 + $0x9b0] sm:$0xff]
    %v408 = vld [vmem:[#allocation2 + $0x9b8] sm:$0xff]
    %v409 = vld [vmem:[#allocation2 + $0x9c0] sm:$0xff]
    %v410 = vld [vmem:[#allocation2 + $0x9c8] sm:$0xff]
    %v411 = vld [vmem:[#allocation2 + $0x9d0] sm:$0xff]
    %v412 = vld [vmem:[#allocation2 + $0x9d8] sm:$0xff]
    %v413 = vld [vmem:[#allocation2 + $0x9e0] sm:$0xff]
    %v414 = vld [vmem:[#allocation2 + $0x9e8] sm:$0xff]
    %v415 = vld [vmem:[#allocation2 + $0x9f0] sm:$0xff]
    %v416 = vld [vmem:[#allocation2 + $0x9f8] sm:$0xff]
    %v417 = vld [vmem:[#allocation2 + $0xa00] sm:$0xff]
    %v418 = vld [vmem:[#allocation2 + $0xa08] sm:$0xff]
    %v419 = vld [vmem:[#allocation2 + $0xa10] sm:$0xff]
    %v420 = vld [vmem:[#allocation2 + $0xa18] sm:$0xff]
    %v421 = vld [vmem:[#allocation2 + $0xa20] sm:$0xff]
    %v422 = vld [vmem:[#allocation2 + $0xa28] sm:$0xff]
    %v423 = vld [vmem:[#allocation2 + $0xa30] sm:$0xff]
    %v424 = vld [vmem:[#allocation2 + $0xa38] sm:$0xff]
    %v425 = vld [vmem:[#allocation2 + $0xa40] sm:$0xff]
    %v426 = vld [vmem:[#allocation2 + $0xa48] sm:$0xff]
    %v427 = vld [vmem:[#allocation2 + $0xa50] sm:$0xff]
    %v428 = vld [vmem:[#allocation2 + $0xa58] sm:$0xff]
    %v429 = vld [vmem:[#allocation2 + $0xa60] sm:$0xff]
    %v430 = vld [vmem:[#allocation2 + $0xa68] sm:$0xff]
    %v431 = vld [vmem:[#allocation2 + $0xa70] sm:$0xff]
    %v432 = vld [vmem:[#allocation2 + $0xa78] sm:$0xff]
    %v433 = vld [vmem:[#allocation2 + $0xa80] sm:$0xff]
    %v434 = vld [vmem:[#allocation2 + $0xa88] sm:$0xff]
    %v435 = vld [vmem:[#allocation2 + $0xa90] sm:$0xff]
    %v436 = vld [vmem:[#allocation2 + $0xa98] sm:$0xff]
    %v437 = vld [vmem:[#allocation2 + $0xaa0] sm:$0xff]
    %v438 = vld [vmem:[#allocation2 + $0xaa8] sm:$0xff]
    %v439 = vld [vmem:[#allocation2 + $0xab0] sm:$0xff]
    %v440 = vld [vmem:[#allocation2 + $0xab8] sm:$0xff]
    %v441 = vld [vmem:[#allocation2 + $0xac0] sm:$0xff]
    %v442 = vld [vmem:[#allocation2 + $0xac8] sm:$0xff]
    %v443 = vld [vmem:[#allocation2 + $0xad0] sm:$0xff]
    %v444 = vld [vmem:[#allocation2 + $0xad8] sm:$0xff]
    %v445 = vld [vmem:[#allocation2 + $0xae0] sm:$0xff]
    %v446 = vld [vmem:[#allocation2 + $0xae8] sm:$0xff]
    %v447 = vld [vmem:[#allocation2 + $0xaf0] sm:$0xff]
    %v448 = vld [vmem:[#allocation2 + $0xaf8] sm:$0xff]
    %v449 = vld [vmem:[#allocation2 + $0xb00] sm:$0xff]
    %v450 = vld [vmem:[#allocation2 + $0xb08] sm:$0xff]
    %v451 = vld [vmem:[#allocation2 + $0xb10] sm:$0xff]
    %v452 = vld [vmem:[#allocation2 + $0xb18] sm:$0xff]
    %v453 = vld [vmem:[#allocation2 + $0xb20] sm:$0xff]
    %v454 = vld [vmem:[#allocation2 + $0xb28] sm:$0xff]
    %v455 = vld [vmem:[#allocation2 + $0xb30] sm:$0xff]
    %v456 = vld [vmem:[#allocation2 + $0xb38] sm:$0xff]
    %v457 = vld [vmem:[#allocation2 + $0xb40] sm:$0xff]
    %v458 = vld [vmem:[#allocation2 + $0xb48] sm:$0xff]
    %v459 = vld [vmem:[#allocation2 + $0xb50] sm:$0xff]
    %v460 = vld [vmem:[#allocation2 + $0xb58] sm:$0xff]
    %v461 = vld [vmem:[#allocation2 + $0xb60] sm:$0xff]
    %v462 = vld [vmem:[#allocation2 + $0xb68] sm:$0xff]
    %v463 = vld [vmem:[#allocation2 + $0xb70] sm:$0xff]
    %v464 = vld [vmem:[#allocation2 + $0xb78] sm:$0xff]
    %v465 = vld [vmem:[#allocation2 + $0xb80] sm:$0xff]
    %v466 = vld [vmem:[#allocation2 + $0xb88] sm:$0xff]
    %v467 = vld [vmem:[#allocation2 + $0xb90] sm:$0xff]
    %v468 = vld [vmem:[#allocation2 + $0xb98] sm:$0xff]
    %v469 = vld [vmem:[#allocation2 + $0xba0] sm:$0xff]
    %v470 = vld [vmem:[#allocation2 + $0xba8] sm:$0xff]
    %v471 = vld [vmem:[#allocation2 + $0xbb0] sm:$0xff]
    %v472 = vld [vmem:[#allocation2 + $0xbb8] sm:$0xff]
    %v473 = vld [vmem:[#allocation2 + $0xbc0] sm:$0xff]
    %v474 = vld [vmem:[#allocation2 + $0xbc8] sm:$0xff]
    %v475 = vld [vmem:[#allocation2 + $0xbd0] sm:$0xff]
    %v476 = vld [vmem:[#allocation2 + $0xbd8] sm:$0xff]
    %v477 = vld [vmem:[#allocation2 + $0xbe0] sm:$0xff]
    %v478 = vld [vmem:[#allocation2 + $0xbe8] sm:$0xff]
    %v479 = vld [vmem:[#allocation2 + $0xbf0] sm:$0xff]
    %v480 = vld [vmem:[#allocation2 + $0xbf8] sm:$0xff]
    %v481 = vld [vmem:[#allocation2 + $0xc00] sm:$0xff]
    %v482 = vld [vmem:[#allocation2 + $0xc08] sm:$0xff]
    %v483 = vld [vmem:[#allocation2 + $0xc10] sm:$0xff]
    %v484 = vld [vmem:[#allocation2 + $0xc18] sm:$0xff]
    %v485 = vld [vmem:[#allocation2 + $0xc20] sm:$0xff]
    %v486 = vld [vmem:[#allocation2 + $0xc28] sm:$0xff]
    %v487 = vld [vmem:[#allocation2 + $0xc30] sm:$0xff]
    %v488 = vld [vmem:[#allocation2 + $0xc38] sm:$0xff]
    %v489 = vld [vmem:[#allocation2 + $0xc40] sm:$0xff]
    %v490 = vld [vmem:[#allocation2 + $0xc48] sm:$0xff]
    %v491 = vld [vmem:[#allocation2 + $0xc50] sm:$0xff]
    %v492 = vld [vmem:[#allocation2 + $0xc58] sm:$0xff]
    %v493 = vld [vmem:[#allocation2 + $0xc60] sm:$0xff]
    %v494 = vld [vmem:[#allocation2 + $0xc68] sm:$0xff]
    %v495 = vld [vmem:[#allocation2 + $0xc70] sm:$0xff]
    %v496 = vld [vmem:[#allocation2 + $0xc78] sm:$0xff]
    %v497 = vld [vmem:[#allocation2 + $0xc80] sm:$0xff]
    %v498 = vld [vmem:[#allocation2 + $0xc88] sm:$0xff]
    %v499 = vld [vmem:[#allocation2 + $0xc90] sm:$0xff]
    %v500 = vld [vmem:[#allocation2 + $0xc98] sm:$0xff]
    %v501 = vld [vmem:[#allocation2 + $0xca0] sm:$0xff]
    %v502 = vld [vmem:[#allocation2 + $0xca8] sm:$0xff]
    %v503 = vld [vmem:[#allocation2 + $0xcb0] sm:$0xff]
    %v504 = vld [vmem:[#allocation2 + $0xcb8] sm:$0xff]
    %v505 = vld [vmem:[#allocation2 + $0xcc0] sm:$0xff]
    %v506 = vld [vmem:[#allocation2 + $0xcc8] sm:$0xff]
    %v507 = vld [vmem:[#allocation2 + $0xcd0] sm:$0xff]
    %v508 = vld [vmem:[#allocation2 + $0xcd8] sm:$0xff]
    %v509 = vld [vmem:[#allocation2 + $0xce0] sm:$0xff]
    %v510 = vld [vmem:[#allocation2 + $0xce8] sm:$0xff]
    %v511 = vld [vmem:[#allocation2 + $0xcf0] sm:$0xff]
    %v512 = vld [vmem:[#allocation2 + $0xcf8] sm:$0xff]
    %v513 = vld [vmem:[#allocation2 + $0xd00] sm:$0xff]
    %v514 = vld [vmem:[#allocation2 + $0xd08] sm:$0xff]
    %v515 = vld [vmem:[#allocation2 + $0xd10] sm:$0xff]
    %v516 = vld [vmem:[#allocation2 + $0xd18] sm:$0xff]
    %v517 = vld [vmem:[#allocation2 + $0xd20] sm:$0xff]
    %v518 = vld [vmem:[#allocation2 + $0xd28] sm:$0xff]
    %v519 = vld [vmem:[#allocation2 + $0xd30] sm:$0xff]
    %v520 = vld [vmem:[#allocation2 + $0xd38] sm:$0xff]
    %v521 = vld [vmem:[#allocation2 + $0xd40] sm:$0xff]
    %v522 = vld [vmem:[#allocation2 + $0xd48] sm:$0xff]
    %v523 = vld [vmem:[#allocation2 + $0xd50] sm:$0xff]
    %v524 = vld [vmem:[#allocation2 + $0xd58] sm:$0xff]
    %v525 = vld [vmem:[#allocation2 + $0xd60] sm:$0xff]
    %v526 = vld [vmem:[#allocation2 + $0xd68] sm:$0xff]
    %v527 = vld [vmem:[#allocation2 + $0xd70] sm:$0xff]
    %v528 = vld [vmem:[#allocation2 + $0xd78] sm:$0xff]
    %v529 = vld [vmem:[#allocation2 + $0xd80] sm:$0xff]
    %v530 = vld [vmem:[#allocation2 + $0xd88] sm:$0xff]
    %v531 = vld [vmem:[#allocation2 + $0xd90] sm:$0xff]
    %v532 = vld [vmem:[#allocation2 + $0xd98] sm:$0xff]
    %v533 = vld [vmem:[#allocation2 + $0xda0] sm:$0xff]
    %v534 = vld [vmem:[#allocation2 + $0xda8] sm:$0xff]
    %v535 = vld [vmem:[#allocation2 + $0xdb0] sm:$0xff]
    %v536 = vld [vmem:[#allocation2 + $0xdb8] sm:$0xff]
    %v537 = vld [vmem:[#allocation2 + $0xdc0] sm:$0xff]
    %v538 = vld [vmem:[#allocation2 + $0xdc8] sm:$0xff]
    %v539 = vld [vmem:[#allocation2 + $0xdd0] sm:$0xff]
    %v540 = vld [vmem:[#allocation2 + $0xdd8] sm:$0xff]
    %v541 = vld [vmem:[#allocation2 + $0xde0] sm:$0xff]
    %v542 = vld [vmem:[#allocation2 + $0xde8] sm:$0xff]
    %v543 = vld [vmem:[#allocation2 + $0xdf0] sm:$0xff]
    %v544 = vld [vmem:[#allocation2 + $0xdf8] sm:$0xff]
    %v545 = vld [vmem:[#allocation2 + $0xe00] sm:$0xff]
    %v546 = vld [vmem:[#allocation2 + $0xe08] sm:$0xff]
    %v547 = vld [vmem:[#allocation2 + $0xe10] sm:$0xff]
    %v548 = vld [vmem:[#allocation2 + $0xe18] sm:$0xff]
    %v549 = vld [vmem:[#allocation2 + $0xe20] sm:$0xff]
    %v550 = vld [vmem:[#allocation2 + $0xe28] sm:$0xff]
    %v551 = vld [vmem:[#allocation2 + $0xe30] sm:$0xff]
    %v552 = vld [vmem:[#allocation2 + $0xe38] sm:$0xff]
    %v553 = vld [vmem:[#allocation2 + $0xe40] sm:$0xff]
    %v554 = vld [vmem:[#allocation2 + $0xe48] sm:$0xff]
    %v555 = vld [vmem:[#allocation2 + $0xe50] sm:$0xff]
    %v556 = vld [vmem:[#allocation2 + $0xe58] sm:$0xff]
    %v557 = vld [vmem:[#allocation2 + $0xe60] sm:$0xff]
    %v558 = vld [vmem:[#allocation2 + $0xe68] sm:$0xff]
    %v559 = vld [vmem:[#allocation2 + $0xe70] sm:$0xff]
    %v560 = vld [vmem:[#allocation2 + $0xe78] sm:$0xff]
    %v561 = vld [vmem:[#allocation2 + $0xe80] sm:$0xff]
    %v562 = vld [vmem:[#allocation2 + $0xe88] sm:$0xff]
    %v563 = vld [vmem:[#allocation2 + $0xe90] sm:$0xff]
    %v564 = vld [vmem:[#allocation2 + $0xe98] sm:$0xff]
    %v565 = vld [vmem:[#allocation2 + $0xea0] sm:$0xff]
    %v566 = vld [vmem:[#allocation2 + $0xea8] sm:$0xff]
    %v567 = vld [vmem:[#allocation2 + $0xeb0] sm:$0xff]
    %v568 = vld [vmem:[#allocation2 + $0xeb8] sm:$0xff]
    %v569 = vld [vmem:[#allocation2 + $0xec0] sm:$0xff]
    %v570 = vld [vmem:[#allocation2 + $0xec8] sm:$0xff]
    %v571 = vld [vmem:[#allocation2 + $0xed0] sm:$0xff]
    %v572 = vld [vmem:[#allocation2 + $0xed8] sm:$0xff]
    %v573 = vld [vmem:[#allocation2 + $0xee0] sm:$0xff]
    %v574 = vld [vmem:[#allocation2 + $0xee8] sm:$0xff]
    %v575 = vld [vmem:[#allocation2 + $0xef0] sm:$0xff]
    %v576 = vld [vmem:[#allocation2 + $0xef8] sm:$0xff]
    %v577 = vld [vmem:[#allocation2 + $0xf00] sm:$0xff]
    %v578 = vld [vmem:[#allocation2 + $0xf08] sm:$0xff]
    %v579 = vld [vmem:[#allocation2 + $0xf10] sm:$0xff]
    %v580 = vld [vmem:[#allocation2 + $0xf18] sm:$0xff]
    %v581 = vld [vmem:[#allocation2 + $0xf20] sm:$0xff]
    %v582 = vld [vmem:[#allocation2 + $0xf28] sm:$0xff]
    %v583 = vld [vmem:[#allocation2 + $0xf30] sm:$0xff]
    %v584 = vld [vmem:[#allocation2 + $0xf38] sm:$0xff]
    %v585 = vld [vmem:[#allocation2 + $0xf40] sm:$0xff]
    %v586 = vld [vmem:[#allocation2 + $0xf48] sm:$0xff]
    %v587 = vld [vmem:[#allocation2 + $0xf50] sm:$0xff]
    %v588 = vld [vmem:[#allocation2 + $0xf58] sm:$0xff]
    %v589 = vld [vmem:[#allocation2 + $0xf60] sm:$0xff]
    %v590 = vld [vmem:[#allocation2 + $0xf68] sm:$0xff]
    %v591 = vld [vmem:[#allocation2 + $0xf70] sm:$0xff]
    %v592 = vld [vmem:[#allocation2 + $0xf78] sm:$0xff]
    %v593 = vld [vmem:[#allocation2 + $0xf80] sm:$0xff]
    %v594 = vld [vmem:[#allocation2 + $0xf88] sm:$0xff]
    %v595 = vld [vmem:[#allocation2 + $0xf90] sm:$0xff]
    %v596 = vld [vmem:[#allocation2 + $0xf98] sm:$0xff]
    %v597 = vld [vmem:[#allocation2 + $0xfa0] sm:$0xff]
    %v598 = vld [vmem:[#allocation2 + $0xfa8] sm:$0xff]
    %v599 = vld [vmem:[#allocation2 + $0xfb0] sm:$0xff]
    %v600 = vld [vmem:[#allocation2 + $0xfb8] sm:$0xff]
    %v601 = vld [vmem:[#allocation2 + $0xfc0] sm:$0xff]
    %v602 = vld [vmem:[#allocation2 + $0xfc8] sm:$0xff]
    %v603 = vld [vmem:[#allocation2 + $0xfd0] sm:$0xff]
    %v604 = vld [vmem:[#allocation2 + $0xfd8] sm:$0xff]
    %v605 = vld [vmem:[#allocation2 + $0xfe0] sm:$0xff]
    %v606 = vld [vmem:[#allocation2 + $0xfe8] sm:$0xff]
    %v607 = vld [vmem:[#allocation2 + $0xff0] sm:$0xff]
    %v608 = vld [vmem:[#allocation2 + $0xff8] sm:$0xff]
    %v609 = vld [vmem:[#allocation2 + $0x1000] sm:$0xff]
    %v610 = vld [vmem:[#allocation2 + $0x1008] sm:$0xff]
    %v611 = vld [vmem:[#allocation2 + $0x1010] sm:$0xff]
    %v612 = vld [vmem:[#allocation2 + $0x1018] sm:$0xff]
    %v613 = vld [vmem:[#allocation2 + $0x1020] sm:$0xff]
    %v614 = vld [vmem:[#allocation2 + $0x1028] sm:$0xff]
    %v615 = vld [vmem:[#allocation2 + $0x1030] sm:$0xff]
    %v616 = vld [vmem:[#allocation2 + $0x1038] sm:$0xff]
    %v617 = vld [vmem:[#allocation2 + $0x1040] sm:$0xff]
    %v618 = vld [vmem:[#allocation2 + $0x1048] sm:$0xff]
    %v619 = vld [vmem:[#allocation2 + $0x1050] sm:$0xff]
    %v620 = vld [vmem:[#allocation2 + $0x1058] sm:$0xff]
    %v621 = vld [vmem:[#allocation2 + $0x1060] sm:$0xff]
    %v622 = vld [vmem:[#allocation2 + $0x1068] sm:$0xff]
    %v623 = vld [vmem:[#allocation2 + $0x1070] sm:$0xff]
    %v624 = vld [vmem:[#allocation2 + $0x1078] sm:$0xff]
    %v625 = vld [vmem:[#allocation2 + $0x1080] sm:$0xff]
    %v626 = vld [vmem:[#allocation2 + $0x1088] sm:$0xff]
    %v627 = vld [vmem:[#allocation2 + $0x1090] sm:$0xff]
    %v628 = vld [vmem:[#allocation2 + $0x1098] sm:$0xff]
    %v629 = vld [vmem:[#allocation2 + $0x10a0] sm:$0xff]
    %v630 = vld [vmem:[#allocation2 + $0x10a8] sm:$0xff]
    %v631 = vld [vmem:[#allocation2 + $0x10b0] sm:$0xff]
    %v632 = vld [vmem:[#allocation2 + $0x10b8] sm:$0xff]
    %v633 = vld [vmem:[#allocation2 + $0x10c0] sm:$0xff]
    %v634 = vld [vmem:[#allocation2 + $0x10c8] sm:$0xff]
    %v635 = vld [vmem:[#allocation2 + $0x10d0] sm:$0xff]
    %v636 = vld [vmem:[#allocation2 + $0x10d8] sm:$0xff]
    %v637 = vld [vmem:[#allocation2 + $0x10e0] sm:$0xff]
    %v638 = vld [vmem:[#allocation2 + $0x10e8] sm:$0xff]
    %v639 = vld [vmem:[#allocation2 + $0x10f0] sm:$0xff]
    %v640 = vld [vmem:[#allocation2 + $0x10f8] sm:$0xff]
    %v641 = vld [vmem:[#allocation2 + $0x1100] sm:$0xff]
    %v642 = vld [vmem:[#allocation2 + $0x1108] sm:$0xff]
    %v643 = vld [vmem:[#allocation2 + $0x1110] sm:$0xff]
    %v644 = vld [vmem:[#allocation2 + $0x1118] sm:$0xff]
    %v645 = vld [vmem:[#allocation2 + $0x1120] sm:$0xff]
    %v646 = vld [vmem:[#allocation2 + $0x1128] sm:$0xff]
    %v647 = vld [vmem:[#allocation2 + $0x1130] sm:$0xff]
    %v648 = vld [vmem:[#allocation2 + $0x1138] sm:$0xff]
    %v649 = vld [vmem:[#allocation2 + $0x1140] sm:$0xff]
    %v650 = vld [vmem:[#allocation2 + $0x1148] sm:$0xff]
    %v651 = vld [vmem:[#allocation2 + $0x1150] sm:$0xff]
    %v652 = vld [vmem:[#allocation2 + $0x1158] sm:$0xff]
    %v653 = vld [vmem:[#allocation2 + $0x1160] sm:$0xff]
    %v654 = vld [vmem:[#allocation2 + $0x1168] sm:$0xff]
    %v655 = vld [vmem:[#allocation2 + $0x1170] sm:$0xff]
    %v656 = vld [vmem:[#allocation2 + $0x1178] sm:$0xff]
    %v657 = vld [vmem:[#allocation2 + $0x1180] sm:$0xff]
    %v658 = vld [vmem:[#allocation2 + $0x1188] sm:$0xff]
    %v659 = vld [vmem:[#allocation2 + $0x1190] sm:$0xff]
    %v660 = vld [vmem:[#allocation2 + $0x1198] sm:$0xff]
    %v661 = vld [vmem:[#allocation2 + $0x11a0] sm:$0xff]
    %v662 = vld [vmem:[#allocation2 + $0x11a8] sm:$0xff]
    %v663 = vld [vmem:[#allocation2 + $0x11b0] sm:$0xff]
    %v664 = vld [vmem:[#allocation2 + $0x11b8] sm:$0xff]
    %v665 = vld [vmem:[#allocation2 + $0x11c0] sm:$0xff]
    %v666 = vld [vmem:[#allocation2 + $0x11c8] sm:$0xff]
    %v667 = vld [vmem:[#allocation2 + $0x11d0] sm:$0xff]
    %v668 = vld [vmem:[#allocation2 + $0x11d8] sm:$0xff]
    %v669 = vld [vmem:[#allocation2 + $0x11e0] sm:$0xff]
    %v670 = vld [vmem:[#allocation2 + $0x11e8] sm:$0xff]
    %v671 = vld [vmem:[#allocation2 + $0x11f0] sm:$0xff]
    %v672 = vld [vmem:[#allocation2 + $0x11f8] sm:$0xff]
    %v673 = vld [vmem:[#allocation2 + $0x1200] sm:$0xff]
    %v674 = vld [vmem:[#allocation2 + $0x1208] sm:$0xff]
    %v675 = vld [vmem:[#allocation2 + $0x1210] sm:$0xff]
    %v676 = vld [vmem:[#allocation2 + $0x1218] sm:$0xff]
    %v677 = vld [vmem:[#allocation2 + $0x1220] sm:$0xff]
    %v678 = vld [vmem:[#allocation2 + $0x1228] sm:$0xff]
    %v679 = vld [vmem:[#allocation2 + $0x1230] sm:$0xff]
    %v680 = vld [vmem:[#allocation2 + $0x1238] sm:$0xff]
    %v681 = vld [vmem:[#allocation2 + $0x1240] sm:$0xff]
    %v682 = vld [vmem:[#allocation2 + $0x1248] sm:$0xff]
    %v683 = vld [vmem:[#allocation2 + $0x1250] sm:$0xff]
    %v684 = vld [vmem:[#allocation2 + $0x1258] sm:$0xff]
    %v685 = vld [vmem:[#allocation2 + $0x1260] sm:$0xff]
    %v686 = vld [vmem:[#allocation2 + $0x1268] sm:$0xff]
    %v687 = vld [vmem:[#allocation2 + $0x1270] sm:$0xff]
    %v688 = vld [vmem:[#allocation2 + $0x1278] sm:$0xff]
    %v689 = vld [vmem:[#allocation2 + $0x1280] sm:$0xff]
    %v690 = vld [vmem:[#allocation2 + $0x1288] sm:$0xff]
    %v691 = vld [vmem:[#allocation2 + $0x1290] sm:$0xff]
    %v692 = vld [vmem:[#allocation2 + $0x1298] sm:$0xff]
    %v693 = vld [vmem:[#allocation2 + $0x12a0] sm:$0xff]
    %v694 = vld [vmem:[#allocation2 + $0x12a8] sm:$0xff]
    %v695 = vld [vmem:[#allocation2 + $0x12b0] sm:$0xff]
    %v696 = vld [vmem:[#allocation2 + $0x12b8] sm:$0xff]
    %v697 = vld [vmem:[#allocation2 + $0x12c0] sm:$0xff]
    %v698 = vld [vmem:[#allocation2 + $0x12c8] sm:$0xff]
    %v699 = vld [vmem:[#allocation2 + $0x12d0] sm:$0xff]
    %v700 = vld [vmem:[#allocation2 + $0x12d8] sm:$0xff]
    %v701 = vld [vmem:[#allocation2 + $0x12e0] sm:$0xff]
    %v702 = vld [vmem:[#allocation2 + $0x12e8] sm:$0xff]
    %v703 = vld [vmem:[#allocation2 + $0x12f0] sm:$0xff]
    %v704 = vld [vmem:[#allocation2 + $0x12f8] sm:$0xff]
    %v705 = vld [vmem:[#allocation2 + $0x1300] sm:$0xff]
    %v706 = vld [vmem:[#allocation2 + $0x1308] sm:$0xff]
    %v707 = vld [vmem:[#allocation2 + $0x1310] sm:$0xff]
    %v708 = vld [vmem:[#allocation2 + $0x1318] sm:$0xff]
    %v709 = vld [vmem:[#allocation2 + $0x1320] sm:$0xff]
    %v710 = vld [vmem:[#allocation2 + $0x1328] sm:$0xff]
    %v711 = vld [vmem:[#allocation2 + $0x1330] sm:$0xff]
    %v712 = vld [vmem:[#allocation2 + $0x1338] sm:$0xff]
    %v713 = vld [vmem:[#allocation2 + $0x1340] sm:$0xff]
    %v714 = vld [vmem:[#allocation2 + $0x1348] sm:$0xff]
    %v715 = vld [vmem:[#allocation2 + $0x1350] sm:$0xff]
    %v716 = vld [vmem:[#allocation2 + $0x1358] sm:$0xff]
    %v717 = vld [vmem:[#allocation2 + $0x1360] sm:$0xff]
    %v718 = vld [vmem:[#allocation2 + $0x1368] sm:$0xff]
    %v719 = vld [vmem:[#allocation2 + $0x1370] sm:$0xff]
    %v720 = vld [vmem:[#allocation2 + $0x1378] sm:$0xff]
    %v721 = vld [vmem:[#allocation2 + $0x1380] sm:$0xff]
    %v722 = vld [vmem:[#allocation2 + $0x1388] sm:$0xff]
    %v723 = vld [vmem:[#allocation2 + $0x1390] sm:$0xff]
    %v724 = vld [vmem:[#allocation2 + $0x1398] sm:$0xff]
    %v725 = vld [vmem:[#allocation2 + $0x13a0] sm:$0xff]
    %v726 = vld [vmem:[#allocation2 + $0x13a8] sm:$0xff]
    %v727 = vld [vmem:[#allocation2 + $0x13b0] sm:$0xff]
    %v728 = vld [vmem:[#allocation2 + $0x13b8] sm:$0xff]
    %v729 = vld [vmem:[#allocation2 + $0x13c0] sm:$0xff]
    %v730 = vld [vmem:[#allocation2 + $0x13c8] sm:$0xff]
    %v731 = vld [vmem:[#allocation2 + $0x13d0] sm:$0xff]
    %v732 = vld [vmem:[#allocation2 + $0x13d8] sm:$0xff]
    %v733 = vld [vmem:[#allocation2 + $0x13e0] sm:$0xff]
    %v734 = vld [vmem:[#allocation2 + $0x13e8] sm:$0xff]
    %v735 = vld [vmem:[#allocation2 + $0x13f0] sm:$0xff]
    %v736 = vld [vmem:[#allocation2 + $0x13f8] sm:$0xff]
    %v737 = vld [vmem:[#allocation2 + $0x1400] sm:$0xff]
    %v738 = vld [vmem:[#allocation2 + $0x1408] sm:$0xff]
    %v739 = vld [vmem:[#allocation2 + $0x1410] sm:$0xff]
    %v740 = vld [vmem:[#allocation2 + $0x1418] sm:$0xff]
    %v741 = vld [vmem:[#allocation2 + $0x1420] sm:$0xff]
    %v742 = vld [vmem:[#allocation2 + $0x1428] sm:$0xff]
    %v743 = vld [vmem:[#allocation2 + $0x1430] sm:$0xff]
    %v744 = vld [vmem:[#allocation2 + $0x1438] sm:$0xff]
    %v745 = vld [vmem:[#allocation2 + $0x1440] sm:$0xff]
    %v746 = vld [vmem:[#allocation2 + $0x1448] sm:$0xff]
    %v747 = vld [vmem:[#allocation2 + $0x1450] sm:$0xff]
    %v748 = vld [vmem:[#allocation2 + $0x1458] sm:$0xff]
    %v749 = vld [vmem:[#allocation2 + $0x1460] sm:$0xff]
    %v750 = vld [vmem:[#allocation2 + $0x1468] sm:$0xff]
    %v751 = vld [vmem:[#allocation2 + $0x1470] sm:$0xff]
    %v752 = vld [vmem:[#allocation2 + $0x1478] sm:$0xff]
    %v753 = vld [vmem:[#allocation2 + $0x1480] sm:$0xff]
    %v754 = vld [vmem:[#allocation2 + $0x1488] sm:$0xff]
    %v755 = vld [vmem:[#allocation2 + $0x1490] sm:$0xff]
    %v756 = vld [vmem:[#allocation2 + $0x1498] sm:$0xff]
    %v757 = vld [vmem:[#allocation2 + $0x14a0] sm:$0xff]
    %v758 = vld [vmem:[#allocation2 + $0x14a8] sm:$0xff]
    %v759 = vld [vmem:[#allocation2 + $0x14b0] sm:$0xff]
    %v760 = vld [vmem:[#allocation2 + $0x14b8] sm:$0xff]
    %v761 = vld [vmem:[#allocation2 + $0x14c0] sm:$0xff]
    %v762 = vld [vmem:[#allocation2 + $0x14c8] sm:$0xff]
    %v763 = vld [vmem:[#allocation2 + $0x14d0] sm:$0xff]
    %v764 = vld [vmem:[#allocation2 + $0x14d8] sm:$0xff]
    %v765 = vld [vmem:[#allocation2 + $0x14e0] sm:$0xff]
    %v766 = vld [vmem:[#allocation2 + $0x14e8] sm:$0xff]
    %v767 = vld [vmem:[#allocation2 + $0x14f0] sm:$0xff]
    %v768 = vld [vmem:[#allocation2 + $0x14f8] sm:$0xff]
    %v769 = vld [vmem:[#allocation2 + $0x1500] sm:$0xff]
    %v770 = vld [vmem:[#allocation2 + $0x1508] sm:$0xff]
    %v771 = vld [vmem:[#allocation2 + $0x1510] sm:$0xff]
    %v772 = vld [vmem:[#allocation2 + $0x1518] sm:$0xff]
    %v773 = vld [vmem:[#allocation2 + $0x1520] sm:$0xff]
    %v774 = vld [vmem:[#allocation2 + $0x1528] sm:$0xff]
    %v775 = vld [vmem:[#allocation2 + $0x1530] sm:$0xff]
    %v776 = vld [vmem:[#allocation2 + $0x1538] sm:$0xff]
    %v777 = vld [vmem:[#allocation2 + $0x1540] sm:$0xff]
    %v778 = vld [vmem:[#allocation2 + $0x1548] sm:$0xff]
    %v779 = vld [vmem:[#allocation2 + $0x1550] sm:$0xff]
    %v780 = vld [vmem:[#allocation2 + $0x1558] sm:$0xff]
    %v781 = vld [vmem:[#allocation2 + $0x1560] sm:$0xff]
    %v782 = vld [vmem:[#allocation2 + $0x1568] sm:$0xff]
    %v783 = vld [vmem:[#allocation2 + $0x1570] sm:$0xff]
    %v784 = vld [vmem:[#allocation2 + $0x1578] sm:$0xff]
    %v785 = vld [vmem:[#allocation2 + $0x1580] sm:$0xff]
    %v786 = vld [vmem:[#allocation2 + $0x1588] sm:$0xff]
    %v787 = vld [vmem:[#allocation2 + $0x1590] sm:$0xff]
    %v788 = vld [vmem:[#allocation2 + $0x1598] sm:$0xff]
    %v789 = vld [vmem:[#allocation2 + $0x15a0] sm:$0xff]
    %v790 = vld [vmem:[#allocation2 + $0x15a8] sm:$0xff]
    %v791 = vld [vmem:[#allocation2 + $0x15b0] sm:$0xff]
    %v792 = vld [vmem:[#allocation2 + $0x15b8] sm:$0xff]
    %v793 = vld [vmem:[#allocation2 + $0x15c0] sm:$0xff]
    %v794 = vld [vmem:[#allocation2 + $0x15c8] sm:$0xff]
    %v795 = vld [vmem:[#allocation2 + $0x15d0] sm:$0xff]
    %v796 = vld [vmem:[#allocation2 + $0x15d8] sm:$0xff]
    %v797 = vld [vmem:[#allocation2 + $0x15e0] sm:$0xff]
    %v798 = vld [vmem:[#allocation2 + $0x15e8] sm:$0xff]
    %v799 = vld [vmem:[#allocation2 + $0x15f0] sm:$0xff]
    %v800 = vld [vmem:[#allocation2 + $0x15f8] sm:$0xff]
    %v801 = vld [vmem:[#allocation2 + $0x1600] sm:$0xff]
    %v802 = vld [vmem:[#allocation2 + $0x1608] sm:$0xff]
    %v803 = vld [vmem:[#allocation2 + $0x1610] sm:$0xff]
    %v804 = vld [vmem:[#allocation2 + $0x1618] sm:$0xff]
    %v805 = vld [vmem:[#allocation2 + $0x1620] sm:$0xff]
    %v806 = vld [vmem:[#allocation2 + $0x1628] sm:$0xff]
    %v807 = vld [vmem:[#allocation2 + $0x1630] sm:$0xff]
    %v808 = vld [vmem:[#allocation2 + $0x1638] sm:$0xff]
    %v809 = vld [vmem:[#allocation2 + $0x1640] sm:$0xff]
    %v810 = vld [vmem:[#allocation2 + $0x1648] sm:$0xff]
    %v811 = vld [vmem:[#allocation2 + $0x1650] sm:$0xff]
    %v812 = vld [vmem:[#allocation2 + $0x1658] sm:$0xff]
    %v813 = vld [vmem:[#allocation2 + $0x1660] sm:$0xff]
    %v814 = vld [vmem:[#allocation2 + $0x1668] sm:$0xff]
    %v815 = vld [vmem:[#allocation2 + $0x1670] sm:$0xff]
    %v816 = vld [vmem:[#allocation2 + $0x1678] sm:$0xff]
    %v817 = vld [vmem:[#allocation2 + $0x1680] sm:$0xff]
    %v818 = vld [vmem:[#allocation2 + $0x1688] sm:$0xff]
    %v819 = vld [vmem:[#allocation2 + $0x1690] sm:$0xff]
    %v820 = vld [vmem:[#allocation2 + $0x1698] sm:$0xff]
    %v821 = vld [vmem:[#allocation2 + $0x16a0] sm:$0xff]
    %v822 = vld [vmem:[#allocation2 + $0x16a8] sm:$0xff]
    %v823 = vld [vmem:[#allocation2 + $0x16b0] sm:$0xff]
    %v824 = vld [vmem:[#allocation2 + $0x16b8] sm:$0xff]
    %v825 = vld [vmem:[#allocation2 + $0x16c0] sm:$0xff]
    %v826 = vld [vmem:[#allocation2 + $0x16c8] sm:$0xff]
    %v827 = vld [vmem:[#allocation2 + $0x16d0] sm:$0xff]
    %v828 = vld [vmem:[#allocation2 + $0x16d8] sm:$0xff]
    %v829 = vld [vmem:[#allocation2 + $0x16e0] sm:$0xff]
    %v830 = vld [vmem:[#allocation2 + $0x16e8] sm:$0xff]
    %v831 = vld [vmem:[#allocation2 + $0x16f0] sm:$0xff]
    %v832 = vld [vmem:[#allocation2 + $0x16f8] sm:$0xff]
    %v833 = vld [vmem:[#allocation2 + $0x1700] sm:$0xff]
    %v834 = vld [vmem:[#allocation2 + $0x1708] sm:$0xff]
    %v835 = vld [vmem:[#allocation2 + $0x1710] sm:$0xff]
    %v836 = vld [vmem:[#allocation2 + $0x1718] sm:$0xff]
    %v837 = vld [vmem:[#allocation2 + $0x1720] sm:$0xff]
    %v838 = vld [vmem:[#allocation2 + $0x1728] sm:$0xff]
    %v839 = vld [vmem:[#allocation2 + $0x1730] sm:$0xff]
    %v840 = vld [vmem:[#allocation2 + $0x1738] sm:$0xff]
    %v841 = vld [vmem:[#allocation2 + $0x1740] sm:$0xff]
    %v842 = vld [vmem:[#allocation2 + $0x1748] sm:$0xff]
    %v843 = vld [vmem:[#allocation2 + $0x1750] sm:$0xff]
    %v844 = vld [vmem:[#allocation2 + $0x1758] sm:$0xff]
    %v845 = vld [vmem:[#allocation2 + $0x1760] sm:$0xff]
    %v846 = vld [vmem:[#allocation2 + $0x1768] sm:$0xff]
    %v847 = vld [vmem:[#allocation2 + $0x1770] sm:$0xff]
    %v848 = vld [vmem:[#allocation2 + $0x1778] sm:$0xff]
    %v849 = vld [vmem:[#allocation2 + $0x1780] sm:$0xff]
    %v850 = vld [vmem:[#allocation2 + $0x1788] sm:$0xff]
    %v851 = vld [vmem:[#allocation2 + $0x1790] sm:$0xff]
    %v852 = vld [vmem:[#allocation2 + $0x1798] sm:$0xff]
    %v853 = vld [vmem:[#allocation2 + $0x17a0] sm:$0xff]
    %v854 = vld [vmem:[#allocation2 + $0x17a8] sm:$0xff]
    %v855 = vld [vmem:[#allocation2 + $0x17b0] sm:$0xff]
    %v856 = vld [vmem:[#allocation2 + $0x17b8] sm:$0xff]
    %v857 = vld [vmem:[#allocation2 + $0x17c0] sm:$0xff]
    %v858 = vld [vmem:[#allocation2 + $0x17c8] sm:$0xff]
    %v859 = vld [vmem:[#allocation2 + $0x17d0] sm:$0xff]
    %v860 = vld [vmem:[#allocation2 + $0x17d8] sm:$0xff]
    %v861 = vld [vmem:[#allocation2 + $0x17e0] sm:$0xff]
    %v862 = vld [vmem:[#allocation2 + $0x17e8] sm:$0xff]
    %v863 = vld [vmem:[#allocation2 + $0x17f0] sm:$0xff]
    %v864 = vld [vmem:[#allocation2 + $0x17f8] sm:$0xff]
    %v865 = vld [vmem:[#allocation2 + $0x1800] sm:$0xff]
    %v866 = vld [vmem:[#allocation2 + $0x1808] sm:$0xff]
    %v867 = vld [vmem:[#allocation2 + $0x1810] sm:$0xff]
    %v868 = vld [vmem:[#allocation2 + $0x1818] sm:$0xff]
    %v869 = vld [vmem:[#allocation2 + $0x1820] sm:$0xff]
    %v870 = vld [vmem:[#allocation2 + $0x1828] sm:$0xff]
    %v871 = vld [vmem:[#allocation2 + $0x1830] sm:$0xff]
    %v872 = vld [vmem:[#allocation2 + $0x1838] sm:$0xff]
    %v873 = vld [vmem:[#allocation2 + $0x1840] sm:$0xff]
    %v874 = vld [vmem:[#allocation2 + $0x1848] sm:$0xff]
    %v875 = vld [vmem:[#allocation2 + $0x1850] sm:$0xff]
    %v876 = vld [vmem:[#allocation2 + $0x1858] sm:$0xff]
    %v877 = vld [vmem:[#allocation2 + $0x1860] sm:$0xff]
    %v878 = vld [vmem:[#allocation2 + $0x1868] sm:$0xff]
    %v879 = vld [vmem:[#allocation2 + $0x1870] sm:$0xff]
    %v880 = vld [vmem:[#allocation2 + $0x1878] sm:$0xff]
    %v881 = vld [vmem:[#allocation2 + $0x1880] sm:$0xff]
    %v882 = vld [vmem:[#allocation2 + $0x1888] sm:$0xff]
    %v883 = vld [vmem:[#allocation2 + $0x1890] sm:$0xff]
    %v884 = vld [vmem:[#allocation2 + $0x1898] sm:$0xff]
    %v885 = vld [vmem:[#allocation2 + $0x18a0] sm:$0xff]
    %v886 = vld [vmem:[#allocation2 + $0x18a8] sm:$0xff]
    %v887 = vld [vmem:[#allocation2 + $0x18b0] sm:$0xff]
    %v888 = vld [vmem:[#allocation2 + $0x18b8] sm:$0xff]
    %v889 = vld [vmem:[#allocation2 + $0x18c0] sm:$0xff]
    %v890 = vld [vmem:[#allocation2 + $0x18c8] sm:$0xff]
    %v891 = vld [vmem:[#allocation2 + $0x18d0] sm:$0xff]
    %v892 = vld [vmem:[#allocation2 + $0x18d8] sm:$0xff]
    %v893 = vld [vmem:[#allocation2 + $0x18e0] sm:$0xff]
    %v894 = vld [vmem:[#allocation2 + $0x18e8] sm:$0xff]
    %v895 = vld [vmem:[#allocation2 + $0x18f0] sm:$0xff]
    %v896 = vld [vmem:[#allocation2 + $0x18f8] sm:$0xff]
    %v897 = vld [vmem:[#allocation2 + $0x1900] sm:$0xff]
    %v898 = vld [vmem:[#allocation2 + $0x1908] sm:$0xff]
    %v899 = vld [vmem:[#allocation2 + $0x1910] sm:$0xff]
    %v900 = vld [vmem:[#allocation2 + $0x1918] sm:$0xff]
    %v901 = vld [vmem:[#allocation2 + $0x1920] sm:$0xff]
    %v902 = vld [vmem:[#allocation2 + $0x1928] sm:$0xff]
    %v903 = vld [vmem:[#allocation2 + $0x1930] sm:$0xff]
    %v904 = vld [vmem:[#allocation2 + $0x1938] sm:$0xff]
    %v905 = vld [vmem:[#allocation2 + $0x1940] sm:$0xff]
    %v906 = vld [vmem:[#allocation2 + $0x1948] sm:$0xff]
    %v907 = vld [vmem:[#allocation2 + $0x1950] sm:$0xff]
    %v908 = vld [vmem:[#allocation2 + $0x1958] sm:$0xff]
    %v909 = vld [vmem:[#allocation2 + $0x1960] sm:$0xff]
    %v910 = vld [vmem:[#allocation2 + $0x1968] sm:$0xff]
    %v911 = vld [vmem:[#allocation2 + $0x1970] sm:$0xff]
    %v912 = vld [vmem:[#allocation2 + $0x1978] sm:$0xff]
    %v913 = vld [vmem:[#allocation2 + $0x1980] sm:$0xff]
    %v914 = vld [vmem:[#allocation2 + $0x1988] sm:$0xff]
    %v915 = vld [vmem:[#allocation2 + $0x1990] sm:$0xff]
    %v916 = vld [vmem:[#allocation2 + $0x1998] sm:$0xff]
    %v917 = vld [vmem:[#allocation2 + $0x19a0] sm:$0xff]
    %v918 = vld [vmem:[#allocation2 + $0x19a8] sm:$0xff]
    %v919 = vld [vmem:[#allocation2 + $0x19b0] sm:$0xff]
    %v920 = vld [vmem:[#allocation2 + $0x19b8] sm:$0xff]
    %v921 = vld [vmem:[#allocation2 + $0x19c0] sm:$0xff]
    %v922 = vld [vmem:[#allocation2 + $0x19c8] sm:$0xff]
    %v923 = vld [vmem:[#allocation2 + $0x19d0] sm:$0xff]
    %v924 = vld [vmem:[#allocation2 + $0x19d8] sm:$0xff]
    %v925 = vld [vmem:[#allocation2 + $0x19e0] sm:$0xff]
    %v926 = vld [vmem:[#allocation2 + $0x19e8] sm:$0xff]
    %v927 = vld [vmem:[#allocation2 + $0x19f0] sm:$0xff]
    %v928 = vld [vmem:[#allocation2 + $0x19f8] sm:$0xff]
    %v929 = vld [vmem:[#allocation2 + $0x1a00] sm:$0xff]
    %v930 = vld [vmem:[#allocation2 + $0x1a08] sm:$0xff]
    %v931 = vld [vmem:[#allocation2 + $0x1a10] sm:$0xff]
    %v932 = vld [vmem:[#allocation2 + $0x1a18] sm:$0xff]
    %v933 = vld [vmem:[#allocation2 + $0x1a20] sm:$0xff]
    %v934 = vld [vmem:[#allocation2 + $0x1a28] sm:$0xff]
    %v935 = vld [vmem:[#allocation2 + $0x1a30] sm:$0xff]
    %v936 = vld [vmem:[#allocation2 + $0x1a38] sm:$0xff]
    %v937 = vld [vmem:[#allocation2 + $0x1a40] sm:$0xff]
    %v938 = vld [vmem:[#allocation2 + $0x1a48] sm:$0xff]
    %v939 = vld [vmem:[#allocation2 + $0x1a50] sm:$0xff]
    %v940 = vld [vmem:[#allocation2 + $0x1a58] sm:$0xff]
    %v941 = vld [vmem:[#allocation2 + $0x1a60] sm:$0xff]
    %v942 = vld [vmem:[#allocation2 + $0x1a68] sm:$0xff]
    %v943 = vld [vmem:[#allocation2 + $0x1a70] sm:$0xff]
    %v944 = vld [vmem:[#allocation2 + $0x1a78] sm:$0xff]
    %v945 = vld [vmem:[#allocation2 + $0x1a80] sm:$0xff]
    %v946 = vld [vmem:[#allocation2 + $0x1a88] sm:$0xff]
    %v947 = vld [vmem:[#allocation2 + $0x1a90] sm:$0xff]
    %v948 = vld [vmem:[#allocation2 + $0x1a98] sm:$0xff]
    %v949 = vld [vmem:[#allocation2 + $0x1aa0] sm:$0xff]
    %v950 = vld [vmem:[#allocation2 + $0x1aa8] sm:$0xff]
    %v951 = vld [vmem:[#allocation2 + $0x1ab0] sm:$0xff]
    %v952 = vld [vmem:[#allocation2 + $0x1ab8] sm:$0xff]
    %v953 = vld [vmem:[#allocation2 + $0x1ac0] sm:$0xff]
    %v954 = vld [vmem:[#allocation2 + $0x1ac8] sm:$0xff]
    %v955 = vld [vmem:[#allocation2 + $0x1ad0] sm:$0xff]
    %v956 = vld [vmem:[#allocation2 + $0x1ad8] sm:$0xff]
    %v957 = vld [vmem:[#allocation2 + $0x1ae0] sm:$0xff]
    %v958 = vld [vmem:[#allocation2 + $0x1ae8] sm:$0xff]
    %v959 = vld [vmem:[#allocation2 + $0x1af0] sm:$0xff]
    %v960 = vld [vmem:[#allocation2 + $0x1af8] sm:$0xff]
    %v961 = vld [vmem:[#allocation2 + $0x1b00] sm:$0xff]
    %v962 = vld [vmem:[#allocation2 + $0x1b08] sm:$0xff]
    %v963 = vld [vmem:[#allocation2 + $0x1b10] sm:$0xff]
    %v964 = vld [vmem:[#allocation2 + $0x1b18] sm:$0xff]
    %v965 = vld [vmem:[#allocation2 + $0x1b20] sm:$0xff]
    %v966 = vld [vmem:[#allocation2 + $0x1b28] sm:$0xff]
    %v967 = vld [vmem:[#allocation2 + $0x1b30] sm:$0xff]
    %v968 = vld [vmem:[#allocation2 + $0x1b38] sm:$0xff]
    %v969 = vld [vmem:[#allocation2 + $0x1b40] sm:$0xff]
    %v970 = vld [vmem:[#allocation2 + $0x1b48] sm:$0xff]
    %v971 = vld [vmem:[#allocation2 + $0x1b50] sm:$0xff]
    %v972 = vld [vmem:[#allocation2 + $0x1b58] sm:$0xff]
    %v973 = vld [vmem:[#allocation2 + $0x1b60] sm:$0xff]
    %v974 = vld [vmem:[#allocation2 + $0x1b68] sm:$0xff]
    %v975 = vld [vmem:[#allocation2 + $0x1b70] sm:$0xff]
    %v976 = vld [vmem:[#allocation2 + $0x1b78] sm:$0xff]
    %v977 = vld [vmem:[#allocation2 + $0x1b80] sm:$0xff]
    %v978 = vld [vmem:[#allocation2 + $0x1b88] sm:$0xff]
    %v979 = vld [vmem:[#allocation2 + $0x1b90] sm:$0xff]
    %v980 = vld [vmem:[#allocation2 + $0x1b98] sm:$0xff]
    %v981 = vld [vmem:[#allocation2 + $0x1ba0] sm:$0xff]
    %v982 = vld [vmem:[#allocation2 + $0x1ba8] sm:$0xff]
    %v983 = vld [vmem:[#allocation2 + $0x1bb0] sm:$0xff]
    %v984 = vld [vmem:[#allocation2 + $0x1bb8] sm:$0xff]
    %v985 = vld [vmem:[#allocation2 + $0x1bc0] sm:$0xff]
    %v986 = vld [vmem:[#allocation2 + $0x1bc8] sm:$0xff]
    %v987 = vld [vmem:[#allocation2 + $0x1bd0] sm:$0xff]
    %v988 = vld [vmem:[#allocation2 + $0x1bd8] sm:$0xff]
    %v989 = vld [vmem:[#allocation2 + $0x1be0] sm:$0xff]
    %v990 = vld [vmem:[#allocation2 + $0x1be8] sm:$0xff]
    %v991 = vld [vmem:[#allocation2 + $0x1bf0] sm:$0xff]
    %v992 = vld [vmem:[#allocation2 + $0x1bf8] sm:$0xff]
    %v993 = vld [vmem:[#allocation2 + $0x1c00] sm:$0xff]
    %v994 = vld [vmem:[#allocation2 + $0x1c08] sm:$0xff]
    %v995 = vld [vmem:[#allocation2 + $0x1c10] sm:$0xff]
    %v996 = vld [vmem:[#allocation2 + $0x1c18] sm:$0xff]
    %v997 = vld [vmem:[#allocation2 + $0x1c20] sm:$0xff]
    %v998 = vld [vmem:[#allocation2 + $0x1c28] sm:$0xff]
    %v999 = vld [vmem:[#allocation2 + $0x1c30] sm:$0xff]
    %v1000 = vld [vmem:[#allocation2 + $0x1c38] sm:$0xff]
    %v1001 = vld [vmem:[#allocation2 + $0x1c40] sm:$0xff]
    %v1002 = vld [vmem:[#allocation2 + $0x1c48] sm:$0xff]
    %v1003 = vld [vmem:[#allocation2 + $0x1c50] sm:$0xff]
    %v1004 = vld [vmem:[#allocation2 + $0x1c58] sm:$0xff]
    %v1005 = vld [vmem:[#allocation2 + $0x1c60] sm:$0xff]
    %v1006 = vld [vmem:[#allocation2 + $0x1c68] sm:$0xff]
    %v1007 = vld [vmem:[#allocation2 + $0x1c70] sm:$0xff]
    %v1008 = vld [vmem:[#allocation2 + $0x1c78] sm:$0xff]
    %v1009 = vld [vmem:[#allocation2 + $0x1c80] sm:$0xff]
    %v1010 = vld [vmem:[#allocation2 + $0x1c88] sm:$0xff]
    %v1011 = vld [vmem:[#allocation2 + $0x1c90] sm:$0xff]
    %v1012 = vld [vmem:[#allocation2 + $0x1c98] sm:$0xff]
    %v1013 = vld [vmem:[#allocation2 + $0x1ca0] sm:$0xff]
    %v1014 = vld [vmem:[#allocation2 + $0x1ca8] sm:$0xff]
    %v1015 = vld [vmem:[#allocation2 + $0x1cb0] sm:$0xff]
    %v1016 = vld [vmem:[#allocation2 + $0x1cb8] sm:$0xff]
    %v1017 = vld [vmem:[#allocation2 + $0x1cc0] sm:$0xff]
    %v1018 = vld [vmem:[#allocation2 + $0x1cc8] sm:$0xff]
    %v1019 = vld [vmem:[#allocation2 + $0x1cd0] sm:$0xff]
    %v1020 = vld [vmem:[#allocation2 + $0x1cd8] sm:$0xff]
    %v1021 = vld [vmem:[#allocation2 + $0x1ce0] sm:$0xff]
    %v1022 = vld [vmem:[#allocation2 + $0x1ce8] sm:$0xff]
    %v1023 = vld [vmem:[#allocation2 + $0x1cf0] sm:$0xff]
    %v1024 = vld [vmem:[#allocation2 + $0x1cf8] sm:$0xff]
    %v1025 = vld [vmem:[#allocation2 + $0x1d00] sm:$0xff]
    %v1026 = vld [vmem:[#allocation2 + $0x1d08] sm:$0xff]
    %v1027 = vld [vmem:[#allocation2 + $0x1d10] sm:$0xff]
    %v1028 = vld [vmem:[#allocation2 + $0x1d18] sm:$0xff]
    %v1029 = vld [vmem:[#allocation2 + $0x1d20] sm:$0xff]
    %v1030 = vld [vmem:[#allocation2 + $0x1d28] sm:$0xff]
    %v1031 = vld [vmem:[#allocation2 + $0x1d30] sm:$0xff]
    %v1032 = vld [vmem:[#allocation2 + $0x1d38] sm:$0xff]
    %v1033 = vld [vmem:[#allocation2 + $0x1d40] sm:$0xff]
    %v1034 = vld [vmem:[#allocation2 + $0x1d48] sm:$0xff]
    %v1035 = vld [vmem:[#allocation2 + $0x1d50] sm:$0xff]
    %v1036 = vld [vmem:[#allocation2 + $0x1d58] sm:$0xff]
    %v1037 = vld [vmem:[#allocation2 + $0x1d60] sm:$0xff]
    %v1038 = vld [vmem:[#allocation2 + $0x1d68] sm:$0xff]
    %v1039 = vld [vmem:[#allocation2 + $0x1d70] sm:$0xff]
    %v1040 = vld [vmem:[#allocation2 + $0x1d78] sm:$0xff]
    %v1041 = vld [vmem:[#allocation2 + $0x1d80] sm:$0xff]
    %v1042 = vld [vmem:[#allocation2 + $0x1d88] sm:$0xff]
    %v1043 = vld [vmem:[#allocation2 + $0x1d90] sm:$0xff]
    %v1044 = vld [vmem:[#allocation2 + $0x1d98] sm:$0xff]
    %v1045 = vld [vmem:[#allocation2 + $0x1da0] sm:$0xff]
    %v1046 = vld [vmem:[#allocation2 + $0x1da8] sm:$0xff]
    %v1047 = vld [vmem:[#allocation2 + $0x1db0] sm:$0xff]
    %v1048 = vld [vmem:[#allocation2 + $0x1db8] sm:$0xff]
    %v1049 = vld [vmem:[#allocation2 + $0x1dc0] sm:$0xff]
    %v1050 = vld [vmem:[#allocation2 + $0x1dc8] sm:$0xff]
    %v1051 = vld [vmem:[#allocation2 + $0x1dd0] sm:$0xff]
    %v1052 = vld [vmem:[#allocation2 + $0x1dd8] sm:$0xff]
    %v1053 = vld [vmem:[#allocation2 + $0x1de0] sm:$0xff]
    %v1054 = vld [vmem:[#allocation2 + $0x1de8] sm:$0xff]
    %v1055 = vld [vmem:[#allocation2 + $0x1df0] sm:$0xff]
    %v1056 = vld [vmem:[#allocation2 + $0x1df8] sm:$0xff]
    %v1057 = vld [vmem:[#allocation2 + $0x1e00] sm:$0xff]
    %v1058 = vld [vmem:[#allocation2 + $0x1e08] sm:$0xff]
    %v1059 = vld [vmem:[#allocation2 + $0x1e10] sm:$0xff]
    %v1060 = vld [vmem:[#allocation2 + $0x1e18] sm:$0xff]
    %v1061 = vld [vmem:[#allocation2 + $0x1e20] sm:$0xff]
    %v1062 = vld [vmem:[#allocation2 + $0x1e28] sm:$0xff]
    %v1063 = vld [vmem:[#allocation2 + $0x1e30] sm:$0xff]
    %v1064 = vld [vmem:[#allocation2 + $0x1e38] sm:$0xff]
    %v1065 = vld [vmem:[#allocation2 + $0x1e40] sm:$0xff]
    %v1066 = vld [vmem:[#allocation2 + $0x1e48] sm:$0xff]
    %v1067 = vld [vmem:[#allocation2 + $0x1e50] sm:$0xff]
    %v1068 = vld [vmem:[#allocation2 + $0x1e58] sm:$0xff]
    %v1069 = vld [vmem:[#allocation2 + $0x1e60] sm:$0xff]
    %v1070 = vld [vmem:[#allocation2 + $0x1e68] sm:$0xff]
    %v1071 = vld [vmem:[#allocation2 + $0x1e70] sm:$0xff]
    %v1072 = vld [vmem:[#allocation2 + $0x1e78] sm:$0xff]
    %v1073 = vld [vmem:[#allocation2 + $0x1e80] sm:$0xff]
    %v1074 = vld [vmem:[#allocation2 + $0x1e88] sm:$0xff]
    %v1075 = vld [vmem:[#allocation2 + $0x1e90] sm:$0xff]
    %v1076 = vld [vmem:[#allocation2 + $0x1e98] sm:$0xff]
    %v1077 = vld [vmem:[#allocation2 + $0x1ea0] sm:$0xff]
    %v1078 = vld [vmem:[#allocation2 + $0x1ea8] sm:$0xff]
    %v1079 = vld [vmem:[#allocation2 + $0x1eb0] sm:$0xff]
    %v1080 = vld [vmem:[#allocation2 + $0x1eb8] sm:$0xff]
    %v1081 = vld [vmem:[#allocation2 + $0x1ec0] sm:$0xff]
    %v1082 = vld [vmem:[#allocation2 + $0x1ec8] sm:$0xff]
    %v1083 = vld [vmem:[#allocation2 + $0x1ed0] sm:$0xff]
    %v1084 = vld [vmem:[#allocation2 + $0x1ed8] sm:$0xff]
    %v1085 = vld [vmem:[#allocation2 + $0x1ee0] sm:$0xff]
    %v1086 = vld [vmem:[#allocation2 + $0x1ee8] sm:$0xff]
    %v1087 = vld [vmem:[#allocation2 + $0x1ef0] sm:$0xff]
    %v1088 = vld [vmem:[#allocation2 + $0x1ef8] sm:$0xff]
    %v1089 = vld [vmem:[#allocation2 + $0x1f00] sm:$0xff]
    %v1090 = vld [vmem:[#allocation2 + $0x1f08] sm:$0xff]
    %v1091 = vld [vmem:[#allocation2 + $0x1f10] sm:$0xff]
    %v1092 = vld [vmem:[#allocation2 + $0x1f18] sm:$0xff]
    %v1093 = vld [vmem:[#allocation2 + $0x1f20] sm:$0xff]
    %v1094 = vld [vmem:[#allocation2 + $0x1f28] sm:$0xff]
    %v1095 = vld [vmem:[#allocation2 + $0x1f30] sm:$0xff]
    %v1096 = vld [vmem:[#allocation2 + $0x1f38] sm:$0xff]
    %v1097 = vld [vmem:[#allocation2 + $0x1f40] sm:$0xff]
    %v1098 = vld [vmem:[#allocation2 + $0x1f48] sm:$0xff]
    %v1099 = vld [vmem:[#allocation2 + $0x1f50] sm:$0xff]
    %v1100 = vld [vmem:[#allocation2 + $0x1f58] sm:$0xff]
    %v1101 = vld [vmem:[#allocation2 + $0x1f60] sm:$0xff]
    %v1102 = vld [vmem:[#allocation2 + $0x1f68] sm:$0xff]
    %v1103 = vld [vmem:[#allocation2 + $0x1f70] sm:$0xff]
    %v1104 = vld [vmem:[#allocation2 + $0x1f78] sm:$0xff]
    %v1105 = vld [vmem:[#allocation2 + $0x1f80] sm:$0xff]
    %v1106 = vld [vmem:[#allocation2 + $0x1f88] sm:$0xff]
    %v1107 = vld [vmem:[#allocation2 + $0x1f90] sm:$0xff]
    %v1108 = vld [vmem:[#allocation2 + $0x1f98] sm:$0xff]
    %v1109 = vld [vmem:[#allocation2 + $0x1fa0] sm:$0xff]
    %v1110 = vld [vmem:[#allocation2 + $0x1fa8] sm:$0xff]
    %v1111 = vld [vmem:[#allocation2 + $0x1fb0] sm:$0xff]
    %v1112 = vld [vmem:[#allocation2 + $0x1fb8] sm:$0xff]
    %v1113 = vld [vmem:[#allocation2 + $0x1fc0] sm:$0xff]
    %v1114 = vld [vmem:[#allocation2 + $0x1fc8] sm:$0xff]
    %v1115 = vld [vmem:[#allocation2 + $0x1fd0] sm:$0xff]
    %v1116 = vld [vmem:[#allocation2 + $0x1fd8] sm:$0xff]
    %v1117 = vld [vmem:[#allocation2 + $0x1fe0] sm:$0xff]
    %v1118 = vld [vmem:[#allocation2 + $0x1fe8] sm:$0xff]
    %v1119 = vld [vmem:[#allocation2 + $0x1ff0] sm:$0xff]
    %v1120 = vld [vmem:[#allocation2 + $0x1ff8] sm:$0xff]
    %v1121 = vld [vmem:[#allocation5] sm:$0x3]
    %v1123 = vlaneseq
    %v1124 = vshrl.u32 %v1123, 7
    %v1125 = vsub.s32 0, %v1124
    %v1126 = vrot.slane %v1121, %v1125
    %v1127 = vlaneseq
    %v1128 = vshrl.u32 %v1127, 7
    %v1129 = vsub.s32 1, %v1128
    %v1130 = vrot.slane %v1121, %v1129
    %v1141 = vcombine.high %v89, %v89
    %v1143 = vunpack.c.l.s4 1983009808
    %v1144 = vunpack.c.0.s8 %v1143
    %v1145 = vlaneseq
    %v1146 = vshrl.u32 %v1145, 7
    %v1147 = vsub.s32 %v1144, %v1146
    %v1148 = vrot.slane %v89, %v1147
    %v1150 = vunpack.c.l.s4 1983009808
    %v1151 = vunpack.c.0.s8 %v1150
    %v1152 = vlaneseq
    %v1153 = vshrl.u32 %v1152, 7
    %v1154 = vsub.s32 %v1151, %v1153
    %v1155 = vrot.slane %v1141, %v1154
    %v1156 = vcombine.high %v1148, %v1148
    %v1157 = vcombine.high %v1155, %v1155
    %v1158 = vcombine.high %v90, %v90
    %v1160 = vunpack.c.l.s4 1983009808
    %v1161 = vunpack.c.0.s8 %v1160
    %v1162 = vlaneseq
    %v1163 = vshrl.u32 %v1162, 7
    %v1164 = vsub.s32 %v1161, %v1163
    %v1165 = vrot.slane %v90, %v1164
    %v1167 = vunpack.c.l.s4 1983009808
    %v1168 = vunpack.c.0.s8 %v1167
    %v1169 = vlaneseq
    %v1170 = vshrl.u32 %v1169, 7
    %v1171 = vsub.s32 %v1168, %v1170
    %v1172 = vrot.slane %v1158, %v1171
    %v1173 = vcombine.high %v1165, %v1165
    %v1174 = vcombine.high %v1172, %v1172
    %v1175 = vcombine.high %v91, %v91
    %v1177 = vunpack.c.l.s4 1983009808
    %v1178 = vunpack.c.0.s8 %v1177
    %v1179 = vlaneseq
    %v1180 = vshrl.u32 %v1179, 7
    %v1181 = vsub.s32 %v1178, %v1180
    %v1182 = vrot.slane %v91, %v1181
    %v1184 = vunpack.c.l.s4 1983009808
    %v1185 = vunpack.c.0.s8 %v1184
    %v1186 = vlaneseq
    %v1187 = vshrl.u32 %v1186, 7
    %v1188 = vsub.s32 %v1185, %v1187
    %v1189 = vrot.slane %v1175, %v1188
    %v1190 = vcombine.high %v1182, %v1182
    %v1191 = vcombine.high %v1189, %v1189
    %v1192 = vcombine.high %v92, %v92
    %v1194 = vunpack.c.l.s4 1983009808
    %v1195 = vunpack.c.0.s8 %v1194
    %v1196 = vlaneseq
    %v1197 = vshrl.u32 %v1196, 7
    %v1198 = vsub.s32 %v1195, %v1197
    %v1199 = vrot.slane %v92, %v1198
    %v1201 = vunpack.c.l.s4 1983009808
    %v1202 = vunpack.c.0.s8 %v1201
    %v1203 = vlaneseq
    %v1204 = vshrl.u32 %v1203, 7
    %v1205 = vsub.s32 %v1202, %v1204
    %v1206 = vrot.slane %v1192, %v1205
    %v1207 = vcombine.high %v1199, %v1199
    %v1208 = vcombine.high %v1206, %v1206
    %v1209 = vcombine.high %v93, %v93
    %v1211 = vunpack.c.l.s4 1983009808
    %v1212 = vunpack.c.0.s8 %v1211
    %v1213 = vlaneseq
    %v1214 = vshrl.u32 %v1213, 7
    %v1215 = vsub.s32 %v1212, %v1214
    %v1216 = vrot.slane %v93, %v1215
    %v1218 = vunpack.c.l.s4 1983009808
    %v1219 = vunpack.c.0.s8 %v1218
    %v1220 = vlaneseq
    %v1221 = vshrl.u32 %v1220, 7
    %v1222 = vsub.s32 %v1219, %v1221
    %v1223 = vrot.slane %v1209, %v1222
    %v1224 = vcombine.high %v1216, %v1216
    %v1225 = vcombine.high %v1223, %v1223
    %v1226 = vcombine.high %v94, %v94
    %v1228 = vunpack.c.l.s4 1983009808
    %v1229 = vunpack.c.0.s8 %v1228
    %v1230 = vlaneseq
    %v1231 = vshrl.u32 %v1230, 7
    %v1232 = vsub.s32 %v1229, %v1231
    %v1233 = vrot.slane %v94, %v1232
    %v1235 = vunpack.c.l.s4 1983009808
    %v1236 = vunpack.c.0.s8 %v1235
    %v1237 = vlaneseq
    %v1238 = vshrl.u32 %v1237, 7
    %v1239 = vsub.s32 %v1236, %v1238
    %v1240 = vrot.slane %v1226, %v1239
    %v1241 = vcombine.high %v1233, %v1233
    %v1242 = vcombine.high %v1240, %v1240
    %v1243 = vcombine.high %v95, %v95
    %v1245 = vunpack.c.l.s4 1983009808
    %v1246 = vunpack.c.0.s8 %v1245
    %v1247 = vlaneseq
    %v1248 = vshrl.u32 %v1247, 7
    %v1249 = vsub.s32 %v1246, %v1248
    %v1250 = vrot.slane %v95, %v1249
    %v1252 = vunpack.c.l.s4 1983009808
    %v1253 = vunpack.c.0.s8 %v1252
    %v1254 = vlaneseq
    %v1255 = vshrl.u32 %v1254, 7
    %v1256 = vsub.s32 %v1253, %v1255
    %v1257 = vrot.slane %v1243, %v1256
    %v1258 = vcombine.high %v1250, %v1250
    %v1259 = vcombine.high %v1257, %v1257
    %v1260 = vcombine.high %v96, %v96
    %v1262 = vunpack.c.l.s4 1983009808
    %v1263 = vunpack.c.0.s8 %v1262
    %v1264 = vlaneseq
    %v1265 = vshrl.u32 %v1264, 7
    %v1266 = vsub.s32 %v1263, %v1265
    %v1267 = vrot.slane %v96, %v1266
    %v1269 = vunpack.c.l.s4 1983009808
    %v1270 = vunpack.c.0.s8 %v1269
    %v1271 = vlaneseq
    %v1272 = vshrl.u32 %v1271, 7
    %v1273 = vsub.s32 %v1270, %v1272
    %v1274 = vrot.slane %v1260, %v1273
    %v1275 = vcombine.high %v1267, %v1267
    %v1276 = vcombine.high %v1274, %v1274
    %1309 = vmatprep.subr.mxu0 %v98
    %1310 = vmatpush1.msra.mxu0 %v97
    %1311 = vmatprep.subr.mxu0 %v100
    %1312 = vmatpush1.msra.mxu0 %v99
    %1313 = vmatprep.subr.mxu0 %v102
    %1314 = vmatpush1.msra.mxu0 %v101
    %1315 = vmatprep.subr.mxu0 %v104
    %1316 = vmatpush1.msra.mxu0 %v103
    %1317 = vmatprep.subr.mxu0 %v106
    %1318 = vmatpush1.msra.mxu0 %v105
    %1319 = vmatprep.subr.mxu0 %v108
    %1320 = vmatpush1.msra.mxu0 %v107
    %1321 = vmatprep.subr.mxu0 %v110
    %1322 = vmatpush1.msra.mxu0 %v109
    %1323 = vmatprep.subr.mxu0 %v112
    %1324 = vmatpush1.msra.mxu0 %v111
    %1325 = vmatprep.subr.mxu0 %v114
    %1326 = vmatpush1.msra.mxu0 %v113
    %1327 = vmatprep.subr.mxu0 %v116
    %1328 = vmatpush1.msra.mxu0 %v115
    %1329 = vmatprep.subr.mxu0 %v118
    %1330 = vmatpush1.msra.mxu0 %v117
    %1331 = vmatprep.subr.mxu0 %v120
    %1332 = vmatpush1.msra.mxu0 %v119
    %1333 = vmatprep.subr.mxu0 %v122
    %1334 = vmatpush1.msra.mxu0 %v121
    %1335 = vmatprep.subr.mxu0 %v124
    %1336 = vmatpush1.msra.mxu0 %v123
    %1337 = vmatprep.subr.mxu0 %v126
    %1338 = vmatpush1.msra.mxu0 %v125
    %1339 = vmatprep.subr.mxu0 %v128
    %1340 = vmatpush1.msra.mxu0 %v127
    %1341 = vmatprep.subr.mxu0 %v130
    %1342 = vmatpush1.msra.mxu0 %v129
    %1343 = vmatprep.subr.mxu0 %v132
    %1344 = vmatpush1.msra.mxu0 %v131
    %1345 = vmatprep.subr.mxu0 %v134
    %1346 = vmatpush1.msra.mxu0 %v133
    %1347 = vmatprep.subr.mxu0 %v136
    %1348 = vmatpush1.msra.mxu0 %v135
    %1349 = vmatprep.subr.mxu0 %v138
    %1350 = vmatpush1.msra.mxu0 %v137
    %1351 = vmatprep.subr.mxu0 %v140
    %1352 = vmatpush1.msra.mxu0 %v139
    %1353 = vmatprep.subr.mxu0 %v142
    %1354 = vmatpush1.msra.mxu0 %v141
    %1355 = vmatprep.subr.mxu0 %v144
    %1356 = vmatpush1.msra.mxu0 %v143
    %1357 = vmatprep.subr.mxu0 %v146
    %1358 = vmatpush1.msra.mxu0 %v145
    %1359 = vmatprep.subr.mxu0 %v148
    %1360 = vmatpush1.msra.mxu0 %v147
    %1361 = vmatprep.subr.mxu0 %v150
    %1362 = vmatpush1.msra.mxu0 %v149
    %1363 = vmatprep.subr.mxu0 %v152
    %1364 = vmatpush1.msra.mxu0 %v151
    %1365 = vmatprep.subr.mxu0 %v154
    %1366 = vmatpush1.msra.mxu0 %v153
    %1367 = vmatprep.subr.mxu0 %v156
    %1368 = vmatpush1.msra.mxu0 %v155
    %1369 = vmatprep.subr.mxu0 %v158
    %1370 = vmatpush1.msra.mxu0 %v157
    %1371 = vmatprep.subr.mxu0 %v160
    %1372 = vmatpush1.msra.mxu0 %v159
    %1373 = vmatprep.mubr.f32.mxu0 %v1156
    %1374 = vmatmul.mubr.f32.gmra.mrb[0].mxu0 %v1148
    %v1375 = vpop.f32.mrb[0].mxu0
    %v1376 = vadd.f32 %v1126, %v1375
    %v1377 = vpop.f32.mrb[0].mxu0
    %v1378 = vadd.f32 %v1130, %v1377
    %1379 = vdwg.mxu0
    %1380 = vmatprep.subr.mxu0 %v162
    %1381 = vmatpush1.msra.mxu0 %v161
    %1382 = vmatprep.subr.mxu0 %v164
    %1383 = vmatpush1.msra.mxu0 %v163
    %1384 = vmatprep.subr.mxu0 %v166
    %1385 = vmatpush1.msra.mxu0 %v165
    %1386 = vmatprep.subr.mxu0 %v168
    %1387 = vmatpush1.msra.mxu0 %v167
    %1388 = vmatprep.subr.mxu0 %v170
    %1389 = vmatpush1.msra.mxu0 %v169
    %1390 = vmatprep.subr.mxu0 %v172
    %1391 = vmatpush1.msra.mxu0 %v171
    %1392 = vmatprep.subr.mxu0 %v174
    %1393 = vmatpush1.msra.mxu0 %v173
    %1394 = vmatprep.subr.mxu0 %v176
    %1395 = vmatpush1.msra.mxu0 %v175
    %1396 = vmatprep.subr.mxu0 %v178
    %1397 = vmatpush1.msra.mxu0 %v177
    %1398 = vmatprep.subr.mxu0 %v180
    %1399 = vmatpush1.msra.mxu0 %v179
    %1400 = vmatprep.subr.mxu0 %v182
    %1401 = vmatpush1.msra.mxu0 %v181
    %1402 = vmatprep.subr.mxu0 %v184
    %1403 = vmatpush1.msra.mxu0 %v183
    %1404 = vmatprep.subr.mxu0 %v186
    %1405 = vmatpush1.msra.mxu0 %v185
    %1406 = vmatprep.subr.mxu0 %v188
    %1407 = vmatpush1.msra.mxu0 %v187
    %1408 = vmatprep.subr.mxu0 %v190
    %1409 = vmatpush1.msra.mxu0 %v189
    %1410 = vmatprep.subr.mxu0 %v192
    %1411 = vmatpush1.msra.mxu0 %v191
    %1412 = vmatprep.subr.mxu0 %v194
    %1413 = vmatpush1.msra.mxu0 %v193
    %1414 = vmatprep.subr.mxu0 %v196
    %1415 = vmatpush1.msra.mxu0 %v195
    %1416 = vmatprep.subr.mxu0 %v198
    %1417 = vmatpush1.msra.mxu0 %v197
    %1418 = vmatprep.subr.mxu0 %v200
    %1419 = vmatpush1.msra.mxu0 %v199
    %1420 = vmatprep.subr.mxu0 %v202
    %1421 = vmatpush1.msra.mxu0 %v201
    %1422 = vmatprep.subr.mxu0 %v204
    %1423 = vmatpush1.msra.mxu0 %v203
    %1424 = vmatprep.subr.mxu0 %v206
    %1425 = vmatpush1.msra.mxu0 %v205
    %1426 = vmatprep.subr.mxu0 %v208
    %1427 = vmatpush1.msra.mxu0 %v207
    %1428 = vmatprep.subr.mxu0 %v210
    %1429 = vmatpush1.msra.mxu0 %v209
    %1430 = vmatprep.subr.mxu0 %v212
    %1431 = vmatpush1.msra.mxu0 %v211
    %1432 = vmatprep.subr.mxu0 %v214
    %1433 = vmatpush1.msra.mxu0 %v213
    %1434 = vmatprep.subr.mxu0 %v216
    %1435 = vmatpush1.msra.mxu0 %v215
    %1436 = vmatprep.subr.mxu0 %v218
    %1437 = vmatpush1.msra.mxu0 %v217
    %1438 = vmatprep.subr.mxu0 %v220
    %1439 = vmatpush1.msra.mxu0 %v219
    %1440 = vmatprep.subr.mxu0 %v222
    %1441 = vmatpush1.msra.mxu0 %v221
    %1442 = vmatprep.subr.mxu0 %v224
    %1443 = vmatpush1.msra.mxu0 %v223
    %1444 = vmatprep.mubr.f32.mxu0 %v1157
    %1445 = vmatmul.mubr.f32.gmra.mrb[0].mxu0 %v1155
    %v1446 = vpop.f32.mrb[0].mxu0
    %v1447 = vadd.f32 %v1376, %v1446
    %v1448 = vpop.f32.mrb[0].mxu0
    %v1449 = vadd.f32 %v1378, %v1448
    %1450 = vdwg.mxu0
    %1451 = vmatprep.subr.mxu0 %v226
    %1452 = vmatpush1.msra.mxu0 %v225
    %1453 = vmatprep.subr.mxu0 %v228
    %1454 = vmatpush1.msra.mxu0 %v227
    %1455 = vmatprep.subr.mxu0 %v230
    %1456 = vmatpush1.msra.mxu0 %v229
    %1457 = vmatprep.subr.mxu0 %v232
    %1458 = vmatpush1.msra.mxu0 %v231
    %1459 = vmatprep.subr.mxu0 %v234
    %1460 = vmatpush1.msra.mxu0 %v233
    %1461 = vmatprep.subr.mxu0 %v236
    %1462 = vmatpush1.msra.mxu0 %v235
    %1463 = vmatprep.subr.mxu0 %v238
    %1464 = vmatpush1.msra.mxu0 %v237
    %1465 = vmatprep.subr.mxu0 %v240
    %1466 = vmatpush1.msra.mxu0 %v239
    %1467 = vmatprep.subr.mxu0 %v242
    %1468 = vmatpush1.msra.mxu0 %v241
    %1469 = vmatprep.subr.mxu0 %v244
    %1470 = vmatpush1.msra.mxu0 %v243
    %1471 = vmatprep.subr.mxu0 %v246
    %1472 = vmatpush1.msra.mxu0 %v245
    %1473 = vmatprep.subr.mxu0 %v248
    %1474 = vmatpush1.msra.mxu0 %v247
    %1475 = vmatprep.subr.mxu0 %v250
    %1476 = vmatpush1.msra.mxu0 %v249
    %1477 = vmatprep.subr.mxu0 %v252
    %1478 = vmatpush1.msra.mxu0 %v251
    %1479 = vmatprep.subr.mxu0 %v254
    %1480 = vmatpush1.msra.mxu0 %v253
    %1481 = vmatprep.subr.mxu0 %v256
    %1482 = vmatpush1.msra.mxu0 %v255
    %1483 = vmatprep.subr.mxu0 %v258
    %1484 = vmatpush1.msra.mxu0 %v257
    %1485 = vmatprep.subr.mxu0 %v260
    %1486 = vmatpush1.msra.mxu0 %v259
    %1487 = vmatprep.subr.mxu0 %v262
    %1488 = vmatpush1.msra.mxu0 %v261
    %1489 = vmatprep.subr.mxu0 %v264
    %1490 = vmatpush1.msra.mxu0 %v263
    %1491 = vmatprep.subr.mxu0 %v266
    %1492 = vmatpush1.msra.mxu0 %v265
    %1493 = vmatprep.subr.mxu0 %v268
    %1494 = vmatpush1.msra.mxu0 %v267
    %1495 = vmatprep.subr.mxu0 %v270
    %1496 = vmatpush1.msra.mxu0 %v269
    %1497 = vmatprep.subr.mxu0 %v272
    %1498 = vmatpush1.msra.mxu0 %v271
    %1499 = vmatprep.subr.mxu0 %v274
    %1500 = vmatpush1.msra.mxu0 %v273
    %1501 = vmatprep.subr.mxu0 %v276
    %1502 = vmatpush1.msra.mxu0 %v275
    %1503 = vmatprep.subr.mxu0 %v278
    %1504 = vmatpush1.msra.mxu0 %v277
    %1505 = vmatprep.subr.mxu0 %v280
    %1506 = vmatpush1.msra.mxu0 %v279
    %1507 = vmatprep.subr.mxu0 %v282
    %1508 = vmatpush1.msra.mxu0 %v281
    %1509 = vmatprep.subr.mxu0 %v284
    %1510 = vmatpush1.msra.mxu0 %v283
    %1511 = vmatprep.subr.mxu0 %v286
    %1512 = vmatpush1.msra.mxu0 %v285
    %1513 = vmatprep.subr.mxu0 %v288
    %1514 = vmatpush1.msra.mxu0 %v287
    %1515 = vmatprep.mubr.f32.mxu0 %v1173
    %1516 = vmatmul.mubr.f32.gmra.mrb[0].mxu0 %v1165
    %v1517 = vpop.f32.mrb[0].mxu0
    %v1518 = vadd.f32 %v1447, %v1517
    %v1519 = vpop.f32.mrb[0].mxu0
    %v1520 = vadd.f32 %v1449, %v1519
    %1521 = vdwg.mxu0
    %1522 = vmatprep.subr.mxu0 %v290
    %1523 = vmatpush1.msra.mxu0 %v289
    %1524 = vmatprep.subr.mxu0 %v292
    %1525 = vmatpush1.msra.mxu0 %v291
    %1526 = vmatprep.subr.mxu0 %v294
    %1527 = vmatpush1.msra.mxu0 %v293
    %1528 = vmatprep.subr.mxu0 %v296
    %1529 = vmatpush1.msra.mxu0 %v295
    %1530 = vmatprep.subr.mxu0 %v298
    %1531 = vmatpush1.msra.mxu0 %v297
    %1532 = vmatprep.subr.mxu0 %v300
    %1533 = vmatpush1.msra.mxu0 %v299
    %1534 = vmatprep.subr.mxu0 %v302
    %1535 = vmatpush1.msra.mxu0 %v301
    %1536 = vmatprep.subr.mxu0 %v304
    %1537 = vmatpush1.msra.mxu0 %v303
    %1538 = vmatprep.subr.mxu0 %v306
    %1539 = vmatpush1.msra.mxu0 %v305
    %1540 = vmatprep.subr.mxu0 %v308
    %1541 = vmatpush1.msra.mxu0 %v307
    %1542 = vmatprep.subr.mxu0 %v310
    %1543 = vmatpush1.msra.mxu0 %v309
    %1544 = vmatprep.subr.mxu0 %v312
    %1545 = vmatpush1.msra.mxu0 %v311
    %1546 = vmatprep.subr.mxu0 %v314
    %1547 = vmatpush1.msra.mxu0 %v313
    %1548 = vmatprep.subr.mxu0 %v316
    %1549 = vmatpush1.msra.mxu0 %v315
    %1550 = vmatprep.subr.mxu0 %v318
    %1551 = vmatpush1.msra.mxu0 %v317
    %1552 = vmatprep.subr.mxu0 %v320
    %1553 = vmatpush1.msra.mxu0 %v319
    %1554 = vmatprep.subr.mxu0 %v322
    %1555 = vmatpush1.msra.mxu0 %v321
    %1556 = vmatprep.subr.mxu0 %v324
    %1557 = vmatpush1.msra.mxu0 %v323
    %1558 = vmatprep.subr.mxu0 %v326
    %1559 = vmatpush1.msra.mxu0 %v325
    %1560 = vmatprep.subr.mxu0 %v328
    %1561 = vmatpush1.msra.mxu0 %v327
    %1562 = vmatprep.subr.mxu0 %v330
    %1563 = vmatpush1.msra.mxu0 %v329
    %1564 = vmatprep.subr.mxu0 %v332
    %1565 = vmatpush1.msra.mxu0 %v331
    %1566 = vmatprep.subr.mxu0 %v334
    %1567 = vmatpush1.msra.mxu0 %v333
    %1568 = vmatprep.subr.mxu0 %v336
    %1569 = vmatpush1.msra.mxu0 %v335
    %1570 = vmatprep.subr.mxu0 %v338
    %1571 = vmatpush1.msra.mxu0 %v337
    %1572 = vmatprep.subr.mxu0 %v340
    %1573 = vmatpush1.msra.mxu0 %v339
    %1574 = vmatprep.subr.mxu0 %v342
    %1575 = vmatpush1.msra.mxu0 %v341
    %1576 = vmatprep.subr.mxu0 %v344
    %1577 = vmatpush1.msra.mxu0 %v343
    %1578 = vmatprep.subr.mxu0 %v346
    %1579 = vmatpush1.msra.mxu0 %v345
    %1580 = vmatprep.subr.mxu0 %v348
    %1581 = vmatpush1.msra.mxu0 %v347
    %1582 = vmatprep.subr.mxu0 %v350
    %1583 = vmatpush1.msra.mxu0 %v349
    %1584 = vmatprep.subr.mxu0 %v352
    %1585 = vmatpush1.msra.mxu0 %v351
    %1586 = vmatprep.mubr.f32.mxu0 %v1174
    %1587 = vmatmul.mubr.f32.gmra.mrb[0].mxu0 %v1172
    %v1588 = vpop.f32.mrb[0].mxu0
    %v1589 = vadd.f32 %v1518, %v1588
    %v1590 = vpop.f32.mrb[0].mxu0
    %v1591 = vadd.f32 %v1520, %v1590
    %1592 = vdwg.mxu0
    %1593 = vmatprep.subr.mxu0 %v354
    %1594 = vmatpush1.msra.mxu0 %v353
    %1595 = vmatprep.subr.mxu0 %v356
    %1596 = vmatpush1.msra.mxu0 %v355
    %1597 = vmatprep.subr.mxu0 %v358
    %1598 = vmatpush1.msra.mxu0 %v357
    %1599 = vmatprep.subr.mxu0 %v360
    %1600 = vmatpush1.msra.mxu0 %v359
    %1601 = vmatprep.subr.mxu0 %v362
    %1602 = vmatpush1.msra.mxu0 %v361
    %1603 = vmatprep.subr.mxu0 %v364
    %1604 = vmatpush1.msra.mxu0 %v363
    %1605 = vmatprep.subr.mxu0 %v366
    %1606 = vmatpush1.msra.mxu0 %v365
    %1607 = vmatprep.subr.mxu0 %v368
    %1608 = vmatpush1.msra.mxu0 %v367
    %1609 = vmatprep.subr.mxu0 %v370
    %1610 = vmatpush1.msra.mxu0 %v369
    %1611 = vmatprep.subr.mxu0 %v372
    %1612 = vmatpush1.msra.mxu0 %v371
    %1613 = vmatprep.subr.mxu0 %v374
    %1614 = vmatpush1.msra.mxu0 %v373
    %1615 = vmatprep.subr.mxu0 %v376
    %1616 = vmatpush1.msra.mxu0 %v375
    %1617 = vmatprep.subr.mxu0 %v378
    %1618 = vmatpush1.msra.mxu0 %v377
    %1619 = vmatprep.subr.mxu0 %v380
    %1620 = vmatpush1.msra.mxu0 %v379
    %1621 = vmatprep.subr.mxu0 %v382
    %1622 = vmatpush1.msra.mxu0 %v381
    %1623 = vmatprep.subr.mxu0 %v384
    %1624 = vmatpush1.msra.mxu0 %v383
    %1625 = vmatprep.subr.mxu0 %v386
    %1626 = vmatpush1.msra.mxu0 %v385
    %1627 = vmatprep.subr.mxu0 %v388
    %1628 = vmatpush1.msra.mxu0 %v387
    %1629 = vmatprep.subr.mxu0 %v390
    %1630 = vmatpush1.msra.mxu0 %v389
    %1631 = vmatprep.subr.mxu0 %v392
    %1632 = vmatpush1.msra.mxu0 %v391
    %1633 = vmatprep.subr.mxu0 %v394
    %1634 = vmatpush1.msra.mxu0 %v393
    %1635 = vmatprep.subr.mxu0 %v396
    %1636 = vmatpush1.msra.mxu0 %v395
    %1637 = vmatprep.subr.mxu0 %v398
    %1638 = vmatpush1.msra.mxu0 %v397
    %1639 = vmatprep.subr.mxu0 %v400
    %1640 = vmatpush1.msra.mxu0 %v399
    %1641 = vmatprep.subr.mxu0 %v402
    %1642 = vmatpush1.msra.mxu0 %v401
    %1643 = vmatprep.subr.mxu0 %v404
    %1644 = vmatpush1.msra.mxu0 %v403
    %1645 = vmatprep.subr.mxu0 %v406
    %1646 = vmatpush1.msra.mxu0 %v405
    %1647 = vmatprep.subr.mxu0 %v408
    %1648 = vmatpush1.msra.mxu0 %v407
    %1649 = vmatprep.subr.mxu0 %v410
    %1650 = vmatpush1.msra.mxu0 %v409
    %1651 = vmatprep.subr.mxu0 %v412
    %1652 = vmatpush1.msra.mxu0 %v411
    %1653 = vmatprep.subr.mxu0 %v414
    %1654 = vmatpush1.msra.mxu0 %v413
    %1655 = vmatprep.subr.mxu0 %v416
    %1656 = vmatpush1.msra.mxu0 %v415
    %1657 = vmatprep.mubr.f32.mxu0 %v1190
    %1658 = vmatmul.mubr.f32.gmra.mrb[0].mxu0 %v1182
    %v1659 = vpop.f32.mrb[0].mxu0
    %v1660 = vadd.f32 %v1589, %v1659
    %v1661 = vpop.f32.mrb[0].mxu0
    %v1662 = vadd.f32 %v1591, %v1661
    %1663 = vdwg.mxu0
    %1664 = vmatprep.subr.mxu0 %v418
    %1665 = vmatpush1.msra.mxu0 %v417
    %1666 = vmatprep.subr.mxu0 %v420
    %1667 = vmatpush1.msra.mxu0 %v419
    %1668 = vmatprep.subr.mxu0 %v422
    %1669 = vmatpush1.msra.mxu0 %v421
    %1670 = vmatprep.subr.mxu0 %v424
    %1671 = vmatpush1.msra.mxu0 %v423
    %1672 = vmatprep.subr.mxu0 %v426
    %1673 = vmatpush1.msra.mxu0 %v425
    %1674 = vmatprep.subr.mxu0 %v428
    %1675 = vmatpush1.msra.mxu0 %v427
    %1676 = vmatprep.subr.mxu0 %v430
    %1677 = vmatpush1.msra.mxu0 %v429
    %1678 = vmatprep.subr.mxu0 %v432
    %1679 = vmatpush1.msra.mxu0 %v431
    %1680 = vmatprep.subr.mxu0 %v434
    %1681 = vmatpush1.msra.mxu0 %v433
    %1682 = vmatprep.subr.mxu0 %v436
    %1683 = vmatpush1.msra.mxu0 %v435
    %1684 = vmatprep.subr.mxu0 %v438
    %1685 = vmatpush1.msra.mxu0 %v437
    %1686 = vmatprep.subr.mxu0 %v440
    %1687 = vmatpush1.msra.mxu0 %v439
    %1688 = vmatprep.subr.mxu0 %v442
    %1689 = vmatpush1.msra.mxu0 %v441
    %1690 = vmatprep.subr.mxu0 %v444
    %1691 = vmatpush1.msra.mxu0 %v443
    %1692 = vmatprep.subr.mxu0 %v446
    %1693 = vmatpush1.msra.mxu0 %v445
    %1694 = vmatprep.subr.mxu0 %v448
    %1695 = vmatpush1.msra.mxu0 %v447
    %1696 = vmatprep.subr.mxu0 %v450
    %1697 = vmatpush1.msra.mxu0 %v449
    %1698 = vmatprep.subr.mxu0 %v452
    %1699 = vmatpush1.msra.mxu0 %v451
    %1700 = vmatprep.subr.mxu0 %v454
    %1701 = vmatpush1.msra.mxu0 %v453
    %1702 = vmatprep.subr.mxu0 %v456
    %1703 = vmatpush1.msra.mxu0 %v455
    %1704 = vmatprep.subr.mxu0 %v458
    %1705 = vmatpush1.msra.mxu0 %v457
    %1706 = vmatprep.subr.mxu0 %v460
    %1707 = vmatpush1.msra.mxu0 %v459
    %1708 = vmatprep.subr.mxu0 %v462
    %1709 = vmatpush1.msra.mxu0 %v461
    %1710 = vmatprep.subr.mxu0 %v464
    %1711 = vmatpush1.msra.mxu0 %v463
    %1712 = vmatprep.subr.mxu0 %v466
    %1713 = vmatpush1.msra.mxu0 %v465
    %1714 = vmatprep.subr.mxu0 %v468
    %1715 = vmatpush1.msra.mxu0 %v467
    %1716 = vmatprep.subr.mxu0 %v470
    %1717 = vmatpush1.msra.mxu0 %v469
    %1718 = vmatprep.subr.mxu0 %v472
    %1719 = vmatpush1.msra.mxu0 %v471
    %1720 = vmatprep.subr.mxu0 %v474
    %1721 = vmatpush1.msra.mxu0 %v473
    %1722 = vmatprep.subr.mxu0 %v476
    %1723 = vmatpush1.msra.mxu0 %v475
    %1724 = vmatprep.subr.mxu0 %v478
    %1725 = vmatpush1.msra.mxu0 %v477
    %1726 = vmatprep.subr.mxu0 %v480
    %1727 = vmatpush1.msra.mxu0 %v479
    %1728 = vmatprep.mubr.f32.mxu0 %v1191
    %1729 = vmatmul.mubr.f32.gmra.mrb[0].mxu0 %v1189
    %v1730 = vpop.f32.mrb[0].mxu0
    %v1731 = vadd.f32 %v1660, %v1730
    %v1732 = vpop.f32.mrb[0].mxu0
    %v1733 = vadd.f32 %v1662, %v1732
    %1734 = vdwg.mxu0
    %1735 = vmatprep.subr.mxu0 %v482
    %1736 = vmatpush1.msra.mxu0 %v481
    %1737 = vmatprep.subr.mxu0 %v484
    %1738 = vmatpush1.msra.mxu0 %v483
    %1739 = vmatprep.subr.mxu0 %v486
    %1740 = vmatpush1.msra.mxu0 %v485
    %1741 = vmatprep.subr.mxu0 %v488
    %1742 = vmatpush1.msra.mxu0 %v487
    %1743 = vmatprep.subr.mxu0 %v490
    %1744 = vmatpush1.msra.mxu0 %v489
    %1745 = vmatprep.subr.mxu0 %v492
    %1746 = vmatpush1.msra.mxu0 %v491
    %1747 = vmatprep.subr.mxu0 %v494
    %1748 = vmatpush1.msra.mxu0 %v493
    %1749 = vmatprep.subr.mxu0 %v496
    %1750 = vmatpush1.msra.mxu0 %v495
    %1751 = vmatprep.subr.mxu0 %v498
    %1752 = vmatpush1.msra.mxu0 %v497
    %1753 = vmatprep.subr.mxu0 %v500
    %1754 = vmatpush1.msra.mxu0 %v499
    %1755 = vmatprep.subr.mxu0 %v502
    %1756 = vmatpush1.msra.mxu0 %v501
    %1757 = vmatprep.subr.mxu0 %v504
    %1758 = vmatpush1.msra.mxu0 %v503
    %1759 = vmatprep.subr.mxu0 %v506
    %1760 = vmatpush1.msra.mxu0 %v505
    %1761 = vmatprep.subr.mxu0 %v508
    %1762 = vmatpush1.msra.mxu0 %v507
    %1763 = vmatprep.subr.mxu0 %v510
    %1764 = vmatpush1.msra.mxu0 %v509
    %1765 = vmatprep.subr.mxu0 %v512
    %1766 = vmatpush1.msra.mxu0 %v511
    %1767 = vmatprep.subr.mxu0 %v514
    %1768 = vmatpush1.msra.mxu0 %v513
    %1769 = vmatprep.subr.mxu0 %v516
    %1770 = vmatpush1.msra.mxu0 %v515
    %1771 = vmatprep.subr.mxu0 %v518
    %1772 = vmatpush1.msra.mxu0 %v517
    %1773 = vmatprep.subr.mxu0 %v520
    %1774 = vmatpush1.msra.mxu0 %v519
    %1775 = vmatprep.subr.mxu0 %v522
    %1776 = vmatpush1.msra.mxu0 %v521
    %1777 = vmatprep.subr.mxu0 %v524
    %1778 = vmatpush1.msra.mxu0 %v523
    %1779 = vmatprep.subr.mxu0 %v526
    %1780 = vmatpush1.msra.mxu0 %v525
    %1781 = vmatprep.subr.mxu0 %v528
    %1782 = vmatpush1.msra.mxu0 %v527
    %1783 = vmatprep.subr.mxu0 %v530
    %1784 = vmatpush1.msra.mxu0 %v529
    %1785 = vmatprep.subr.mxu0 %v532
    %1786 = vmatpush1.msra.mxu0 %v531
    %1787 = vmatprep.subr.mxu0 %v534
    %1788 = vmatpush1.msra.mxu0 %v533
    %1789 = vmatprep.subr.mxu0 %v536
    %1790 = vmatpush1.msra.mxu0 %v535
    %1791 = vmatprep.subr.mxu0 %v538
    %1792 = vmatpush1.msra.mxu0 %v537
    %1793 = vmatprep.subr.mxu0 %v540
    %1794 = vmatpush1.msra.mxu0 %v539
    %1795 = vmatprep.subr.mxu0 %v542
    %1796 = vmatpush1.msra.mxu0 %v541
    %1797 = vmatprep.subr.mxu0 %v544
    %1798 = vmatpush1.msra.mxu0 %v543
    %1799 = vmatprep.mubr.f32.mxu0 %v1207
    %1800 = vmatmul.mubr.f32.gmra.mrb[0].mxu0 %v1199
    %v1801 = vpop.f32.mrb[0].mxu0
    %v1802 = vadd.f32 %v1731, %v1801
    %v1803 = vpop.f32.mrb[0].mxu0
    %v1804 = vadd.f32 %v1733, %v1803
    %1805 = vdwg.mxu0
    %1806 = vmatprep.subr.mxu0 %v546
    %1807 = vmatpush1.msra.mxu0 %v545
    %1808 = vmatprep.subr.mxu0 %v548
    %1809 = vmatpush1.msra.mxu0 %v547
    %1810 = vmatprep.subr.mxu0 %v550
    %1811 = vmatpush1.msra.mxu0 %v549
    %1812 = vmatprep.subr.mxu0 %v552
    %1813 = vmatpush1.msra.mxu0 %v551
    %1814 = vmatprep.subr.mxu0 %v554
    %1815 = vmatpush1.msra.mxu0 %v553
    %1816 = vmatprep.subr.mxu0 %v556
    %1817 = vmatpush1.msra.mxu0 %v555
    %1818 = vmatprep.subr.mxu0 %v558
    %1819 = vmatpush1.msra.mxu0 %v557
    %1820 = vmatprep.subr.mxu0 %v560
    %1821 = vmatpush1.msra.mxu0 %v559
    %1822 = vmatprep.subr.mxu0 %v562
    %1823 = vmatpush1.msra.mxu0 %v561
    %1824 = vmatprep.subr.mxu0 %v564
    %1825 = vmatpush1.msra.mxu0 %v563
    %1826 = vmatprep.subr.mxu0 %v566
    %1827 = vmatpush1.msra.mxu0 %v565
    %1828 = vmatprep.subr.mxu0 %v568
    %1829 = vmatpush1.msra.mxu0 %v567
    %1830 = vmatprep.subr.mxu0 %v570
    %1831 = vmatpush1.msra.mxu0 %v569
    %1832 = vmatprep.subr.mxu0 %v572
    %1833 = vmatpush1.msra.mxu0 %v571
    %1834 = vmatprep.subr.mxu0 %v574
    %1835 = vmatpush1.msra.mxu0 %v573
    %1836 = vmatprep.subr.mxu0 %v576
    %1837 = vmatpush1.msra.mxu0 %v575
    %1838 = vmatprep.subr.mxu0 %v578
    %1839 = vmatpush1.msra.mxu0 %v577
    %1840 = vmatprep.subr.mxu0 %v580
    %1841 = vmatpush1.msra.mxu0 %v579
    %1842 = vmatprep.subr.mxu0 %v582
    %1843 = vmatpush1.msra.mxu0 %v581
    %1844 = vmatprep.subr.mxu0 %v584
    %1845 = vmatpush1.msra.mxu0 %v583
    %1846 = vmatprep.subr.mxu0 %v586
    %1847 = vmatpush1.msra.mxu0 %v585
    %1848 = vmatprep.subr.mxu0 %v588
    %1849 = vmatpush1.msra.mxu0 %v587
    %1850 = vmatprep.subr.mxu0 %v590
    %1851 = vmatpush1.msra.mxu0 %v589
    %1852 = vmatprep.subr.mxu0 %v592
    %1853 = vmatpush1.msra.mxu0 %v591
    %1854 = vmatprep.subr.mxu0 %v594
    %1855 = vmatpush1.msra.mxu0 %v593
    %1856 = vmatprep.subr.mxu0 %v596
    %1857 = vmatpush1.msra.mxu0 %v595
    %1858 = vmatprep.subr.mxu0 %v598
    %1859 = vmatpush1.msra.mxu0 %v597
    %1860 = vmatprep.subr.mxu0 %v600
    %1861 = vmatpush1.msra.mxu0 %v599
    %1862 = vmatprep.subr.mxu0 %v602
    %1863 = vmatpush1.msra.mxu0 %v601
    %1864 = vmatprep.subr.mxu0 %v604
    %1865 = vmatpush1.msra.mxu0 %v603
    %1866 = vmatprep.subr.mxu0 %v606
    %1867 = vmatpush1.msra.mxu0 %v605
    %1868 = vmatprep.subr.mxu0 %v608
    %1869 = vmatpush1.msra.mxu0 %v607
    %1870 = vmatprep.mubr.f32.mxu0 %v1208
    %1871 = vmatmul.mubr.f32.gmra.mrb[0].mxu0 %v1206
    %v1872 = vpop.f32.mrb[0].mxu0
    %v1873 = vadd.f32 %v1802, %v1872
    %v1874 = vpop.f32.mrb[0].mxu0
    %v1875 = vadd.f32 %v1804, %v1874
    %1876 = vdwg.mxu0
    %1877 = vmatprep.subr.mxu0 %v610
    %1878 = vmatpush1.msra.mxu0 %v609
    %1879 = vmatprep.subr.mxu0 %v612
    %1880 = vmatpush1.msra.mxu0 %v611
    %1881 = vmatprep.subr.mxu0 %v614
    %1882 = vmatpush1.msra.mxu0 %v613
    %1883 = vmatprep.subr.mxu0 %v616
    %1884 = vmatpush1.msra.mxu0 %v615
    %1885 = vmatprep.subr.mxu0 %v618
    %1886 = vmatpush1.msra.mxu0 %v617
    %1887 = vmatprep.subr.mxu0 %v620
    %1888 = vmatpush1.msra.mxu0 %v619
    %1889 = vmatprep.subr.mxu0 %v622
    %1890 = vmatpush1.msra.mxu0 %v621
    %1891 = vmatprep.subr.mxu0 %v624
    %1892 = vmatpush1.msra.mxu0 %v623
    %1893 = vmatprep.subr.mxu0 %v626
    %1894 = vmatpush1.msra.mxu0 %v625
    %1895 = vmatprep.subr.mxu0 %v628
    %1896 = vmatpush1.msra.mxu0 %v627
    %1897 = vmatprep.subr.mxu0 %v630
    %1898 = vmatpush1.msra.mxu0 %v629
    %1899 = vmatprep.subr.mxu0 %v632
    %1900 = vmatpush1.msra.mxu0 %v631
    %1901 = vmatprep.subr.mxu0 %v634
    %1902 = vmatpush1.msra.mxu0 %v633
    %1903 = vmatprep.subr.mxu0 %v636
    %1904 = vmatpush1.msra.mxu0 %v635
    %1905 = vmatprep.subr.mxu0 %v638
    %1906 = vmatpush1.msra.mxu0 %v637
    %1907 = vmatprep.subr.mxu0 %v640
    %1908 = vmatpush1.msra.mxu0 %v639
    %1909 = vmatprep.subr.mxu0 %v642
    %1910 = vmatpush1.msra.mxu0 %v641
    %1911 = vmatprep.subr.mxu0 %v644
    %1912 = vmatpush1.msra.mxu0 %v643
    %1913 = vmatprep.subr.mxu0 %v646
    %1914 = vmatpush1.msra.mxu0 %v645
    %1915 = vmatprep.subr.mxu0 %v648
    %1916 = vmatpush1.msra.mxu0 %v647
    %1917 = vmatprep.subr.mxu0 %v650
    %1918 = vmatpush1.msra.mxu0 %v649
    %1919 = vmatprep.subr.mxu0 %v652
    %1920 = vmatpush1.msra.mxu0 %v651
    %1921 = vmatprep.subr.mxu0 %v654
    %1922 = vmatpush1.msra.mxu0 %v653
    %1923 = vmatprep.subr.mxu0 %v656
    %1924 = vmatpush1.msra.mxu0 %v655
    %1925 = vmatprep.subr.mxu0 %v658
    %1926 = vmatpush1.msra.mxu0 %v657
    %1927 = vmatprep.subr.mxu0 %v660
    %1928 = vmatpush1.msra.mxu0 %v659
    %1929 = vmatprep.subr.mxu0 %v662
    %1930 = vmatpush1.msra.mxu0 %v661
    %1931 = vmatprep.subr.mxu0 %v664
    %1932 = vmatpush1.msra.mxu0 %v663
    %1933 = vmatprep.subr.mxu0 %v666
    %1934 = vmatpush1.msra.mxu0 %v665
    %1935 = vmatprep.subr.mxu0 %v668
    %1936 = vmatpush1.msra.mxu0 %v667
    %1937 = vmatprep.subr.mxu0 %v670
    %1938 = vmatpush1.msra.mxu0 %v669
    %1939 = vmatprep.subr.mxu0 %v672
    %1940 = vmatpush1.msra.mxu0 %v671
    %1941 = vmatprep.mubr.f32.mxu0 %v1224
    %1942 = vmatmul.mubr.f32.gmra.mrb[0].mxu0 %v1216
    %v1943 = vpop.f32.mrb[0].mxu0
    %v1944 = vadd.f32 %v1873, %v1943
    %v1945 = vpop.f32.mrb[0].mxu0
    %v1946 = vadd.f32 %v1875, %v1945
    %1947 = vdwg.mxu0
    %1948 = vmatprep.subr.mxu0 %v674
    %1949 = vmatpush1.msra.mxu0 %v673
    %1950 = vmatprep.subr.mxu0 %v676
    %1951 = vmatpush1.msra.mxu0 %v675
    %1952 = vmatprep.subr.mxu0 %v678
    %1953 = vmatpush1.msra.mxu0 %v677
    %1954 = vmatprep.subr.mxu0 %v680
    %1955 = vmatpush1.msra.mxu0 %v679
    %1956 = vmatprep.subr.mxu0 %v682
    %1957 = vmatpush1.msra.mxu0 %v681
    %1958 = vmatprep.subr.mxu0 %v684
    %1959 = vmatpush1.msra.mxu0 %v683
    %1960 = vmatprep.subr.mxu0 %v686
    %1961 = vmatpush1.msra.mxu0 %v685
    %1962 = vmatprep.subr.mxu0 %v688
    %1963 = vmatpush1.msra.mxu0 %v687
    %1964 = vmatprep.subr.mxu0 %v690
    %1965 = vmatpush1.msra.mxu0 %v689
    %1966 = vmatprep.subr.mxu0 %v692
    %1967 = vmatpush1.msra.mxu0 %v691
    %1968 = vmatprep.subr.mxu0 %v694
    %1969 = vmatpush1.msra.mxu0 %v693
    %1970 = vmatprep.subr.mxu0 %v696
    %1971 = vmatpush1.msra.mxu0 %v695
    %1972 = vmatprep.subr.mxu0 %v698
    %1973 = vmatpush1.msra.mxu0 %v697
    %1974 = vmatprep.subr.mxu0 %v700
    %1975 = vmatpush1.msra.mxu0 %v699
    %1976 = vmatprep.subr.mxu0 %v702
    %1977 = vmatpush1.msra.mxu0 %v701
    %1978 = vmatprep.subr.mxu0 %v704
    %1979 = vmatpush1.msra.mxu0 %v703
    %1980 = vmatprep.subr.mxu0 %v706
    %1981 = vmatpush1.msra.mxu0 %v705
    %1982 = vmatprep.subr.mxu0 %v708
    %1983 = vmatpush1.msra.mxu0 %v707
    %1984 = vmatprep.subr.mxu0 %v710
    %1985 = vmatpush1.msra.mxu0 %v709
    %1986 = vmatprep.subr.mxu0 %v712
    %1987 = vmatpush1.msra.mxu0 %v711
    %1988 = vmatprep.subr.mxu0 %v714
    %1989 = vmatpush1.msra.mxu0 %v713
    %1990 = vmatprep.subr.mxu0 %v716
    %1991 = vmatpush1.msra.mxu0 %v715
    %1992 = vmatprep.subr.mxu0 %v718
    %1993 = vmatpush1.msra.mxu0 %v717
    %1994 = vmatprep.subr.mxu0 %v720
    %1995 = vmatpush1.msra.mxu0 %v719
    %1996 = vmatprep.subr.mxu0 %v722
    %1997 = vmatpush1.msra.mxu0 %v721
    %1998 = vmatprep.subr.mxu0 %v724
    %1999 = vmatpush1.msra.mxu0 %v723
    %2000 = vmatprep.subr.mxu0 %v726
    %2001 = vmatpush1.msra.mxu0 %v725
    %2002 = vmatprep.subr.mxu0 %v728
    %2003 = vmatpush1.msra.mxu0 %v727
    %2004 = vmatprep.subr.mxu0 %v730
    %2005 = vmatpush1.msra.mxu0 %v729
    %2006 = vmatprep.subr.mxu0 %v732
    %2007 = vmatpush1.msra.mxu0 %v731
    %2008 = vmatprep.subr.mxu0 %v734
    %2009 = vmatpush1.msra.mxu0 %v733
    %2010 = vmatprep.subr.mxu0 %v736
    %2011 = vmatpush1.msra.mxu0 %v735
    %2012 = vmatprep.mubr.f32.mxu0 %v1225
    %2013 = vmatmul.mubr.f32.gmra.mrb[0].mxu0 %v1223
    %v2014 = vpop.f32.mrb[0].mxu0
    %v2015 = vadd.f32 %v1944, %v2014
    %v2016 = vpop.f32.mrb[0].mxu0
    %v2017 = vadd.f32 %v1946, %v2016
    %2018 = vdwg.mxu0
    %2019 = vmatprep.subr.mxu0 %v738
    %2020 = vmatpush1.msra.mxu0 %v737
    %2021 = vmatprep.subr.mxu0 %v740
    %2022 = vmatpush1.msra.mxu0 %v739
    %2023 = vmatprep.subr.mxu0 %v742
    %2024 = vmatpush1.msra.mxu0 %v741
    %2025 = vmatprep.subr.mxu0 %v744
    %2026 = vmatpush1.msra.mxu0 %v743
    %2027 = vmatprep.subr.mxu0 %v746
    %2028 = vmatpush1.msra.mxu0 %v745
    %2029 = vmatprep.subr.mxu0 %v748
    %2030 = vmatpush1.msra.mxu0 %v747
    %2031 = vmatprep.subr.mxu0 %v750
    %2032 = vmatpush1.msra.mxu0 %v749
    %2033 = vmatprep.subr.mxu0 %v752
    %2034 = vmatpush1.msra.mxu0 %v751
    %2035 = vmatprep.subr.mxu0 %v754
    %2036 = vmatpush1.msra.mxu0 %v753
    %2037 = vmatprep.subr.mxu0 %v756
    %2038 = vmatpush1.msra.mxu0 %v755
    %2039 = vmatprep.subr.mxu0 %v758
    %2040 = vmatpush1.msra.mxu0 %v757
    %2041 = vmatprep.subr.mxu0 %v760
    %2042 = vmatpush1.msra.mxu0 %v759
    %2043 = vmatprep.subr.mxu0 %v762
    %2044 = vmatpush1.msra.mxu0 %v761
    %2045 = vmatprep.subr.mxu0 %v764
    %2046 = vmatpush1.msra.mxu0 %v763
    %2047 = vmatprep.subr.mxu0 %v766
    %2048 = vmatpush1.msra.mxu0 %v765
    %2049 = vmatprep.subr.mxu0 %v768
    %2050 = vmatpush1.msra.mxu0 %v767
    %2051 = vmatprep.subr.mxu0 %v770
    %2052 = vmatpush1.msra.mxu0 %v769
    %2053 = vmatprep.subr.mxu0 %v772
    %2054 = vmatpush1.msra.mxu0 %v771
    %2055 = vmatprep.subr.mxu0 %v774
    %2056 = vmatpush1.msra.mxu0 %v773
    %2057 = vmatprep.subr.mxu0 %v776
    %2058 = vmatpush1.msra.mxu0 %v775
    %2059 = vmatprep.subr.mxu0 %v778
    %2060 = vmatpush1.msra.mxu0 %v777
    %2061 = vmatprep.subr.mxu0 %v780
    %2062 = vmatpush1.msra.mxu0 %v779
    %2063 = vmatprep.subr.mxu0 %v782
    %2064 = vmatpush1.msra.mxu0 %v781
    %2065 = vmatprep.subr.mxu0 %v784
    %2066 = vmatpush1.msra.mxu0 %v783
    %2067 = vmatprep.subr.mxu0 %v786
    %2068 = vmatpush1.msra.mxu0 %v785
    %2069 = vmatprep.subr.mxu0 %v788
    %2070 = vmatpush1.msra.mxu0 %v787
    %2071 = vmatprep.subr.mxu0 %v790
    %2072 = vmatpush1.msra.mxu0 %v789
    %2073 = vmatprep.subr.mxu0 %v792
    %2074 = vmatpush1.msra.mxu0 %v791
    %2075 = vmatprep.subr.mxu0 %v794
    %2076 = vmatpush1.msra.mxu0 %v793
    %2077 = vmatprep.subr.mxu0 %v796
    %2078 = vmatpush1.msra.mxu0 %v795
    %2079 = vmatprep.subr.mxu0 %v798
    %2080 = vmatpush1.msra.mxu0 %v797
    %2081 = vmatprep.subr.mxu0 %v800
    %2082 = vmatpush1.msra.mxu0 %v799
    %2083 = vmatprep.mubr.f32.mxu0 %v1241
    %2084 = vmatmul.mubr.f32.gmra.mrb[0].mxu0 %v1233
    %v2085 = vpop.f32.mrb[0].mxu0
    %v2086 = vadd.f32 %v2015, %v2085
    %v2087 = vpop.f32.mrb[0].mxu0
    %v2088 = vadd.f32 %v2017, %v2087
    %2089 = vdwg.mxu0
    %2090 = vmatprep.subr.mxu0 %v802
    %2091 = vmatpush1.msra.mxu0 %v801
    %2092 = vmatprep.subr.mxu0 %v804
    %2093 = vmatpush1.msra.mxu0 %v803
    %2094 = vmatprep.subr.mxu0 %v806
    %2095 = vmatpush1.msra.mxu0 %v805
    %2096 = vmatprep.subr.mxu0 %v808
    %2097 = vmatpush1.msra.mxu0 %v807
    %2098 = vmatprep.subr.mxu0 %v810
    %2099 = vmatpush1.msra.mxu0 %v809
    %2100 = vmatprep.subr.mxu0 %v812
    %2101 = vmatpush1.msra.mxu0 %v811
    %2102 = vmatprep.subr.mxu0 %v814
    %2103 = vmatpush1.msra.mxu0 %v813
    %2104 = vmatprep.subr.mxu0 %v816
    %2105 = vmatpush1.msra.mxu0 %v815
    %2106 = vmatprep.subr.mxu0 %v818
    %2107 = vmatpush1.msra.mxu0 %v817
    %2108 = vmatprep.subr.mxu0 %v820
    %2109 = vmatpush1.msra.mxu0 %v819
    %2110 = vmatprep.subr.mxu0 %v822
    %2111 = vmatpush1.msra.mxu0 %v821
    %2112 = vmatprep.subr.mxu0 %v824
    %2113 = vmatpush1.msra.mxu0 %v823
    %2114 = vmatprep.subr.mxu0 %v826
    %2115 = vmatpush1.msra.mxu0 %v825
    %2116 = vmatprep.subr.mxu0 %v828
    %2117 = vmatpush1.msra.mxu0 %v827
    %2118 = vmatprep.subr.mxu0 %v830
    %2119 = vmatpush1.msra.mxu0 %v829
    %2120 = vmatprep.subr.mxu0 %v832
    %2121 = vmatpush1.msra.mxu0 %v831
    %2122 = vmatprep.subr.mxu0 %v834
    %2123 = vmatpush1.msra.mxu0 %v833
    %2124 = vmatprep.subr.mxu0 %v836
    %2125 = vmatpush1.msra.mxu0 %v835
    %2126 = vmatprep.subr.mxu0 %v838
    %2127 = vmatpush1.msra.mxu0 %v837
    %2128 = vmatprep.subr.mxu0 %v840
    %2129 = vmatpush1.msra.mxu0 %v839
    %2130 = vmatprep.subr.mxu0 %v842
    %2131 = vmatpush1.msra.mxu0 %v841
    %2132 = vmatprep.subr.mxu0 %v844
    %2133 = vmatpush1.msra.mxu0 %v843
    %2134 = vmatprep.subr.mxu0 %v846
    %2135 = vmatpush1.msra.mxu0 %v845
    %2136 = vmatprep.subr.mxu0 %v848
    %2137 = vmatpush1.msra.mxu0 %v847
    %2138 = vmatprep.subr.mxu0 %v850
    %2139 = vmatpush1.msra.mxu0 %v849
    %2140 = vmatprep.subr.mxu0 %v852
    %2141 = vmatpush1.msra.mxu0 %v851
    %2142 = vmatprep.subr.mxu0 %v854
    %2143 = vmatpush1.msra.mxu0 %v853
    %2144 = vmatprep.subr.mxu0 %v856
    %2145 = vmatpush1.msra.mxu0 %v855
    %2146 = vmatprep.subr.mxu0 %v858
    %2147 = vmatpush1.msra.mxu0 %v857
    %2148 = vmatprep.subr.mxu0 %v860
    %2149 = vmatpush1.msra.mxu0 %v859
    %2150 = vmatprep.subr.mxu0 %v862
    %2151 = vmatpush1.msra.mxu0 %v861
    %2152 = vmatprep.subr.mxu0 %v864
    %2153 = vmatpush1.msra.mxu0 %v863
    %2154 = vmatprep.mubr.f32.mxu0 %v1242
    %2155 = vmatmul.mubr.f32.gmra.mrb[0].mxu0 %v1240
    %v2156 = vpop.f32.mrb[0].mxu0
    %v2157 = vadd.f32 %v2086, %v2156
    %v2158 = vpop.f32.mrb[0].mxu0
    %v2159 = vadd.f32 %v2088, %v2158
    %2160 = vdwg.mxu0
    %2161 = vmatprep.subr.mxu0 %v866
    %2162 = vmatpush1.msra.mxu0 %v865
    %2163 = vmatprep.subr.mxu0 %v868
    %2164 = vmatpush1.msra.mxu0 %v867
    %2165 = vmatprep.subr.mxu0 %v870
    %2166 = vmatpush1.msra.mxu0 %v869
    %2167 = vmatprep.subr.mxu0 %v872
    %2168 = vmatpush1.msra.mxu0 %v871
    %2169 = vmatprep.subr.mxu0 %v874
    %2170 = vmatpush1.msra.mxu0 %v873
    %2171 = vmatprep.subr.mxu0 %v876
    %2172 = vmatpush1.msra.mxu0 %v875
    %2173 = vmatprep.subr.mxu0 %v878
    %2174 = vmatpush1.msra.mxu0 %v877
    %2175 = vmatprep.subr.mxu0 %v880
    %2176 = vmatpush1.msra.mxu0 %v879
    %2177 = vmatprep.subr.mxu0 %v882
    %2178 = vmatpush1.msra.mxu0 %v881
    %2179 = vmatprep.subr.mxu0 %v884
    %2180 = vmatpush1.msra.mxu0 %v883
    %2181 = vmatprep.subr.mxu0 %v886
    %2182 = vmatpush1.msra.mxu0 %v885
    %2183 = vmatprep.subr.mxu0 %v888
    %2184 = vmatpush1.msra.mxu0 %v887
    %2185 = vmatprep.subr.mxu0 %v890
    %2186 = vmatpush1.msra.mxu0 %v889
    %2187 = vmatprep.subr.mxu0 %v892
    %2188 = vmatpush1.msra.mxu0 %v891
    %2189 = vmatprep.subr.mxu0 %v894
    %2190 = vmatpush1.msra.mxu0 %v893
    %2191 = vmatprep.subr.mxu0 %v896
    %2192 = vmatpush1.msra.mxu0 %v895
    %2193 = vmatprep.subr.mxu0 %v898
    %2194 = vmatpush1.msra.mxu0 %v897
    %2195 = vmatprep.subr.mxu0 %v900
    %2196 = vmatpush1.msra.mxu0 %v899
    %2197 = vmatprep.subr.mxu0 %v902
    %2198 = vmatpush1.msra.mxu0 %v901
    %2199 = vmatprep.subr.mxu0 %v904
    %2200 = vmatpush1.msra.mxu0 %v903
    %2201 = vmatprep.subr.mxu0 %v906
    %2202 = vmatpush1.msra.mxu0 %v905
    %2203 = vmatprep.subr.mxu0 %v908
    %2204 = vmatpush1.msra.mxu0 %v907
    %2205 = vmatprep.subr.mxu0 %v910
    %2206 = vmatpush1.msra.mxu0 %v909
    %2207 = vmatprep.subr.mxu0 %v912
    %2208 = vmatpush1.msra.mxu0 %v911
    %2209 = vmatprep.subr.mxu0 %v914
    %2210 = vmatpush1.msra.mxu0 %v913
    %2211 = vmatprep.subr.mxu0 %v916
    %2212 = vmatpush1.msra.mxu0 %v915
    %2213 = vmatprep.subr.mxu0 %v918
    %2214 = vmatpush1.msra.mxu0 %v917
    %2215 = vmatprep.subr.mxu0 %v920
    %2216 = vmatpush1.msra.mxu0 %v919
    %2217 = vmatprep.subr.mxu0 %v922
    %2218 = vmatpush1.msra.mxu0 %v921
    %2219 = vmatprep.subr.mxu0 %v924
    %2220 = vmatpush1.msra.mxu0 %v923
    %2221 = vmatprep.subr.mxu0 %v926
    %2222 = vmatpush1.msra.mxu0 %v925
    %2223 = vmatprep.subr.mxu0 %v928
    %2224 = vmatpush1.msra.mxu0 %v927
    %2225 = vmatprep.mubr.f32.mxu0 %v1258
    %2226 = vmatmul.mubr.f32.gmra.mrb[0].mxu0 %v1250
    %v2227 = vpop.f32.mrb[0].mxu0
    %v2228 = vadd.f32 %v2157, %v2227
    %v2229 = vpop.f32.mrb[0].mxu0
    %v2230 = vadd.f32 %v2159, %v2229
    %2231 = vdwg.mxu0
    %2232 = vmatprep.subr.mxu0 %v930
    %2233 = vmatpush1.msra.mxu0 %v929
    %2234 = vmatprep.subr.mxu0 %v932
    %2235 = vmatpush1.msra.mxu0 %v931
    %2236 = vmatprep.subr.mxu0 %v934
    %2237 = vmatpush1.msra.mxu0 %v933
    %2238 = vmatprep.subr.mxu0 %v936
    %2239 = vmatpush1.msra.mxu0 %v935
    %2240 = vmatprep.subr.mxu0 %v938
    %2241 = vmatpush1.msra.mxu0 %v937
    %2242 = vmatprep.subr.mxu0 %v940
    %2243 = vmatpush1.msra.mxu0 %v939
    %2244 = vmatprep.subr.mxu0 %v942
    %2245 = vmatpush1.msra.mxu0 %v941
    %2246 = vmatprep.subr.mxu0 %v944
    %2247 = vmatpush1.msra.mxu0 %v943
    %2248 = vmatprep.subr.mxu0 %v946
    %2249 = vmatpush1.msra.mxu0 %v945
    %2250 = vmatprep.subr.mxu0 %v948
    %2251 = vmatpush1.msra.mxu0 %v947
    %2252 = vmatprep.subr.mxu0 %v950
    %2253 = vmatpush1.msra.mxu0 %v949
    %2254 = vmatprep.subr.mxu0 %v952
    %2255 = vmatpush1.msra.mxu0 %v951
    %2256 = vmatprep.subr.mxu0 %v954
    %2257 = vmatpush1.msra.mxu0 %v953
    %2258 = vmatprep.subr.mxu0 %v956
    %2259 = vmatpush1.msra.mxu0 %v955
    %2260 = vmatprep.subr.mxu0 %v958
    %2261 = vmatpush1.msra.mxu0 %v957
    %2262 = vmatprep.subr.mxu0 %v960
    %2263 = vmatpush1.msra.mxu0 %v959
    %2264 = vmatprep.subr.mxu0 %v962
    %2265 = vmatpush1.msra.mxu0 %v961
    %2266 = vmatprep.subr.mxu0 %v964
    %2267 = vmatpush1.msra.mxu0 %v963
    %2268 = vmatprep.subr.mxu0 %v966
    %2269 = vmatpush1.msra.mxu0 %v965
    %2270 = vmatprep.subr.mxu0 %v968
    %2271 = vmatpush1.msra.mxu0 %v967
    %2272 = vmatprep.subr.mxu0 %v970
    %2273 = vmatpush1.msra.mxu0 %v969
    %2274 = vmatprep.subr.mxu0 %v972
    %2275 = vmatpush1.msra.mxu0 %v971
    %2276 = vmatprep.subr.mxu0 %v974
    %2277 = vmatpush1.msra.mxu0 %v973
    %2278 = vmatprep.subr.mxu0 %v976
    %2279 = vmatpush1.msra.mxu0 %v975
    %2280 = vmatprep.subr.mxu0 %v978
    %2281 = vmatpush1.msra.mxu0 %v977
    %2282 = vmatprep.subr.mxu0 %v980
    %2283 = vmatpush1.msra.mxu0 %v979
    %2284 = vmatprep.subr.mxu0 %v982
    %2285 = vmatpush1.msra.mxu0 %v981
    %2286 = vmatprep.subr.mxu0 %v984
    %2287 = vmatpush1.msra.mxu0 %v983
    %2288 = vmatprep.subr.mxu0 %v986
    %2289 = vmatpush1.msra.mxu0 %v985
    %2290 = vmatprep.subr.mxu0 %v988
    %2291 = vmatpush1.msra.mxu0 %v987
    %2292 = vmatprep.subr.mxu0 %v990
    %2293 = vmatpush1.msra.mxu0 %v989
    %2294 = vmatprep.subr.mxu0 %v992
    %2295 = vmatpush1.msra.mxu0 %v991
    %2296 = vmatprep.mubr.f32.mxu0 %v1259
    %2297 = vmatmul.mubr.f32.gmra.mrb[0].mxu0 %v1257
    %v2298 = vpop.f32.mrb[0].mxu0
    %v2299 = vadd.f32 %v2228, %v2298
    %v2300 = vpop.f32.mrb[0].mxu0
    %v2301 = vadd.f32 %v2230, %v2300
    %2302 = vdwg.mxu0
    %2303 = vmatprep.subr.mxu0 %v994
    %2304 = vmatpush1.msra.mxu0 %v993
    %2305 = vmatprep.subr.mxu0 %v996
    %2306 = vmatpush1.msra.mxu0 %v995
    %2307 = vmatprep.subr.mxu0 %v998
    %2308 = vmatpush1.msra.mxu0 %v997
    %2309 = vmatprep.subr.mxu0 %v1000
    %2310 = vmatpush1.msra.mxu0 %v999
    %2311 = vmatprep.subr.mxu0 %v1002
    %2312 = vmatpush1.msra.mxu0 %v1001
    %2313 = vmatprep.subr.mxu0 %v1004
    %2314 = vmatpush1.msra.mxu0 %v1003
    %2315 = vmatprep.subr.mxu0 %v1006
    %2316 = vmatpush1.msra.mxu0 %v1005
    %2317 = vmatprep.subr.mxu0 %v1008
    %2318 = vmatpush1.msra.mxu0 %v1007
    %2319 = vmatprep.subr.mxu0 %v1010
    %2320 = vmatpush1.msra.mxu0 %v1009
    %2321 = vmatprep.subr.mxu0 %v1012
    %2322 = vmatpush1.msra.mxu0 %v1011
    %2323 = vmatprep.subr.mxu0 %v1014
    %2324 = vmatpush1.msra.mxu0 %v1013
    %2325 = vmatprep.subr.mxu0 %v1016
    %2326 = vmatpush1.msra.mxu0 %v1015
    %2327 = vmatprep.subr.mxu0 %v1018
    %2328 = vmatpush1.msra.mxu0 %v1017
    %2329 = vmatprep.subr.mxu0 %v1020
    %2330 = vmatpush1.msra.mxu0 %v1019
    %2331 = vmatprep.subr.mxu0 %v1022
    %2332 = vmatpush1.msra.mxu0 %v1021
    %2333 = vmatprep.subr.mxu0 %v1024
    %2334 = vmatpush1.msra.mxu0 %v1023
    %2335 = vmatprep.subr.mxu0 %v1026
    %2336 = vmatpush1.msra.mxu0 %v1025
    %2337 = vmatprep.subr.mxu0 %v1028
    %2338 = vmatpush1.msra.mxu0 %v1027
    %2339 = vmatprep.subr.mxu0 %v1030
    %2340 = vmatpush1.msra.mxu0 %v1029
    %2341 = vmatprep.subr.mxu0 %v1032
    %2342 = vmatpush1.msra.mxu0 %v1031
    %2343 = vmatprep.subr.mxu0 %v1034
    %2344 = vmatpush1.msra.mxu0 %v1033
    %2345 = vmatprep.subr.mxu0 %v1036
    %2346 = vmatpush1.msra.mxu0 %v1035
    %2347 = vmatprep.subr.mxu0 %v1038
    %2348 = vmatpush1.msra.mxu0 %v1037
    %2349 = vmatprep.subr.mxu0 %v1040
    %2350 = vmatpush1.msra.mxu0 %v1039
    %2351 = vmatprep.subr.mxu0 %v1042
    %2352 = vmatpush1.msra.mxu0 %v1041
    %2353 = vmatprep.subr.mxu0 %v1044
    %2354 = vmatpush1.msra.mxu0 %v1043
    %2355 = vmatprep.subr.mxu0 %v1046
    %2356 = vmatpush1.msra.mxu0 %v1045
    %2357 = vmatprep.subr.mxu0 %v1048
    %2358 = vmatpush1.msra.mxu0 %v1047
    %2359 = vmatprep.subr.mxu0 %v1050
    %2360 = vmatpush1.msra.mxu0 %v1049
    %2361 = vmatprep.subr.mxu0 %v1052
    %2362 = vmatpush1.msra.mxu0 %v1051
    %2363 = vmatprep.subr.mxu0 %v1054
    %2364 = vmatpush1.msra.mxu0 %v1053
    %2365 = vmatprep.subr.mxu0 %v1056
    %2366 = vmatpush1.msra.mxu0 %v1055
    %2367 = vmatprep.mubr.f32.mxu0 %v1275
    %2368 = vmatmul.mubr.f32.gmra.mrb[0].mxu0 %v1267
    %v2369 = vpop.f32.mrb[0].mxu0
    %v2370 = vadd.f32 %v2299, %v2369
    %v2371 = vpop.f32.mrb[0].mxu0
    %v2372 = vadd.f32 %v2301, %v2371
    %2373 = vdwg.mxu0
    %2374 = vmatprep.subr.mxu0 %v1058
    %2375 = vmatpush1.msra.mxu0 %v1057
    %2376 = vmatprep.subr.mxu0 %v1060
    %2377 = vmatpush1.msra.mxu0 %v1059
    %2378 = vmatprep.subr.mxu0 %v1062
    %2379 = vmatpush1.msra.mxu0 %v1061
    %2380 = vmatprep.subr.mxu0 %v1064
    %2381 = vmatpush1.msra.mxu0 %v1063
    %2382 = vmatprep.subr.mxu0 %v1066
    %2383 = vmatpush1.msra.mxu0 %v1065
    %2384 = vmatprep.subr.mxu0 %v1068
    %2385 = vmatpush1.msra.mxu0 %v1067
    %2386 = vmatprep.subr.mxu0 %v1070
    %2387 = vmatpush1.msra.mxu0 %v1069
    %2388 = vmatprep.subr.mxu0 %v1072
    %2389 = vmatpush1.msra.mxu0 %v1071
    %2390 = vmatprep.subr.mxu0 %v1074
    %2391 = vmatpush1.msra.mxu0 %v1073
    %2392 = vmatprep.subr.mxu0 %v1076
    %2393 = vmatpush1.msra.mxu0 %v1075
    %2394 = vmatprep.subr.mxu0 %v1078
    %2395 = vmatpush1.msra.mxu0 %v1077
    %2396 = vmatprep.subr.mxu0 %v1080
    %2397 = vmatpush1.msra.mxu0 %v1079
    %2398 = vmatprep.subr.mxu0 %v1082
    %2399 = vmatpush1.msra.mxu0 %v1081
    %2400 = vmatprep.subr.mxu0 %v1084
    %2401 = vmatpush1.msra.mxu0 %v1083
    %2402 = vmatprep.subr.mxu0 %v1086
    %2403 = vmatpush1.msra.mxu0 %v1085
    %2404 = vmatprep.subr.mxu0 %v1088
    %2405 = vmatpush1.msra.mxu0 %v1087
    %2406 = vmatprep.subr.mxu0 %v1090
    %2407 = vmatpush1.msra.mxu0 %v1089
    %2408 = vmatprep.subr.mxu0 %v1092
    %2409 = vmatpush1.msra.mxu0 %v1091
    %2410 = vmatprep.subr.mxu0 %v1094
    %2411 = vmatpush1.msra.mxu0 %v1093
    %2412 = vmatprep.subr.mxu0 %v1096
    %2413 = vmatpush1.msra.mxu0 %v1095
    %2414 = vmatprep.subr.mxu0 %v1098
    %2415 = vmatpush1.msra.mxu0 %v1097
    %2416 = vmatprep.subr.mxu0 %v1100
    %2417 = vmatpush1.msra.mxu0 %v1099
    %2418 = vmatprep.subr.mxu0 %v1102
    %2419 = vmatpush1.msra.mxu0 %v1101
    %2420 = vmatprep.subr.mxu0 %v1104
    %2421 = vmatpush1.msra.mxu0 %v1103
    %2422 = vmatprep.subr.mxu0 %v1106
    %2423 = vmatpush1.msra.mxu0 %v1105
    %2424 = vmatprep.subr.mxu0 %v1108
    %2425 = vmatpush1.msra.mxu0 %v1107
    %2426 = vmatprep.subr.mxu0 %v1110
    %2427 = vmatpush1.msra.mxu0 %v1109
    %2428 = vmatprep.subr.mxu0 %v1112
    %2429 = vmatpush1.msra.mxu0 %v1111
    %2430 = vmatprep.subr.mxu0 %v1114
    %2431 = vmatpush1.msra.mxu0 %v1113
    %2432 = vmatprep.subr.mxu0 %v1116
    %2433 = vmatpush1.msra.mxu0 %v1115
    %2434 = vmatprep.subr.mxu0 %v1118
    %2435 = vmatpush1.msra.mxu0 %v1117
    %2436 = vmatprep.subr.mxu0 %v1120
    %2437 = vmatpush1.msra.mxu0 %v1119
    %2438 = vmatprep.mubr.f32.mxu0 %v1276
    %2439 = vmatmul.mubr.f32.gmra.mrb[0].mxu0 %v1274
    %v2440 = vpop.f32.mrb[0].mxu0
    %v2441 = vadd.f32 %v2370, %v2440
    %v2442 = vpop.f32.mrb[0].mxu0
    %v2443 = vadd.f32 %v2372, %v2442
    %2444 = vdwg.mxu0
    %v2445 = vmul.f32 %v2441, %v2441
    %v2446 = vmul.f32 %v2443, %v2443
    %v2447 = vld [vmem:[%s3] sm:$0xff]
    %v2448 = vld [vmem:[%s3 + $0x8] sm:$0xff]
    %v2449 = vld [vmem:[%s3 + $0x10] sm:$0xff]
    %v2450 = vld [vmem:[%s3 + $0x18] sm:$0xff]
    %v2451 = vld [vmem:[%s3 + $0x20] sm:$0xff]
    %v2452 = vld [vmem:[%s3 + $0x28] sm:$0xff]
    %v2453 = vld [vmem:[%s3 + $0x30] sm:$0xff]
    %v2454 = vld [vmem:[%s3 + $0x38] sm:$0xff]
    %v2455 = vld [vmem:[%s3 + $0x40] sm:$0xff]
    %v2456 = vld [vmem:[%s3 + $0x48] sm:$0xff]
    %v2457 = vld [vmem:[%s3 + $0x50] sm:$0xff]
    %v2458 = vld [vmem:[%s3 + $0x58] sm:$0xff]
    %v2459 = vld [vmem:[%s3 + $0x60] sm:$0xff]
    %v2460 = vld [vmem:[%s3 + $0x68] sm:$0xff]
    %v2461 = vld [vmem:[%s3 + $0x70] sm:$0xff]
    %v2462 = vld [vmem:[%s3 + $0x78] sm:$0xff]
    %v2463 = vld [vmem:[%s3 + $0x80] sm:$0xff]
    %v2464 = vld [vmem:[%s3 + $0x88] sm:$0xff]
    %v2465 = vld [vmem:[%s3 + $0x90] sm:$0xff]
    %v2466 = vld [vmem:[%s3 + $0x98] sm:$0xff]
    %v2467 = vld [vmem:[%s3 + $0xa0] sm:$0xff]
    %v2468 = vld [vmem:[%s3 + $0xa8] sm:$0xff]
    %v2469 = vld [vmem:[%s3 + $0xb0] sm:$0xff]
    %v2470 = vld [vmem:[%s3 + $0xb8] sm:$0xff]
    %v2471 = vld [vmem:[%s3 + $0xc0] sm:$0xff]
    %v2472 = vld [vmem:[%s3 + $0xc8] sm:$0xff]
    %v2473 = vld [vmem:[%s3 + $0xd0] sm:$0xff]
    %v2474 = vld [vmem:[%s3 + $0xd8] sm:$0xff]
    %v2475 = vld [vmem:[%s3 + $0xe0] sm:$0xff]
    %v2476 = vld [vmem:[%s3 + $0xe8] sm:$0xff]
    %v2477 = vld [vmem:[%s3 + $0xf0] sm:$0xff]
    %v2478 = vld [vmem:[%s3 + $0xf8] sm:$0xff]
    %v2479 = vld [vmem:[#allocation7] sm:$0x1]
    %v2481 = vlaneseq
    %v2482 = vshrl.u32 %v2481, 7
    %v2483 = vsub.s32 0, %v2482
    %v2484 = vrot.slane %v2479, %v2483
    %2486 = vmatprep.subr.mxu0 0.0
    %2487 = vmatpush1.msra.mxu0 %v2447
    %2488 = vmatprep.subr.mxu0 0.0
    %2489 = vmatpush1.msra.mxu0 %v2448
    %2490 = vmatprep.subr.mxu0 0.0
    %2491 = vmatpush1.msra.mxu0 %v2449
    %2492 = vmatprep.subr.mxu0 0.0
    %2493 = vmatpush1.msra.mxu0 %v2450
    %2494 = vmatprep.subr.mxu0 0.0
    %2495 = vmatpush1.msra.mxu0 %v2451
    %2496 = vmatprep.subr.mxu0 0.0
    %2497 = vmatpush1.msra.mxu0 %v2452
    %2498 = vmatprep.subr.mxu0 0.0
    %2499 = vmatpush1.msra.mxu0 %v2453
    %2500 = vmatprep.subr.mxu0 0.0
    %2501 = vmatpush1.msra.mxu0 %v2454
    %2502 = vmatprep.subr.mxu0 0.0
    %2503 = vmatpush1.msra.mxu0 %v2455
    %2504 = vmatprep.subr.mxu0 0.0
    %2505 = vmatpush1.msra.mxu0 %v2456
    %2506 = vmatprep.subr.mxu0 0.0
    %2507 = vmatpush1.msra.mxu0 %v2457
    %2508 = vmatprep.subr.mxu0 0.0
    %2509 = vmatpush1.msra.mxu0 %v2458
    %2510 = vmatprep.subr.mxu0 0.0
    %2511 = vmatpush1.msra.mxu0 %v2459
    %2512 = vmatprep.subr.mxu0 0.0
    %2513 = vmatpush1.msra.mxu0 %v2460
    %2514 = vmatprep.subr.mxu0 0.0
    %2515 = vmatpush1.msra.mxu0 %v2461
    %2516 = vmatprep.subr.mxu0 0.0
    %2517 = vmatpush1.msra.mxu0 %v2462
    %2518 = vmatprep.subr.mxu0 0.0
    %2519 = vmatpush1.msra.mxu0 %v2463
    %2520 = vmatprep.subr.mxu0 0.0
    %2521 = vmatpush1.msra.mxu0 %v2464
    %2522 = vmatprep.subr.mxu0 0.0
    %2523 = vmatpush1.msra.mxu0 %v2465
    %2524 = vmatprep.subr.mxu0 0.0
    %2525 = vmatpush1.msra.mxu0 %v2466
    %2526 = vmatprep.subr.mxu0 0.0
    %2527 = vmatpush1.msra.mxu0 %v2467
    %2528 = vmatprep.subr.mxu0 0.0
    %2529 = vmatpush1.msra.mxu0 %v2468
    %2530 = vmatprep.subr.mxu0 0.0
    %2531 = vmatpush1.msra.mxu0 %v2469
    %2532 = vmatprep.subr.mxu0 0.0
    %2533 = vmatpush1.msra.mxu0 %v2470
    %2534 = vmatprep.subr.mxu0 0.0
    %2535 = vmatpush1.msra.mxu0 %v2471
    %2536 = vmatprep.subr.mxu0 0.0
    %2537 = vmatpush1.msra.mxu0 %v2472
    %2538 = vmatprep.subr.mxu0 0.0
    %2539 = vmatpush1.msra.mxu0 %v2473
    %2540 = vmatprep.subr.mxu0 0.0
    %2541 = vmatpush1.msra.mxu0 %v2474
    %2542 = vmatprep.subr.mxu0 0.0
    %2543 = vmatpush1.msra.mxu0 %v2475
    %2544 = vmatprep.subr.mxu0 0.0
    %2545 = vmatpush1.msra.mxu0 %v2476
    %2546 = vmatprep.subr.mxu0 0.0
    %2547 = vmatpush1.msra.mxu0 %v2477
    %2548 = vmatprep.subr.mxu0 0.0
    %2549 = vmatpush1.msra.mxu0 %v2478
    %2550 = vmatprep.mubr.f32.mxu0 %v2446
    %2551 = vmatmul.mubr.f32.gmra.mrb[0].mxu0 %v2445
    %v2552 = vpop.f32.mrb[0].mxu0
    %v2553 = vadd.f32 %v2484, %v2552
    %v2554 = vpop.f32.mrb[0].mxu0
    %2555 = vdwg.mxu0
    %v2556 = vmul.f32 %v2553, %v2553
    %v2557 = vld [vmem:[#allocation8] sm:$0xff]
    %v2558 = vld [vmem:[#allocation8 + $0x8] sm:$0xff]
    %v2559 = vld [vmem:[#allocation8 + $0x10] sm:$0xff]
    %v2560 = vld [vmem:[#allocation8 + $0x18] sm:$0xff]
    %v2561 = vld [vmem:[#allocation8 + $0x20] sm:$0xff]
    %v2562 = vld [vmem:[#allocation8 + $0x28] sm:$0xff]
    %v2563 = vld [vmem:[#allocation8 + $0x30] sm:$0xff]
    %v2564 = vld [vmem:[#allocation8 + $0x38] sm:$0xff]
    %v2565 = vld [vmem:[#allocation10] sm:$0x1]
    %v2567 = vlaneseq
    %v2568 = vshrl.u32 %v2567, 7
    %v2569 = vsub.s32 0, %v2568
    %v2570 = vrot.slane %v2565, %v2569
    %vm2572 = vcmask 523264
    %v2574 = vsel %vm2572, %v2556, 0
    %2576 = vmatprep.subr.mxu0 0.0
    %2577 = vmatpush1.msra.mxu0 %v2557
    %2578 = vmatprep.subr.mxu0 0.0
    %2579 = vmatpush1.msra.mxu0 %v2558
    %2580 = vmatprep.subr.mxu0 0.0
    %2581 = vmatpush1.msra.mxu0 %v2559
    %2582 = vmatprep.subr.mxu0 0.0
    %2583 = vmatpush1.msra.mxu0 %v2560
    %2584 = vmatprep.subr.mxu0 0.0
    %2585 = vmatpush1.msra.mxu0 %v2561
    %2586 = vmatprep.subr.mxu0 0.0
    %2587 = vmatpush1.msra.mxu0 %v2562
    %2588 = vmatprep.subr.mxu0 0.0
    %2589 = vmatpush1.msra.mxu0 %v2563
    %2590 = vmatprep.subr.mxu0 0.0
    %2591 = vmatpush1.msra.mxu0 %v2564
    %2592 = vmatprep.subr.mxu0 0.0
    %2593 = vmatpush1.msra.mxu0 0.0
    %2594 = vmatprep.subr.mxu0 0.0
    %2595 = vmatpush1.msra.mxu0 0.0
    %2596 = vmatprep.subr.mxu0 0.0
    %2597 = vmatpush1.msra.mxu0 0.0
    %2598 = vmatprep.subr.mxu0 0.0
    %2599 = vmatpush1.msra.mxu0 0.0
    %2600 = vmatprep.subr.mxu0 0.0
    %2601 = vmatpush1.msra.mxu0 0.0
    %2602 = vmatprep.subr.mxu0 0.0
    %2603 = vmatpush1.msra.mxu0 0.0
    %2604 = vmatprep.subr.mxu0 0.0
    %2605 = vmatpush1.msra.mxu0 0.0
    %2606 = vmatprep.subr.mxu0 0.0
    %2607 = vmatpush1.msra.mxu0 0.0
    %2608 = vmatprep.subr.mxu0 0.0
    %2609 = vmatpush1.msra.mxu0 0.0
    %2610 = vmatprep.subr.mxu0 0.0
    %2611 = vmatpush1.msra.mxu0 0.0
    %2612 = vmatprep.subr.mxu0 0.0
    %2613 = vmatpush1.msra.mxu0 0.0
    %2614 = vmatprep.subr.mxu0 0.0
    %2615 = vmatpush1.msra.mxu0 0.0
    %2616 = vmatprep.subr.mxu0 0.0
    %2617 = vmatpush1.msra.mxu0 0.0
    %2618 = vmatprep.subr.mxu0 0.0
    %2619 = vmatpush1.msra.mxu0 0.0
    %2620 = vmatprep.subr.mxu0 0.0
    %2621 = vmatpush1.msra.mxu0 0.0
    %2622 = vmatprep.subr.mxu0 0.0
    %2623 = vmatpush1.msra.mxu0 0.0
    %2624 = vmatprep.subr.mxu0 0.0
    %2625 = vmatpush1.msra.mxu0 0.0
    %2626 = vmatprep.subr.mxu0 0.0
    %2627 = vmatpush1.msra.mxu0 0.0
    %2628 = vmatprep.subr.mxu0 0.0
    %2629 = vmatpush1.msra.mxu0 0.0
    %2630 = vmatprep.subr.mxu0 0.0
    %2631 = vmatpush1.msra.mxu0 0.0
    %2632 = vmatprep.subr.mxu0 0.0
    %2633 = vmatpush1.msra.mxu0 0.0
    %2634 = vmatprep.subr.mxu0 0.0
    %2635 = vmatpush1.msra.mxu0 0.0
    %2636 = vmatprep.subr.mxu0 0.0
    %2637 = vmatpush1.msra.mxu0 0.0
    %2638 = vmatprep.subr.mxu0 0.0
    %2639 = vmatpush1.msra.mxu0 0.0
    %2640 = vmatprep.mubr.f32.mxu0 0.0
    %2641 = vmatmul.mubr.f32.gmra.mrb[0].mxu0 %v2574
    %v2642 = vpop.f32.mrb[0].mxu0
    %v2643 = vadd.f32 %v2570, %v2642
    %v2644 = vpop.f32.mrb[0].mxu0
    %2645 = vdwg.mxu0
    %2646 = vst [vmem:[#allocation11] sm:$0x3] %v2643
    // Predicated region
    $region50: #{convnet_forward.1} parent=1 // pred_check
      _
    $region51: #{convnet_forward.1} parent=1 // pred_check_branch
      %2648 = sbr.rel (0) target = $region53
    $region52: #{convnet_forward.1} parent=1 // pred_region
      %s2650 = ssub.s32 32, 32
      %2651 = vsyncadd [#allocation4], %s2650
      %s2653 = sshll.u32 [#allocation11], 4
      %s2654 = int_to_ptr.vmem [resolvable:$true] %s2653
      %2656 = dma.vmem_to_hbm [thread:$0]  %s2654, 32, %s7, [#allocation4]
    $region53: #{convnet_forward.1} parent=1 // pred_fallthru
      _
    // Predicated region
    $region54: #{convnet_forward.1} parent=1 // pred_check
      _
    $region55: #{convnet_forward.1} parent=1 // pred_check_branch
      %2658 = sbr.rel (0) target = $region57
    $region56: #{convnet_forward.1} parent=1 // pred_region
      %2659 = dma.done [#allocation4], 32
    $region57: #{convnet_forward.1} parent=1 // pred_fallthru
      _
    %2660 = vsyncpa [#allocation3], 1
    %2661 = vsyncpa [#allocation6], 1
    %2662 = vsyncpa [#allocation9], 1
    %2663 = vsyncpa [#allocation4], 1

</llo_original>
